<compile_context>
chip_gen: v6e
topology: v6e:2x2x1
jax: 0.10.0
libtpu: 0.0.40
codegen_flags: <defaults>
</compile_context>

<pallas_src>
import functools

import jax
import jax.numpy as jnp
import numpy as np
from jax.experimental import pallas as pl
from jax.experimental.pallas import tpu as pltpu

VOCAB = 15
VOCAB_PAD = 16      # pad rows to a sublane multiple so the dynamic row gather is tile-aligned
EMBED = 5
HIDDEN = 50         # logical LSTM hidden size (nn.LSTM(5, 50))
HP = 128            # per-gate lane-padded width -> every in-kernel gate slice is 128-lane aligned
NGATES = 4          # PyTorch gate order: i, f, g, o
MAX_BT = 256        # batch tile per grid block; B <= MAX_BT runs as a single block


def _lstm_classifier_kernel(xidx_ref, emb_wx_ref, wh_ref, wfc_ref, bfc_ref,
                            out_ref, xg_scr, *, seq_len):
    # xidx_ref  : SMEM int32 [Bp*T]   flattened token ids (row-major [batch, time])
    # emb_wx_ref: VMEM [16, 4*HP]     embedding table with Wx and fused gate bias folded in
    # wh_ref    : VMEM [HP, 4*HP]     fused hidden->gate weights (zero-padded rows/cols)
    # wfc_ref   : VMEM [1, HP]        Linear(50, 1) weight row (zero-padded lanes)
    # bfc_ref   : SMEM [1, 1]         Linear bias scalar
    # out_ref   : VMEM [BT, 1]        sigmoid probabilities for this batch tile
    # xg_scr    : VMEM [BT, 4*HP]     per-step gathered input projections
    BT = out_ref.shape[0]
    bo = pl.program_id(0) * BT                       # global batch offset of this tile

    h = jnp.zeros((BT, HP), jnp.float32)             # pad lanes provably stay 0
    c = jnp.zeros((BT, HP), jnp.float32)

    # T is small and static -> fully unrolled recurrence; h/c carried in vregs.
    for t in range(seq_len):
        # Input projection == row gather from the folded table (no matmul, no big scratch).
        for b in range(BT):
            tok = xidx_ref[(bo + b) * seq_len + t]
            xg_scr[pl.ds(b, 1), :] = emb_wx_ref[pl.ds(tok, 1), :]
        # Wh streamed from VMEM into the MXU each step (never held as a 256 KiB value).
        gates = xg_scr[...] + jnp.dot(h, wh_ref[...],
                                      preferred_element_type=jnp.float32)   # [BT, 4*HP]
        i_g = jax.nn.sigmoid(gates[:, 0 * HP:1 * HP])
        f_g = jax.nn.sigmoid(gates[:, 1 * HP:2 * HP])
        g_g = jnp.tanh(gates[:, 2 * HP:3 * HP])
        o_g = jax.nn.sigmoid(gates[:, 3 * HP:4 * HP])
        c = f_g * c + i_g * g_g
        h = o_g * jnp.tanh(c)

    # Linear(50, 1) + sigmoid: VPU multiply + lane reduction (avoids a 1-lane MXU output).
    logit = jnp.sum(h * wfc_ref[...], axis=-1, keepdims=True) + bfc_ref[0, 0]
    out_ref[...] = jax.nn.sigmoid(logit)


@jax.jit
def improved_text_classifier(x_idx, params):
    """x_idx: int32 [B, T] token indices. Returns float32 [B, 1] probabilities."""
    B, T = x_idx.shape
    BT = B if B <= MAX_BT else MAX_BT
    Bp = pl.cdiv(B, BT) * BT
    x = x_idx.astype(jnp.int32)
    if Bp != B:                                       # pad batch to a whole number of tiles
        x = jnp.pad(x, ((0, Bp - B), (0, 0)))
    x_flat = x.reshape(Bp * T)                        # 1-D -> compact SMEM footprint

    kernel = functools.partial(_lstm_classifier_kernel, seq_len=T)
    out = pl.pallas_call(
        kernel,
        out_shape=jax.ShapeDtypeStruct((Bp, 1), jnp.float32),
        grid_spec=pltpu.PrefetchScalarGridSpec(
            num_scalar_prefetch=1,                    # x_flat -> SMEM, gathered in-kernel
            grid=(Bp // BT,),
            in_specs=[
                pl.BlockSpec((VOCAB_PAD, NGATES * HP), lambda i, xidx: (0, 0)),  # emb_wx
                pl.BlockSpec((HP, NGATES * HP), lambda i, xidx: (0, 0)),         # wh
                pl.BlockSpec((1, HP), lambda i, xidx: (0, 0)),                   # wfc
                pl.BlockSpec((1, 1), lambda i, xidx: (0, 0),
                             memory_space=pltpu.MemorySpace.SMEM),               # bfc
            ],
            out_specs=pl.BlockSpec((BT, 1), lambda i, xidx: (i, 0)),
            scratch_shapes=[pltpu.VMEM((BT, NGATES * HP), jnp.float32)],
        ),
        compiler_params=pltpu.CompilerParams(dimension_semantics=("parallel",)),
    )(x_flat, params["emb_wx"], params["wh"], params["wfc"], params["bfc"])
    return out[:B]


def init_params(key):
    """Deterministic synthetic parameters in PyTorch layout (gate order i, f, g, o)."""
    ks = jax.random.split(key, 7)
    bound = 1.0 / np.sqrt(HIDDEN)
    return {
        "emb":  jax.random.normal(ks[0], (VOCAB, EMBED), dtype=jnp.float32),
        "w_ih": jax.random.uniform(ks[1], (4 * HIDDEN, EMBED), jnp.float32, -bound, bound),
        "w_hh": jax.random.uniform(ks[2], (4 * HIDDEN, HIDDEN), jnp.float32, -bound, bound),
        "b_ih": jax.random.uniform(ks[3], (4 * HIDDEN,), jnp.float32, -bound, bound),
        "b_hh": jax.random.uniform(ks[4], (4 * HIDDEN,), jnp.float32, -bound, bound),
        "w_fc": jax.random.uniform(ks[5], (1, HIDDEN), jnp.float32, -bound, bound),
        "b_fc": jax.random.uniform(ks[6], (1,), jnp.float32, -bound, bound),
    }


def pack_params(raw):
    """Fuse the 4 gates, pad each gate block to HP=128 lanes with zeros (mathematically inert),
    and fold Wx + gate bias into the embedding table so the input projection is a row gather."""
    H, E = HIDDEN, EMBED
    emb = np.asarray(raw["emb"], np.float32)
    w_ih = np.asarray(raw["w_ih"], np.float32).reshape(4, H, E)
    w_hh = np.asarray(raw["w_hh"], np.float32).reshape(4, H, H)
    b = (np.asarray(raw["b_ih"]) + np.asarray(raw["b_hh"])).astype(np.float32).reshape(4, H)

    wx = np.zeros((E, NGATES * HP), np.float32)
    wh = np.zeros((HP, NGATES * HP), np.float32)
    bb = np.zeros((1, NGATES * HP), np.float32)
    for g in range(NGATES):
        wx[:, g * HP:g * HP + H] = w_ih[g].T
        wh[:H, g * HP:g * HP + H] = w_hh[g].T
        bb[0, g * HP:g * HP + H] = b[g]

    emb_wx = np.zeros((VOCAB_PAD, NGATES * HP), np.float32)
    emb_wx[:VOCAB] = emb @ wx + bb                    # fold input projection + bias per token

    wfc = np.zeros((1, HP), np.float32)
    wfc[0, :H] = np.asarray(raw["w_fc"], np.float32)[0]

    return {
        "emb_wx": jnp.asarray(emb_wx),
        "wh": jnp.asarray(wh),
        "wfc": jnp.asarray(wfc),
        "bfc": jnp.asarray(raw["b_fc"], dtype=jnp.float32).reshape(1, 1),
    }


def reference_forward(x_idx, raw):
    """Pure-JAX reference mirroring the PyTorch forward (unfused, unpadded weights)."""
    B, T = x_idx.shape
    H = HIDDEN
    emb = raw["emb"][x_idx]                                   # [B, T, E]
    w_ih = raw["w_ih"].reshape(4, H, EMBED)
    w_hh = raw["w_hh"].reshape(4, H, H)
    b = (raw["b_ih"] + raw["b_hh"]).reshape(4, H)
    h = jnp.zeros((B, H), jnp.float32)
    c = jnp.zeros((B, H), jnp.float32)
    for t in range(T):
        x_t = emb[:, t, :]
        i = jax.nn.sigmoid(x_t @ w_ih[0].T + h @ w_hh[0].T + b[0])
        f = jax.nn.sigmoid(x_t @ w_ih[1].T + h @ w_hh[1].T + b[1])
        g = jnp.tanh(x_t @ w_ih[2].T + h @ w_hh[2].T + b[2])
        o = jax.nn.sigmoid(x_t @ w_ih[3].T + h @ w_hh[3].T + b[3])
        c = f * c + i * g
        h = o * jnp.tanh(c)
    return jax.nn.sigmoid(h @ raw["w_fc"].T + raw["b_fc"])


if __name__ == "__main__":
    raw = init_params(jax.random.PRNGKey(0))
    params = pack_params(raw)

    B, T = 2, 8
    x_idx = jax.random.randint(jax.random.PRNGKey(1), (B, T), 0, VOCAB, dtype=jnp.int32)

    out = jax.block_until_ready(improved_text_classifier(x_idx, params))

    ref = reference_forward(x_idx, raw)
    np.testing.assert_allclose(np.asarray(out), np.asarray(ref), rtol=1e-5, atol=1e-5)
    assert out.shape == (B, 1)
    print("KERNEL_OK")
</pallas_src>

<mosaic_0001>
module attributes {stable_mosaic.version = 11 : i64} {
  func.func @_lstm_classifier_kernel(%arg0: i32, %arg1: memref<16xi32, #tpu.memory_space<smem>>, %arg2: memref<16x512xf32, #tpu.memory_space<vmem>>, %arg3: memref<128x512xf32, #tpu.memory_space<vmem>>, %arg4: memref<1x128xf32, #tpu.memory_space<vmem>>, %arg5: memref<1x1xf32, #tpu.memory_space<smem>>, %arg6: memref<2x1xf32, #tpu.memory_space<vmem>>, %arg7: memref<2x512xf32, #tpu.memory_space<vmem>>) attributes {dimension_semantics = [#tpu.dimension_semantics<parallel>], iteration_bounds = array<i64: 1>, scalar_prefetch = 1 : i64, scratch_operands = 1 : i64, tpu.core_type = #tpu.core_type<tc>, window_params = [{pipeline_mode = #tpu.pipeline_mode<synchronous>, transform_indices = @transform_0, window_bounds = array<i64: 16, 512>}, {pipeline_mode = #tpu.pipeline_mode<synchronous>, transform_indices = @transform_1, window_bounds = array<i64: 128, 512>}, {pipeline_mode = #tpu.pipeline_mode<synchronous>, transform_indices = @transform_2, window_bounds = array<i64: 1, 128>}, {transform_indices = @transform_3, window_bounds = array<i64: 1, 1>}, {transform_indices = @transform_4, window_bounds = array<i64: 2, 1>}]} {
    %c2_i32 = arith.constant 2 : i32
    %0 = arith.muli %arg0, %c2_i32 : i32
    %cst = arith.constant 0.000000e+00 : f32
    %1 = vector.broadcast %cst : f32 to vector<2x128xf32>
    %cst_0 = arith.constant 0.000000e+00 : f32
    %2 = vector.broadcast %cst_0 : f32 to vector<2x128xf32>
    %c0_i32 = arith.constant 0 : i32
    %3 = arith.addi %0, %c0_i32 : i32
    %c8_i32 = arith.constant 8 : i32
    %4 = arith.muli %3, %c8_i32 : i32
    %c0_i32_1 = arith.constant 0 : i32
    %5 = arith.addi %4, %c0_i32_1 : i32
    %6 = arith.index_cast %5 : i32 to index
    %7 = memref.load %arg1[%6] : memref<16xi32, #tpu.memory_space<smem>>
    %8 = arith.index_cast %7 : i32 to index
    %c0 = arith.constant 0 : index
    %9 = vector.load %arg2[%8, %c0] : memref<16x512xf32, #tpu.memory_space<vmem>>, vector<1x512xf32>
    %c0_2 = arith.constant 0 : index
    %c0_3 = arith.constant 0 : index
    %10 = vector.load %arg7[%c0_2, %c0_3] : memref<2x512xf32, #tpu.memory_space<vmem>>, vector<1x512xf32>
    tpu.vector_store %arg7[%c0_2, %c0_3], %9 {strides = array<i32>} : memref<2x512xf32, #tpu.memory_space<vmem>>, vector<1x512xf32>,
    %c1_i32 = arith.constant 1 : i32
    %11 = arith.addi %0, %c1_i32 : i32
    %c8_i32_4 = arith.constant 8 : i32
    %12 = arith.muli %11, %c8_i32_4 : i32
    %c0_i32_5 = arith.constant 0 : i32
    %13 = arith.addi %12, %c0_i32_5 : i32
    %14 = arith.index_cast %13 : i32 to index
    %15 = memref.load %arg1[%14] : memref<16xi32, #tpu.memory_space<smem>>
    %16 = arith.index_cast %15 : i32 to index
    %c0_6 = arith.constant 0 : index
    %17 = vector.load %arg2[%16, %c0_6] : memref<16x512xf32, #tpu.memory_space<vmem>>, vector<1x512xf32>
    %c1 = arith.constant 1 : index
    %c0_7 = arith.constant 0 : index
    %18 = vector.load %arg7[%c1, %c0_7] : memref<2x512xf32, #tpu.memory_space<vmem>>, vector<1x512xf32>
    tpu.vector_store %arg7[%c1, %c0_7], %17 {strides = array<i32>} : memref<2x512xf32, #tpu.memory_space<vmem>>, vector<1x512xf32>,
    %c0_8 = arith.constant 0 : index
    %c0_9 = arith.constant 0 : index
    %19 = vector.load %arg7[%c0_8, %c0_9] : memref<2x512xf32, #tpu.memory_space<vmem>>, vector<2x512xf32>
    %c0_10 = arith.constant 0 : index
    %c0_11 = arith.constant 0 : index
    %20 = vector.load %arg3[%c0_10, %c0_11] : memref<128x512xf32, #tpu.memory_space<vmem>>, vector<128x512xf32>
    %cst_12 = arith.constant dense<0.000000e+00> : vector<2x512xf32>
    %21 = tpu.matmul %1, %20, %cst_12 {dimension_numbers = #tpu.dot_dimension_numbers<[1], [0], [0], [1], [0, 0, 1, 1], [], []>} : vector<2x128xf32>, vector<128x512xf32>, vector<2x512xf32> -> vector<2x512xf32>
    %22 = arith.addf %19, %21 : vector<2x512xf32>
    %23 = vector.extract_strided_slice %22 {offsets = [0, 0], sizes = [2, 128], strides = [1, 1]} : vector<2x512xf32> to vector<2x128xf32>
    %24 = arith.negf %23 : vector<2x128xf32>
    %25 = math.exp %24 : vector<2x128xf32>
    %cst_13 = arith.constant 1.000000e+00 : f32
    %26 = vector.broadcast %cst_13 : f32 to vector<2x128xf32>
    %27 = arith.addf %26, %25 : vector<2x128xf32>
    %28 = arith.divf %26, %27 : vector<2x128xf32>
    %29 = vector.extract_strided_slice %22 {offsets = [0, 128], sizes = [2, 128], strides = [1, 1]} : vector<2x512xf32> to vector<2x128xf32>
    %30 = arith.negf %29 : vector<2x128xf32>
    %31 = math.exp %30 : vector<2x128xf32>
    %cst_14 = arith.constant 1.000000e+00 : f32
    %32 = vector.broadcast %cst_14 : f32 to vector<2x128xf32>
    %33 = arith.addf %32, %31 : vector<2x128xf32>
    %34 = arith.divf %32, %33 : vector<2x128xf32>
    %35 = vector.extract_strided_slice %22 {offsets = [0, 256], sizes = [2, 128], strides = [1, 1]} : vector<2x512xf32> to vector<2x128xf32>
    %36 = math.tanh %35 : vector<2x128xf32>
    %37 = vector.extract_strided_slice %22 {offsets = [0, 384], sizes = [2, 128], strides = [1, 1]} : vector<2x512xf32> to vector<2x128xf32>
    %38 = arith.negf %37 : vector<2x128xf32>
    %39 = math.exp %38 : vector<2x128xf32>
    %cst_15 = arith.constant 1.000000e+00 : f32
    %40 = vector.broadcast %cst_15 : f32 to vector<2x128xf32>
    %41 = arith.addf %40, %39 : vector<2x128xf32>
    %42 = arith.divf %40, %41 : vector<2x128xf32>
    %43 = arith.mulf %34, %2 : vector<2x128xf32>
    %44 = arith.mulf %28, %36 : vector<2x128xf32>
    %45 = arith.addf %43, %44 : vector<2x128xf32>
    %46 = math.tanh %45 : vector<2x128xf32>
    %47 = arith.mulf %42, %46 : vector<2x128xf32>
    %c0_i32_16 = arith.constant 0 : i32
    %48 = arith.addi %0, %c0_i32_16 : i32
    %c8_i32_17 = arith.constant 8 : i32
    %49 = arith.muli %48, %c8_i32_17 : i32
    %c1_i32_18 = arith.constant 1 : i32
    %50 = arith.addi %49, %c1_i32_18 : i32
    %51 = arith.index_cast %50 : i32 to index
    %52 = memref.load %arg1[%51] : memref<16xi32, #tpu.memory_space<smem>>
    %53 = arith.index_cast %52 : i32 to index
    %c0_19 = arith.constant 0 : index
    %54 = vector.load %arg2[%53, %c0_19] : memref<16x512xf32, #tpu.memory_space<vmem>>, vector<1x512xf32>
    %c0_20 = arith.constant 0 : index
    %c0_21 = arith.constant 0 : index
    %55 = vector.load %arg7[%c0_20, %c0_21] : memref<2x512xf32, #tpu.memory_space<vmem>>, vector<1x512xf32>
    tpu.vector_store %arg7[%c0_20, %c0_21], %54 {strides = array<i32>} : memref<2x512xf32, #tpu.memory_space<vmem>>, vector<1x512xf32>,
    %c1_i32_22 = arith.constant 1 : i32
    %56 = arith.addi %0, %c1_i32_22 : i32
    %c8_i32_23 = arith.constant 8 : i32
    %57 = arith.muli %56, %c8_i32_23 : i32
    %c1_i32_24 = arith.constant 1 : i32
    %58 = arith.addi %57, %c1_i32_24 : i32
    %59 = arith.index_cast %58 : i32 to index
    %60 = memref.load %arg1[%59] : memref<16xi32, #tpu.memory_space<smem>>
    %61 = arith.index_cast %60 : i32 to index
    %c0_25 = arith.constant 0 : index
    %62 = vector.load %arg2[%61, %c0_25] : memref<16x512xf32, #tpu.memory_space<vmem>>, vector<1x512xf32>
    %c1_26 = arith.constant 1 : index
    %c0_27 = arith.constant 0 : index
    %63 = vector.load %arg7[%c1_26, %c0_27] : memref<2x512xf32, #tpu.memory_space<vmem>>, vector<1x512xf32>
    tpu.vector_store %arg7[%c1_26, %c0_27], %62 {strides = array<i32>} : memref<2x512xf32, #tpu.memory_space<vmem>>, vector<1x512xf32>,
    %c0_28 = arith.constant 0 : index
    %c0_29 = arith.constant 0 : index
    %64 = vector.load %arg7[%c0_28, %c0_29] : memref<2x512xf32, #tpu.memory_space<vmem>>, vector<2x512xf32>
    %c0_30 = arith.constant 0 : index
    %c0_31 = arith.constant 0 : index
    %65 = vector.load %arg3[%c0_30, %c0_31] : memref<128x512xf32, #tpu.memory_space<vmem>>, vector<128x512xf32>
    %cst_32 = arith.constant dense<0.000000e+00> : vector<2x512xf32>
    %66 = tpu.matmul %47, %65, %cst_32 {dimension_numbers = #tpu.dot_dimension_numbers<[1], [0], [0], [1], [0, 0, 1, 1], [], []>} : vector<2x128xf32>, vector<128x512xf32>, vector<2x512xf32> -> vector<2x512xf32>
    %67 = arith.addf %64, %66 : vector<2x512xf32>
    %68 = vector.extract_strided_slice %67 {offsets = [0, 0], sizes = [2, 128], strides = [1, 1]} : vector<2x512xf32> to vector<2x128xf32>
    %69 = arith.negf %68 : vector<2x128xf32>
    %70 = math.exp %69 : vector<2x128xf32>
    %cst_33 = arith.constant 1.000000e+00 : f32
    %71 = vector.broadcast %cst_33 : f32 to vector<2x128xf32>
    %72 = arith.addf %71, %70 : vector<2x128xf32>
    %73 = arith.divf %71, %72 : vector<2x128xf32>
    %74 = vector.extract_strided_slice %67 {offsets = [0, 128], sizes = [2, 128], strides = [1, 1]} : vector<2x512xf32> to vector<2x128xf32>
    %75 = arith.negf %74 : vector<2x128xf32>
    %76 = math.exp %75 : vector<2x128xf32>
    %cst_34 = arith.constant 1.000000e+00 : f32
    %77 = vector.broadcast %cst_34 : f32 to vector<2x128xf32>
    %78 = arith.addf %77, %76 : vector<2x128xf32>
    %79 = arith.divf %77, %78 : vector<2x128xf32>
    %80 = vector.extract_strided_slice %67 {offsets = [0, 256], sizes = [2, 128], strides = [1, 1]} : vector<2x512xf32> to vector<2x128xf32>
    %81 = math.tanh %80 : vector<2x128xf32>
    %82 = vector.extract_strided_slice %67 {offsets = [0, 384], sizes = [2, 128], strides = [1, 1]} : vector<2x512xf32> to vector<2x128xf32>
    %83 = arith.negf %82 : vector<2x128xf32>
    %84 = math.exp %83 : vector<2x128xf32>
    %cst_35 = arith.constant 1.000000e+00 : f32
    %85 = vector.broadcast %cst_35 : f32 to vector<2x128xf32>
    %86 = arith.addf %85, %84 : vector<2x128xf32>
    %87 = arith.divf %85, %86 : vector<2x128xf32>
    %88 = arith.mulf %79, %45 : vector<2x128xf32>
    %89 = arith.mulf %73, %81 : vector<2x128xf32>
    %90 = arith.addf %88, %89 : vector<2x128xf32>
    %91 = math.tanh %90 : vector<2x128xf32>
    %92 = arith.mulf %87, %91 : vector<2x128xf32>
    %c0_i32_36 = arith.constant 0 : i32
    %93 = arith.addi %0, %c0_i32_36 : i32
    %c8_i32_37 = arith.constant 8 : i32
    %94 = arith.muli %93, %c8_i32_37 : i32
    %c2_i32_38 = arith.constant 2 : i32
    %95 = arith.addi %94, %c2_i32_38 : i32
    %96 = arith.index_cast %95 : i32 to index
    %97 = memref.load %arg1[%96] : memref<16xi32, #tpu.memory_space<smem>>
    %98 = arith.index_cast %97 : i32 to index
    %c0_39 = arith.constant 0 : index
    %99 = vector.load %arg2[%98, %c0_39] : memref<16x512xf32, #tpu.memory_space<vmem>>, vector<1x512xf32>
    %c0_40 = arith.constant 0 : index
    %c0_41 = arith.constant 0 : index
    %100 = vector.load %arg7[%c0_40, %c0_41] : memref<2x512xf32, #tpu.memory_space<vmem>>, vector<1x512xf32>
    tpu.vector_store %arg7[%c0_40, %c0_41], %99 {strides = array<i32>} : memref<2x512xf32, #tpu.memory_space<vmem>>, vector<1x512xf32>,
    %c1_i32_42 = arith.constant 1 : i32
    %101 = arith.addi %0, %c1_i32_42 : i32
    %c8_i32_43 = arith.constant 8 : i32
    %102 = arith.muli %101, %c8_i32_43 : i32
    %c2_i32_44 = arith.constant 2 : i32
    %103 = arith.addi %102, %c2_i32_44 : i32
    %104 = arith.index_cast %103 : i32 to index
    %105 = memref.load %arg1[%104] : memref<16xi32, #tpu.memory_space<smem>>
    %106 = arith.index_cast %105 : i32 to index
    %c0_45 = arith.constant 0 : index
    %107 = vector.load %arg2[%106, %c0_45] : memref<16x512xf32, #tpu.memory_space<vmem>>, vector<1x512xf32>
    %c1_46 = arith.constant 1 : index
    %c0_47 = arith.constant 0 : index
    %108 = vector.load %arg7[%c1_46, %c0_47] : memref<2x512xf32, #tpu.memory_space<vmem>>, vector<1x512xf32>
    tpu.vector_store %arg7[%c1_46, %c0_47], %107 {strides = array<i32>} : memref<2x512xf32, #tpu.memory_space<vmem>>, vector<1x512xf32>,
    %c0_48 = arith.constant 0 : index
    %c0_49 = arith.constant 0 : index
    %109 = vector.load %arg7[%c0_48, %c0_49] : memref<2x512xf32, #tpu.memory_space<vmem>>, vector<2x512xf32>
    %c0_50 = arith.constant 0 : index
    %c0_51 = arith.constant 0 : index
    %110 = vector.load %arg3[%c0_50, %c0_51] : memref<128x512xf32, #tpu.memory_space<vmem>>, vector<128x512xf32>
    %cst_52 = arith.constant dense<0.000000e+00> : vector<2x512xf32>
    %111 = tpu.matmul %92, %110, %cst_52 {dimension_numbers = #tpu.dot_dimension_numbers<[1], [0], [0], [1], [0, 0, 1, 1], [], []>} : vector<2x128xf32>, vector<128x512xf32>, vector<2x512xf32> -> vector<2x512xf32>
    %112 = arith.addf %109, %111 : vector<2x512xf32>
    %113 = vector.extract_strided_slice %112 {offsets = [0, 0], sizes = [2, 128], strides = [1, 1]} : vector<2x512xf32> to vector<2x128xf32>
    %114 = arith.negf %113 : vector<2x128xf32>
    %115 = math.exp %114 : vector<2x128xf32>
    %cst_53 = arith.constant 1.000000e+00 : f32
    %116 = vector.broadcast %cst_53 : f32 to vector<2x128xf32>
    %117 = arith.addf %116, %115 : vector<2x128xf32>
    %118 = arith.divf %116, %117 : vector<2x128xf32>
    %119 = vector.extract_strided_slice %112 {offsets = [0, 128], sizes = [2, 128], strides = [1, 1]} : vector<2x512xf32> to vector<2x128xf32>
    %120 = arith.negf %119 : vector<2x128xf32>
    %121 = math.exp %120 : vector<2x128xf32>
    %cst_54 = arith.constant 1.000000e+00 : f32
    %122 = vector.broadcast %cst_54 : f32 to vector<2x128xf32>
    %123 = arith.addf %122, %121 : vector<2x128xf32>
    %124 = arith.divf %122, %123 : vector<2x128xf32>
    %125 = vector.extract_strided_slice %112 {offsets = [0, 256], sizes = [2, 128], strides = [1, 1]} : vector<2x512xf32> to vector<2x128xf32>
    %126 = math.tanh %125 : vector<2x128xf32>
    %127 = vector.extract_strided_slice %112 {offsets = [0, 384], sizes = [2, 128], strides = [1, 1]} : vector<2x512xf32> to vector<2x128xf32>
    %128 = arith.negf %127 : vector<2x128xf32>
    %129 = math.exp %128 : vector<2x128xf32>
    %cst_55 = arith.constant 1.000000e+00 : f32
    %130 = vector.broadcast %cst_55 : f32 to vector<2x128xf32>
    %131 = arith.addf %130, %129 : vector<2x128xf32>
    %132 = arith.divf %130, %131 : vector<2x128xf32>
    %133 = arith.mulf %124, %90 : vector<2x128xf32>
    %134 = arith.mulf %118, %126 : vector<2x128xf32>
    %135 = arith.addf %133, %134 : vector<2x128xf32>
    %136 = math.tanh %135 : vector<2x128xf32>
    %137 = arith.mulf %132, %136 : vector<2x128xf32>
    %c0_i32_56 = arith.constant 0 : i32
    %138 = arith.addi %0, %c0_i32_56 : i32
    %c8_i32_57 = arith.constant 8 : i32
    %139 = arith.muli %138, %c8_i32_57 : i32
    %c3_i32 = arith.constant 3 : i32
    %140 = arith.addi %139, %c3_i32 : i32
    %141 = arith.index_cast %140 : i32 to index
    %142 = memref.load %arg1[%141] : memref<16xi32, #tpu.memory_space<smem>>
    %143 = arith.index_cast %142 : i32 to index
    %c0_58 = arith.constant 0 : index
    %144 = vector.load %arg2[%143, %c0_58] : memref<16x512xf32, #tpu.memory_space<vmem>>, vector<1x512xf32>
    %c0_59 = arith.constant 0 : index
    %c0_60 = arith.constant 0 : index
    %145 = vector.load %arg7[%c0_59, %c0_60] : memref<2x512xf32, #tpu.memory_space<vmem>>, vector<1x512xf32>
    tpu.vector_store %arg7[%c0_59, %c0_60], %144 {strides = array<i32>} : memref<2x512xf32, #tpu.memory_space<vmem>>, vector<1x512xf32>,
    %c1_i32_61 = arith.constant 1 : i32
    %146 = arith.addi %0, %c1_i32_61 : i32
    %c8_i32_62 = arith.constant 8 : i32
    %147 = arith.muli %146, %c8_i32_62 : i32
    %c3_i32_63 = arith.constant 3 : i32
    %148 = arith.addi %147, %c3_i32_63 : i32
    %149 = arith.index_cast %148 : i32 to index
    %150 = memref.load %arg1[%149] : memref<16xi32, #tpu.memory_space<smem>>
    %151 = arith.index_cast %150 : i32 to index
    %c0_64 = arith.constant 0 : index
    %152 = vector.load %arg2[%151, %c0_64] : memref<16x512xf32, #tpu.memory_space<vmem>>, vector<1x512xf32>
    %c1_65 = arith.constant 1 : index
    %c0_66 = arith.constant 0 : index
    %153 = vector.load %arg7[%c1_65, %c0_66] : memref<2x512xf32, #tpu.memory_space<vmem>>, vector<1x512xf32>
    tpu.vector_store %arg7[%c1_65, %c0_66], %152 {strides = array<i32>} : memref<2x512xf32, #tpu.memory_space<vmem>>, vector<1x512xf32>,
    %c0_67 = arith.constant 0 : index
    %c0_68 = arith.constant 0 : index
    %154 = vector.load %arg7[%c0_67, %c0_68] : memref<2x512xf32, #tpu.memory_space<vmem>>, vector<2x512xf32>
    %c0_69 = arith.constant 0 : index
    %c0_70 = arith.constant 0 : index
    %155 = vector.load %arg3[%c0_69, %c0_70] : memref<128x512xf32, #tpu.memory_space<vmem>>, vector<128x512xf32>
    %cst_71 = arith.constant dense<0.000000e+00> : vector<2x512xf32>
    %156 = tpu.matmul %137, %155, %cst_71 {dimension_numbers = #tpu.dot_dimension_numbers<[1], [0], [0], [1], [0, 0, 1, 1], [], []>} : vector<2x128xf32>, vector<128x512xf32>, vector<2x512xf32> -> vector<2x512xf32>
    %157 = arith.addf %154, %156 : vector<2x512xf32>
    %158 = vector.extract_strided_slice %157 {offsets = [0, 0], sizes = [2, 128], strides = [1, 1]} : vector<2x512xf32> to vector<2x128xf32>
    %159 = arith.negf %158 : vector<2x128xf32>
    %160 = math.exp %159 : vector<2x128xf32>
    %cst_72 = arith.constant 1.000000e+00 : f32
    %161 = vector.broadcast %cst_72 : f32 to vector<2x128xf32>
    %162 = arith.addf %161, %160 : vector<2x128xf32>
    %163 = arith.divf %161, %162 : vector<2x128xf32>
    %164 = vector.extract_strided_slice %157 {offsets = [0, 128], sizes = [2, 128], strides = [1, 1]} : vector<2x512xf32> to vector<2x128xf32>
    %165 = arith.negf %164 : vector<2x128xf32>
    %166 = math.exp %165 : vector<2x128xf32>
    %cst_73 = arith.constant 1.000000e+00 : f32
    %167 = vector.broadcast %cst_73 : f32 to vector<2x128xf32>
    %168 = arith.addf %167, %166 : vector<2x128xf32>
    %169 = arith.divf %167, %168 : vector<2x128xf32>
    %170 = vector.extract_strided_slice %157 {offsets = [0, 256], sizes = [2, 128], strides = [1, 1]} : vector<2x512xf32> to vector<2x128xf32>
    %171 = math.tanh %170 : vector<2x128xf32>
    %172 = vector.extract_strided_slice %157 {offsets = [0, 384], sizes = [2, 128], strides = [1, 1]} : vector<2x512xf32> to vector<2x128xf32>
    %173 = arith.negf %172 : vector<2x128xf32>
    %174 = math.exp %173 : vector<2x128xf32>
    %cst_74 = arith.constant 1.000000e+00 : f32
    %175 = vector.broadcast %cst_74 : f32 to vector<2x128xf32>
    %176 = arith.addf %175, %174 : vector<2x128xf32>
    %177 = arith.divf %175, %176 : vector<2x128xf32>
    %178 = arith.mulf %169, %135 : vector<2x128xf32>
    %179 = arith.mulf %163, %171 : vector<2x128xf32>
    %180 = arith.addf %178, %179 : vector<2x128xf32>
    %181 = math.tanh %180 : vector<2x128xf32>
    %182 = arith.mulf %177, %181 : vector<2x128xf32>
    %c0_i32_75 = arith.constant 0 : i32
    %183 = arith.addi %0, %c0_i32_75 : i32
    %c8_i32_76 = arith.constant 8 : i32
    %184 = arith.muli %183, %c8_i32_76 : i32
    %c4_i32 = arith.constant 4 : i32
    %185 = arith.addi %184, %c4_i32 : i32
    %186 = arith.index_cast %185 : i32 to index
    %187 = memref.load %arg1[%186] : memref<16xi32, #tpu.memory_space<smem>>
    %188 = arith.index_cast %187 : i32 to index
    %c0_77 = arith.constant 0 : index
    %189 = vector.load %arg2[%188, %c0_77] : memref<16x512xf32, #tpu.memory_space<vmem>>, vector<1x512xf32>
    %c0_78 = arith.constant 0 : index
    %c0_79 = arith.constant 0 : index
    %190 = vector.load %arg7[%c0_78, %c0_79] : memref<2x512xf32, #tpu.memory_space<vmem>>, vector<1x512xf32>
    tpu.vector_store %arg7[%c0_78, %c0_79], %189 {strides = array<i32>} : memref<2x512xf32, #tpu.memory_space<vmem>>, vector<1x512xf32>,
    %c1_i32_80 = arith.constant 1 : i32
    %191 = arith.addi %0, %c1_i32_80 : i32
    %c8_i32_81 = arith.constant 8 : i32
    %192 = arith.muli %191, %c8_i32_81 : i32
    %c4_i32_82 = arith.constant 4 : i32
    %193 = arith.addi %192, %c4_i32_82 : i32
    %194 = arith.index_cast %193 : i32 to index
    %195 = memref.load %arg1[%194] : memref<16xi32, #tpu.memory_space<smem>>
    %196 = arith.index_cast %195 : i32 to index
    %c0_83 = arith.constant 0 : index
    %197 = vector.load %arg2[%196, %c0_83] : memref<16x512xf32, #tpu.memory_space<vmem>>, vector<1x512xf32>
    %c1_84 = arith.constant 1 : index
    %c0_85 = arith.constant 0 : index
    %198 = vector.load %arg7[%c1_84, %c0_85] : memref<2x512xf32, #tpu.memory_space<vmem>>, vector<1x512xf32>
    tpu.vector_store %arg7[%c1_84, %c0_85], %197 {strides = array<i32>} : memref<2x512xf32, #tpu.memory_space<vmem>>, vector<1x512xf32>,
    %c0_86 = arith.constant 0 : index
    %c0_87 = arith.constant 0 : index
    %199 = vector.load %arg7[%c0_86, %c0_87] : memref<2x512xf32, #tpu.memory_space<vmem>>, vector<2x512xf32>
    %c0_88 = arith.constant 0 : index
    %c0_89 = arith.constant 0 : index
    %200 = vector.load %arg3[%c0_88, %c0_89] : memref<128x512xf32, #tpu.memory_space<vmem>>, vector<128x512xf32>
    %cst_90 = arith.constant dense<0.000000e+00> : vector<2x512xf32>
    %201 = tpu.matmul %182, %200, %cst_90 {dimension_numbers = #tpu.dot_dimension_numbers<[1], [0], [0], [1], [0, 0, 1, 1], [], []>} : vector<2x128xf32>, vector<128x512xf32>, vector<2x512xf32> -> vector<2x512xf32>
    %202 = arith.addf %199, %201 : vector<2x512xf32>
    %203 = vector.extract_strided_slice %202 {offsets = [0, 0], sizes = [2, 128], strides = [1, 1]} : vector<2x512xf32> to vector<2x128xf32>
    %204 = arith.negf %203 : vector<2x128xf32>
    %205 = math.exp %204 : vector<2x128xf32>
    %cst_91 = arith.constant 1.000000e+00 : f32
    %206 = vector.broadcast %cst_91 : f32 to vector<2x128xf32>
    %207 = arith.addf %206, %205 : vector<2x128xf32>
    %208 = arith.divf %206, %207 : vector<2x128xf32>
    %209 = vector.extract_strided_slice %202 {offsets = [0, 128], sizes = [2, 128], strides = [1, 1]} : vector<2x512xf32> to vector<2x128xf32>
    %210 = arith.negf %209 : vector<2x128xf32>
    %211 = math.exp %210 : vector<2x128xf32>
    %cst_92 = arith.constant 1.000000e+00 : f32
    %212 = vector.broadcast %cst_92 : f32 to vector<2x128xf32>
    %213 = arith.addf %212, %211 : vector<2x128xf32>
    %214 = arith.divf %212, %213 : vector<2x128xf32>
    %215 = vector.extract_strided_slice %202 {offsets = [0, 256], sizes = [2, 128], strides = [1, 1]} : vector<2x512xf32> to vector<2x128xf32>
    %216 = math.tanh %215 : vector<2x128xf32>
    %217 = vector.extract_strided_slice %202 {offsets = [0, 384], sizes = [2, 128], strides = [1, 1]} : vector<2x512xf32> to vector<2x128xf32>
    %218 = arith.negf %217 : vector<2x128xf32>
    %219 = math.exp %218 : vector<2x128xf32>
    %cst_93 = arith.constant 1.000000e+00 : f32
    %220 = vector.broadcast %cst_93 : f32 to vector<2x128xf32>
    %221 = arith.addf %220, %219 : vector<2x128xf32>
    %222 = arith.divf %220, %221 : vector<2x128xf32>
    %223 = arith.mulf %214, %180 : vector<2x128xf32>
    %224 = arith.mulf %208, %216 : vector<2x128xf32>
    %225 = arith.addf %223, %224 : vector<2x128xf32>
    %226 = math.tanh %225 : vector<2x128xf32>
    %227 = arith.mulf %222, %226 : vector<2x128xf32>
    %c0_i32_94 = arith.constant 0 : i32
    %228 = arith.addi %0, %c0_i32_94 : i32
    %c8_i32_95 = arith.constant 8 : i32
    %229 = arith.muli %228, %c8_i32_95 : i32
    %c5_i32 = arith.constant 5 : i32
    %230 = arith.addi %229, %c5_i32 : i32
    %231 = arith.index_cast %230 : i32 to index
    %232 = memref.load %arg1[%231] : memref<16xi32, #tpu.memory_space<smem>>
    %233 = arith.index_cast %232 : i32 to index
    %c0_96 = arith.constant 0 : index
    %234 = vector.load %arg2[%233, %c0_96] : memref<16x512xf32, #tpu.memory_space<vmem>>, vector<1x512xf32>
    %c0_97 = arith.constant 0 : index
    %c0_98 = arith.constant 0 : index
    %235 = vector.load %arg7[%c0_97, %c0_98] : memref<2x512xf32, #tpu.memory_space<vmem>>, vector<1x512xf32>
    tpu.vector_store %arg7[%c0_97, %c0_98], %234 {strides = array<i32>} : memref<2x512xf32, #tpu.memory_space<vmem>>, vector<1x512xf32>,
    %c1_i32_99 = arith.constant 1 : i32
    %236 = arith.addi %0, %c1_i32_99 : i32
    %c8_i32_100 = arith.constant 8 : i32
    %237 = arith.muli %236, %c8_i32_100 : i32
    %c5_i32_101 = arith.constant 5 : i32
    %238 = arith.addi %237, %c5_i32_101 : i32
    %239 = arith.index_cast %238 : i32 to index
    %240 = memref.load %arg1[%239] : memref<16xi32, #tpu.memory_space<smem>>
    %241 = arith.index_cast %240 : i32 to index
    %c0_102 = arith.constant 0 : index
    %242 = vector.load %arg2[%241, %c0_102] : memref<16x512xf32, #tpu.memory_space<vmem>>, vector<1x512xf32>
    %c1_103 = arith.constant 1 : index
    %c0_104 = arith.constant 0 : index
    %243 = vector.load %arg7[%c1_103, %c0_104] : memref<2x512xf32, #tpu.memory_space<vmem>>, vector<1x512xf32>
    tpu.vector_store %arg7[%c1_103, %c0_104], %242 {strides = array<i32>} : memref<2x512xf32, #tpu.memory_space<vmem>>, vector<1x512xf32>,
    %c0_105 = arith.constant 0 : index
    %c0_106 = arith.constant 0 : index
    %244 = vector.load %arg7[%c0_105, %c0_106] : memref<2x512xf32, #tpu.memory_space<vmem>>, vector<2x512xf32>
    %c0_107 = arith.constant 0 : index
    %c0_108 = arith.constant 0 : index
    %245 = vector.load %arg3[%c0_107, %c0_108] : memref<128x512xf32, #tpu.memory_space<vmem>>, vector<128x512xf32>
    %cst_109 = arith.constant dense<0.000000e+00> : vector<2x512xf32>
    %246 = tpu.matmul %227, %245, %cst_109 {dimension_numbers = #tpu.dot_dimension_numbers<[1], [0], [0], [1], [0, 0, 1, 1], [], []>} : vector<2x128xf32>, vector<128x512xf32>, vector<2x512xf32> -> vector<2x512xf32>
    %247 = arith.addf %244, %246 : vector<2x512xf32>
    %248 = vector.extract_strided_slice %247 {offsets = [0, 0], sizes = [2, 128], strides = [1, 1]} : vector<2x512xf32> to vector<2x128xf32>
    %249 = arith.negf %248 : vector<2x128xf32>
    %250 = math.exp %249 : vector<2x128xf32>
    %cst_110 = arith.constant 1.000000e+00 : f32
    %251 = vector.broadcast %cst_110 : f32 to vector<2x128xf32>
    %252 = arith.addf %251, %250 : vector<2x128xf32>
    %253 = arith.divf %251, %252 : vector<2x128xf32>
    %254 = vector.extract_strided_slice %247 {offsets = [0, 128], sizes = [2, 128], strides = [1, 1]} : vector<2x512xf32> to vector<2x128xf32>
    %255 = arith.negf %254 : vector<2x128xf32>
    %256 = math.exp %255 : vector<2x128xf32>
    %cst_111 = arith.constant 1.000000e+00 : f32
    %257 = vector.broadcast %cst_111 : f32 to vector<2x128xf32>
    %258 = arith.addf %257, %256 : vector<2x128xf32>
    %259 = arith.divf %257, %258 : vector<2x128xf32>
    %260 = vector.extract_strided_slice %247 {offsets = [0, 256], sizes = [2, 128], strides = [1, 1]} : vector<2x512xf32> to vector<2x128xf32>
    %261 = math.tanh %260 : vector<2x128xf32>
    %262 = vector.extract_strided_slice %247 {offsets = [0, 384], sizes = [2, 128], strides = [1, 1]} : vector<2x512xf32> to vector<2x128xf32>
    %263 = arith.negf %262 : vector<2x128xf32>
    %264 = math.exp %263 : vector<2x128xf32>
    %cst_112 = arith.constant 1.000000e+00 : f32
    %265 = vector.broadcast %cst_112 : f32 to vector<2x128xf32>
    %266 = arith.addf %265, %264 : vector<2x128xf32>
    %267 = arith.divf %265, %266 : vector<2x128xf32>
    %268 = arith.mulf %259, %225 : vector<2x128xf32>
    %269 = arith.mulf %253, %261 : vector<2x128xf32>
    %270 = arith.addf %268, %269 : vector<2x128xf32>
    %271 = math.tanh %270 : vector<2x128xf32>
    %272 = arith.mulf %267, %271 : vector<2x128xf32>
    %c0_i32_113 = arith.constant 0 : i32
    %273 = arith.addi %0, %c0_i32_113 : i32
    %c8_i32_114 = arith.constant 8 : i32
    %274 = arith.muli %273, %c8_i32_114 : i32
    %c6_i32 = arith.constant 6 : i32
    %275 = arith.addi %274, %c6_i32 : i32
    %276 = arith.index_cast %275 : i32 to index
    %277 = memref.load %arg1[%276] : memref<16xi32, #tpu.memory_space<smem>>
    %278 = arith.index_cast %277 : i32 to index
    %c0_115 = arith.constant 0 : index
    %279 = vector.load %arg2[%278, %c0_115] : memref<16x512xf32, #tpu.memory_space<vmem>>, vector<1x512xf32>
    %c0_116 = arith.constant 0 : index
    %c0_117 = arith.constant 0 : index
    %280 = vector.load %arg7[%c0_116, %c0_117] : memref<2x512xf32, #tpu.memory_space<vmem>>, vector<1x512xf32>
    tpu.vector_store %arg7[%c0_116, %c0_117], %279 {strides = array<i32>} : memref<2x512xf32, #tpu.memory_space<vmem>>, vector<1x512xf32>,
    %c1_i32_118 = arith.constant 1 : i32
    %281 = arith.addi %0, %c1_i32_118 : i32
    %c8_i32_119 = arith.constant 8 : i32
    %282 = arith.muli %281, %c8_i32_119 : i32
    %c6_i32_120 = arith.constant 6 : i32
    %283 = arith.addi %282, %c6_i32_120 : i32
    %284 = arith.index_cast %283 : i32 to index
    %285 = memref.load %arg1[%284] : memref<16xi32, #tpu.memory_space<smem>>
    %286 = arith.index_cast %285 : i32 to index
    %c0_121 = arith.constant 0 : index
    %287 = vector.load %arg2[%286, %c0_121] : memref<16x512xf32, #tpu.memory_space<vmem>>, vector<1x512xf32>
    %c1_122 = arith.constant 1 : index
    %c0_123 = arith.constant 0 : index
    %288 = vector.load %arg7[%c1_122, %c0_123] : memref<2x512xf32, #tpu.memory_space<vmem>>, vector<1x512xf32>
    tpu.vector_store %arg7[%c1_122, %c0_123], %287 {strides = array<i32>} : memref<2x512xf32, #tpu.memory_space<vmem>>, vector<1x512xf32>,
    %c0_124 = arith.constant 0 : index
    %c0_125 = arith.constant 0 : index
    %289 = vector.load %arg7[%c0_124, %c0_125] : memref<2x512xf32, #tpu.memory_space<vmem>>, vector<2x512xf32>
    %c0_126 = arith.constant 0 : index
    %c0_127 = arith.constant 0 : index
    %290 = vector.load %arg3[%c0_126, %c0_127] : memref<128x512xf32, #tpu.memory_space<vmem>>, vector<128x512xf32>
    %cst_128 = arith.constant dense<0.000000e+00> : vector<2x512xf32>
    %291 = tpu.matmul %272, %290, %cst_128 {dimension_numbers = #tpu.dot_dimension_numbers<[1], [0], [0], [1], [0, 0, 1, 1], [], []>} : vector<2x128xf32>, vector<128x512xf32>, vector<2x512xf32> -> vector<2x512xf32>
    %292 = arith.addf %289, %291 : vector<2x512xf32>
    %293 = vector.extract_strided_slice %292 {offsets = [0, 0], sizes = [2, 128], strides = [1, 1]} : vector<2x512xf32> to vector<2x128xf32>
    %294 = arith.negf %293 : vector<2x128xf32>
    %295 = math.exp %294 : vector<2x128xf32>
    %cst_129 = arith.constant 1.000000e+00 : f32
    %296 = vector.broadcast %cst_129 : f32 to vector<2x128xf32>
    %297 = arith.addf %296, %295 : vector<2x128xf32>
    %298 = arith.divf %296, %297 : vector<2x128xf32>
    %299 = vector.extract_strided_slice %292 {offsets = [0, 128], sizes = [2, 128], strides = [1, 1]} : vector<2x512xf32> to vector<2x128xf32>
    %300 = arith.negf %299 : vector<2x128xf32>
    %301 = math.exp %300 : vector<2x128xf32>
    %cst_130 = arith.constant 1.000000e+00 : f32
    %302 = vector.broadcast %cst_130 : f32 to vector<2x128xf32>
    %303 = arith.addf %302, %301 : vector<2x128xf32>
    %304 = arith.divf %302, %303 : vector<2x128xf32>
    %305 = vector.extract_strided_slice %292 {offsets = [0, 256], sizes = [2, 128], strides = [1, 1]} : vector<2x512xf32> to vector<2x128xf32>
    %306 = math.tanh %305 : vector<2x128xf32>
    %307 = vector.extract_strided_slice %292 {offsets = [0, 384], sizes = [2, 128], strides = [1, 1]} : vector<2x512xf32> to vector<2x128xf32>
    %308 = arith.negf %307 : vector<2x128xf32>
    %309 = math.exp %308 : vector<2x128xf32>
    %cst_131 = arith.constant 1.000000e+00 : f32
    %310 = vector.broadcast %cst_131 : f32 to vector<2x128xf32>
    %311 = arith.addf %310, %309 : vector<2x128xf32>
    %312 = arith.divf %310, %311 : vector<2x128xf32>
    %313 = arith.mulf %304, %270 : vector<2x128xf32>
    %314 = arith.mulf %298, %306 : vector<2x128xf32>
    %315 = arith.addf %313, %314 : vector<2x128xf32>
    %316 = math.tanh %315 : vector<2x128xf32>
    %317 = arith.mulf %312, %316 : vector<2x128xf32>
    %c0_i32_132 = arith.constant 0 : i32
    %318 = arith.addi %0, %c0_i32_132 : i32
    %c8_i32_133 = arith.constant 8 : i32
    %319 = arith.muli %318, %c8_i32_133 : i32
    %c7_i32 = arith.constant 7 : i32
    %320 = arith.addi %319, %c7_i32 : i32
    %321 = arith.index_cast %320 : i32 to index
    %322 = memref.load %arg1[%321] : memref<16xi32, #tpu.memory_space<smem>>
    %323 = arith.index_cast %322 : i32 to index
    %c0_134 = arith.constant 0 : index
    %324 = vector.load %arg2[%323, %c0_134] : memref<16x512xf32, #tpu.memory_space<vmem>>, vector<1x512xf32>
    %c0_135 = arith.constant 0 : index
    %c0_136 = arith.constant 0 : index
    %325 = vector.load %arg7[%c0_135, %c0_136] : memref<2x512xf32, #tpu.memory_space<vmem>>, vector<1x512xf32>
    tpu.vector_store %arg7[%c0_135, %c0_136], %324 {strides = array<i32>} : memref<2x512xf32, #tpu.memory_space<vmem>>, vector<1x512xf32>,
    %c1_i32_137 = arith.constant 1 : i32
    %326 = arith.addi %0, %c1_i32_137 : i32
    %c8_i32_138 = arith.constant 8 : i32
    %327 = arith.muli %326, %c8_i32_138 : i32
    %c7_i32_139 = arith.constant 7 : i32
    %328 = arith.addi %327, %c7_i32_139 : i32
    %329 = arith.index_cast %328 : i32 to index
    %330 = memref.load %arg1[%329] : memref<16xi32, #tpu.memory_space<smem>>
    %331 = arith.index_cast %330 : i32 to index
    %c0_140 = arith.constant 0 : index
    %332 = vector.load %arg2[%331, %c0_140] : memref<16x512xf32, #tpu.memory_space<vmem>>, vector<1x512xf32>
    %c1_141 = arith.constant 1 : index
    %c0_142 = arith.constant 0 : index
    %333 = vector.load %arg7[%c1_141, %c0_142] : memref<2x512xf32, #tpu.memory_space<vmem>>, vector<1x512xf32>
    tpu.vector_store %arg7[%c1_141, %c0_142], %332 {strides = array<i32>} : memref<2x512xf32, #tpu.memory_space<vmem>>, vector<1x512xf32>,
    %c0_143 = arith.constant 0 : index
    %c0_144 = arith.constant 0 : index
    %334 = vector.load %arg7[%c0_143, %c0_144] : memref<2x512xf32, #tpu.memory_space<vmem>>, vector<2x512xf32>
    %c0_145 = arith.constant 0 : index
    %c0_146 = arith.constant 0 : index
    %335 = vector.load %arg3[%c0_145, %c0_146] : memref<128x512xf32, #tpu.memory_space<vmem>>, vector<128x512xf32>
    %cst_147 = arith.constant dense<0.000000e+00> : vector<2x512xf32>
    %336 = tpu.matmul %317, %335, %cst_147 {dimension_numbers = #tpu.dot_dimension_numbers<[1], [0], [0], [1], [0, 0, 1, 1], [], []>} : vector<2x128xf32>, vector<128x512xf32>, vector<2x512xf32> -> vector<2x512xf32>
    %337 = arith.addf %334, %336 : vector<2x512xf32>
    %338 = vector.extract_strided_slice %337 {offsets = [0, 0], sizes = [2, 128], strides = [1, 1]} : vector<2x512xf32> to vector<2x128xf32>
    %339 = arith.negf %338 : vector<2x128xf32>
    %340 = math.exp %339 : vector<2x128xf32>
    %cst_148 = arith.constant 1.000000e+00 : f32
    %341 = vector.broadcast %cst_148 : f32 to vector<2x128xf32>
    %342 = arith.addf %341, %340 : vector<2x128xf32>
    %343 = arith.divf %341, %342 : vector<2x128xf32>
    %344 = vector.extract_strided_slice %337 {offsets = [0, 128], sizes = [2, 128], strides = [1, 1]} : vector<2x512xf32> to vector<2x128xf32>
    %345 = arith.negf %344 : vector<2x128xf32>
    %346 = math.exp %345 : vector<2x128xf32>
    %cst_149 = arith.constant 1.000000e+00 : f32
    %347 = vector.broadcast %cst_149 : f32 to vector<2x128xf32>
    %348 = arith.addf %347, %346 : vector<2x128xf32>
    %349 = arith.divf %347, %348 : vector<2x128xf32>
    %350 = vector.extract_strided_slice %337 {offsets = [0, 256], sizes = [2, 128], strides = [1, 1]} : vector<2x512xf32> to vector<2x128xf32>
    %351 = math.tanh %350 : vector<2x128xf32>
    %352 = vector.extract_strided_slice %337 {offsets = [0, 384], sizes = [2, 128], strides = [1, 1]} : vector<2x512xf32> to vector<2x128xf32>
    %353 = arith.negf %352 : vector<2x128xf32>
    %354 = math.exp %353 : vector<2x128xf32>
    %cst_150 = arith.constant 1.000000e+00 : f32
    %355 = vector.broadcast %cst_150 : f32 to vector<2x128xf32>
    %356 = arith.addf %355, %354 : vector<2x128xf32>
    %357 = arith.divf %355, %356 : vector<2x128xf32>
    %358 = arith.mulf %349, %315 : vector<2x128xf32>
    %359 = arith.mulf %343, %351 : vector<2x128xf32>
    %360 = arith.addf %358, %359 : vector<2x128xf32>
    %361 = math.tanh %360 : vector<2x128xf32>
    %362 = arith.mulf %357, %361 : vector<2x128xf32>
    %c0_151 = arith.constant 0 : index
    %c0_152 = arith.constant 0 : index
    %363 = vector.load %arg4[%c0_151, %c0_152] : memref<1x128xf32, #tpu.memory_space<vmem>>, vector<1x128xf32>
    %364 = vector.broadcast %363 : vector<1x128xf32> to vector<2x128xf32>
    %365 = arith.mulf %362, %364 : vector<2x128xf32>
    %cst_153 = arith.constant dense<0.000000e+00> : vector<2xf32>
    %366 = vector.multi_reduction <add>, %365, %cst_153 [1] : vector<2x128xf32> to vector<2xf32>
    %367 = vector.shape_cast %366 : vector<2xf32> to vector<2x1xf32>
    %c0_154 = arith.constant 0 : index
    %c0_155 = arith.constant 0 : index
    %368 = memref.load %arg5[%c0_154, %c0_155] : memref<1x1xf32, #tpu.memory_space<smem>>
    %369 = vector.broadcast %368 : f32 to vector<2x1xf32>
    %370 = arith.addf %367, %369 : vector<2x1xf32>
    %371 = arith.negf %370 : vector<2x1xf32>
    %372 = math.exp %371 : vector<2x1xf32>
    %cst_156 = arith.constant 1.000000e+00 : f32
    %373 = vector.broadcast %cst_156 : f32 to vector<2x1xf32>
    %374 = arith.addf %373, %372 : vector<2x1xf32>
    %375 = arith.divf %373, %374 : vector<2x1xf32>
    %c0_157 = arith.constant 0 : index
    %c0_158 = arith.constant 0 : index
    %376 = vector.load %arg6[%c0_157, %c0_158] : memref<2x1xf32, #tpu.memory_space<vmem>>, vector<2x1xf32>
    tpu.vector_store %arg6[%c0_157, %c0_158], %375 {strides = array<i32>} : memref<2x1xf32, #tpu.memory_space<vmem>>, vector<2x1xf32>,
    return
  }
  func.func @transform_0(%arg0: i32, %arg1: memref<16xi32, #tpu.memory_space<smem>>) -> (i32, i32) {
    %c0_i32 = arith.constant 0 : i32
    %c0_i32_0 = arith.constant 0 : i32
    %c0_i32_1 = arith.constant 0 : i32
    return %c0_i32, %c0_i32_0 : i32, i32
  }
  func.func @transform_1(%arg0: i32, %arg1: memref<16xi32, #tpu.memory_space<smem>>) -> (i32, i32) {
    %c0_i32 = arith.constant 0 : i32
    %c0_i32_0 = arith.constant 0 : i32
    %c0_i32_1 = arith.constant 0 : i32
    return %c0_i32, %c0_i32_0 : i32, i32
  }
  func.func @transform_2(%arg0: i32, %arg1: memref<16xi32, #tpu.memory_space<smem>>) -> (i32, i32) {
    %c0_i32 = arith.constant 0 : i32
    %c0_i32_0 = arith.constant 0 : i32
    %c0_i32_1 = arith.constant 0 : i32
    return %c0_i32, %c0_i32_0 : i32, i32
  }
  func.func @transform_3(%arg0: i32, %arg1: memref<16xi32, #tpu.memory_space<smem>>) -> (i32, i32) {
    %c0_i32 = arith.constant 0 : i32
    %c0_i32_0 = arith.constant 0 : i32
    %c0_i32_1 = arith.constant 0 : i32
    return %c0_i32, %c0_i32_0 : i32, i32
  }
  func.func @transform_4(%arg0: i32, %arg1: memref<16xi32, #tpu.memory_space<smem>>) -> (i32, i32) {
    %c0_i32 = arith.constant 0 : i32
    %c0_i32_0 = arith.constant 0 : i32
    return %arg0, %c0_i32 : i32, i32
  }
}

</mosaic_0001>

<llo_original>
// kernel: improved_text_classifier.1
$region0: #{improved_text_classifier.1}
  #allocation0 [shape = 'u32[]', space=smem, size = 0x4, offset = 0x4, fixed_abs, tag = 'smem constant byte address 0x4 - core index']
  #allocation1 [shape = 'u32[144,128]{1,0:T(1,128)}', space=vmem, size = 0x12000, scoped, tag = 'internal scratch']
  #allocation2 [shape = 'f32[2,512]{1,0:T(2,128)}', space=vmem, size = 0x1000, scoped, tag = 'scratch operand']
  #allocation3 [shape = 's32[1]{0}', space=sflag, size = 0x4, scoped, tag = 'scoped memory for improved_text_classifier.1']
  #allocation4 [shape = 'u8[512]{0}', space=smem, size = 0x200, scoped, tag = 'prefetched SMEM operand 0']
  #allocation5 [shape = 'f32[1,1]{1,0:T(1,128)S(6)}', space=smem, size = 0x200, scoped, tag = 'scoped memory for improved_text_classifier.1']
  %s0 = inlined_call_operand.vmem [shape: s32[16], index: 0, kind: input, shape index: {}]
  %s1 = inlined_call_operand.hbm [shape: f32[16,512], index: 1, kind: input, shape index: {}]
  %s2 = inlined_call_operand.hbm [shape: f32[128,512], index: 2, kind: input, shape index: {}]
  %s3 = inlined_call_operand.vmem [shape: f32[1,128], index: 3, kind: input, shape index: {}]
  %s4 = inlined_call_operand.<no memory space> [shape: f32[1,1], index: 4, kind: input, shape index: {}]
  %s5 = inlined_call_operand.vmem [shape: f32[2,1], index: 5, kind: output, shape index: {}]
  %s6 = sld [smem:[#allocation0]]
  $region34: #{improved_text_classifier.1} parent=0
    _
  %s8 = ssub.s32 1, %s6
  %s9 = scalar_select 0, %s8, %s6
  %s10 = sshll.u32 %s0, 4
  %s11 = int_to_ptr.vmem [resolvable:$true] %s10
  %13 = dma.vmem_to_smem %s11, 16, [#allocation4], [#allocation3]
  %14 = sst [smem:[#allocation5]] %s4
  %15 = dma.done [#allocation3], 16
  %16 = sfence
  $region1: #{improved_text_classifier.1} parent=0
    #allocation6 [shape = 'u8[32768]{0}', space=vmem, size = 0x8000, scoped, tag = 'input window, operand 1, single buffered']
    #allocation7 [shape = 's32[1]{0}', space=sflag, size = 0x4, scoped, tag = 'scoped memory for improved_text_classifier.1']
    #allocation8 [shape = 'u8[262144]{0}', space=vmem, size = 0x40000, scoped, tag = 'input window, operand 2, single buffered']
    #allocation9 [shape = 's32[1]{0}', space=sflag, size = 0x4, scoped, tag = 'scoped memory for improved_text_classifier.1']
    %17 = vsyncpa [#allocation7], 0
    %18 = vsyncpa [#allocation9], 0
    // Predicated region
    $region2: #{improved_text_classifier.1} parent=1 // pred_check
      _
    $region3: #{improved_text_classifier.1} parent=1 // pred_check_branch
      %20 = sbr.rel (0) target = $region5
    $region4: #{improved_text_classifier.1} parent=1 // pred_region
      %s22 = ssub.s32 1024, 1024
      %23 = vsyncadd [#allocation7], %s22
      %s24 = sshll.u32 [#allocation6], 4
      %s25 = int_to_ptr.vmem [resolvable:$true] %s24
      %30 = dma.hbm_to_vmem [thread:$0]  %s1, 1024, %s25, [#allocation7], 512, 512, 32
    $region5: #{improved_text_classifier.1} parent=1 // pred_fallthru
      _
    // Predicated region
    $region6: #{improved_text_classifier.1} parent=1 // pred_check
      _
    $region7: #{improved_text_classifier.1} parent=1 // pred_check_branch
      %32 = sbr.rel (0) target = $region9
    $region8: #{improved_text_classifier.1} parent=1 // pred_region
      %s34 = ssub.s32 8192, 8192
      %35 = vsyncadd [#allocation9], %s34
      %s36 = sshll.u32 [#allocation8], 4
      %s37 = int_to_ptr.vmem [resolvable:$true] %s36
      %42 = dma.hbm_to_vmem [thread:$0]  %s2, 8192, %s37, [#allocation9], 512, 512, 32
    $region9: #{improved_text_classifier.1} parent=1 // pred_fallthru
      _
    // Predicated region
    $region10: #{improved_text_classifier.1} parent=1 // pred_check
      _
    $region11: #{improved_text_classifier.1} parent=1 // pred_check_branch
      %44 = sbr.rel (0) target = $region13
    $region12: #{improved_text_classifier.1} parent=1 // pred_region
      _
    $region13: #{improved_text_classifier.1} parent=1 // pred_fallthru
      _
    // Predicated region
    $region14: #{improved_text_classifier.1} parent=1 // pred_check
      _
    $region15: #{improved_text_classifier.1} parent=1 // pred_check_branch
      %46 = sbr.rel (0) target = $region17
    $region16: #{improved_text_classifier.1} parent=1 // pred_region
      _
    $region17: #{improved_text_classifier.1} parent=1 // pred_fallthru
      _
    // Predicated region
    $region18: #{improved_text_classifier.1} parent=1 // pred_check
      _
    $region19: #{improved_text_classifier.1} parent=1 // pred_check_branch
      %48 = sbr.rel (0) target = $region21
    $region20: #{improved_text_classifier.1} parent=1 // pred_region
      %49 = dma.done [#allocation7], 1024
    $region21: #{improved_text_classifier.1} parent=1 // pred_fallthru
      _
    // Predicated region
    $region22: #{improved_text_classifier.1} parent=1 // pred_check
      _
    $region23: #{improved_text_classifier.1} parent=1 // pred_check_branch
      %51 = sbr.rel (0) target = $region25
    $region24: #{improved_text_classifier.1} parent=1 // pred_region
      %52 = dma.done [#allocation9], 8192
    $region25: #{improved_text_classifier.1} parent=1 // pred_fallthru
      _
    %s53 = smul.u32 0, 2
    %s54 = smul.u32 0, 16
    %s55 = sld [smem:[#allocation4 + %s54]]
    %s56 = sshra.s32 %s55, 3
    %s57 = sand.u32 %s55, 7
    %s58 = sshra.s32 %s55, 3
    %s59 = sand.u32 %s55, 7
    %s60 = smul.u32 %s56, 4
    %s61 = smul.u32 %s60, 8
    %s62 = sadd.s32 %s61, %s59
    %s63 = scalar_lea.vmem [#allocation6], %s62
    %v64 = vld [vmem:[%s63] ss:$8 sm:$0xf]
    %v65 = vlaneseq
    %vm66 = vcmp.ge.s32.totalorder %v65, 0
    %vm67 = vcmp.lt.s32.totalorder %v65, 512
    %vm68 = vmand %vm66, %vm67
    %69 = vst.msk [vmem:[#allocation2] ss:$2 sm:$0xf] %vm68, %v64
    %s70 = sadd.s32 %s53, 1
    %s71 = smul.u32 %s70, 8
    %s72 = sld [smem:[#allocation4 + %s71]]
    %s73 = sshra.s32 %s72, 3
    %s74 = sand.u32 %s72, 7
    %s75 = sshra.s32 %s72, 3
    %s76 = sand.u32 %s72, 7
    %s77 = smul.u32 %s73, 4
    %s78 = smul.u32 %s77, 8
    %s79 = sadd.s32 %s78, %s76
    %s80 = scalar_lea.vmem [#allocation6], %s79
    %v81 = vld [vmem:[%s80] ss:$8 sm:$0xf]
    %s82 = scalar_lea.vmem [#allocation2], 1
    %83 = vst.msk [vmem:[%s82] ss:$2 sm:$0xf] %vm68, %v81
    %v84 = vld [vmem:[#allocation2] sm:$0xff]
    %v85 = vld [vmem:[#allocation8] sm:$0xff]
    %v86 = vld [vmem:[#allocation8 + $0x8] sm:$0xff]
    %v87 = vld [vmem:[#allocation8 + $0x10] sm:$0xff]
    %v88 = vld [vmem:[#allocation8 + $0x18] sm:$0xff]
    %v89 = vld [vmem:[#allocation8 + $0x20] sm:$0xff]
    %v90 = vld [vmem:[#allocation8 + $0x28] sm:$0xff]
    %v91 = vld [vmem:[#allocation8 + $0x30] sm:$0xff]
    %v92 = vld [vmem:[#allocation8 + $0x38] sm:$0xff]
    %v93 = vld [vmem:[#allocation8 + $0x40] sm:$0xff]
    %v94 = vld [vmem:[#allocation8 + $0x48] sm:$0xff]
    %v95 = vld [vmem:[#allocation8 + $0x50] sm:$0xff]
    %v96 = vld [vmem:[#allocation8 + $0x58] sm:$0xff]
    %v97 = vld [vmem:[#allocation8 + $0x60] sm:$0xff]
    %v98 = vld [vmem:[#allocation8 + $0x68] sm:$0xff]
    %v99 = vld [vmem:[#allocation8 + $0x70] sm:$0xff]
    %v100 = vld [vmem:[#allocation8 + $0x78] sm:$0xff]
    %v101 = vld [vmem:[#allocation8 + $0x80] sm:$0xff]
    %v102 = vld [vmem:[#allocation8 + $0x88] sm:$0xff]
    %v103 = vld [vmem:[#allocation8 + $0x90] sm:$0xff]
    %v104 = vld [vmem:[#allocation8 + $0x98] sm:$0xff]
    %v105 = vld [vmem:[#allocation8 + $0xa0] sm:$0xff]
    %v106 = vld [vmem:[#allocation8 + $0xa8] sm:$0xff]
    %v107 = vld [vmem:[#allocation8 + $0xb0] sm:$0xff]
    %v108 = vld [vmem:[#allocation8 + $0xb8] sm:$0xff]
    %v109 = vld [vmem:[#allocation8 + $0xc0] sm:$0xff]
    %v110 = vld [vmem:[#allocation8 + $0xc8] sm:$0xff]
    %v111 = vld [vmem:[#allocation8 + $0xd0] sm:$0xff]
    %v112 = vld [vmem:[#allocation8 + $0xd8] sm:$0xff]
    %v113 = vld [vmem:[#allocation8 + $0xe0] sm:$0xff]
    %v114 = vld [vmem:[#allocation8 + $0xe8] sm:$0xff]
    %v115 = vld [vmem:[#allocation8 + $0xf0] sm:$0xff]
    %v116 = vld [vmem:[#allocation8 + $0xf8] sm:$0xff]
    %v117 = vld [vmem:[#allocation8 + $0x100] sm:$0xff]
    %v118 = vld [vmem:[#allocation8 + $0x108] sm:$0xff]
    %v119 = vld [vmem:[#allocation8 + $0x110] sm:$0xff]
    %v120 = vld [vmem:[#allocation8 + $0x118] sm:$0xff]
    %v121 = vld [vmem:[#allocation8 + $0x120] sm:$0xff]
    %v122 = vld [vmem:[#allocation8 + $0x128] sm:$0xff]
    %v123 = vld [vmem:[#allocation8 + $0x130] sm:$0xff]
    %v124 = vld [vmem:[#allocation8 + $0x138] sm:$0xff]
    %v125 = vld [vmem:[#allocation8 + $0x140] sm:$0xff]
    %v126 = vld [vmem:[#allocation8 + $0x148] sm:$0xff]
    %v127 = vld [vmem:[#allocation8 + $0x150] sm:$0xff]
    %v128 = vld [vmem:[#allocation8 + $0x158] sm:$0xff]
    %v129 = vld [vmem:[#allocation8 + $0x160] sm:$0xff]
    %v130 = vld [vmem:[#allocation8 + $0x168] sm:$0xff]
    %v131 = vld [vmem:[#allocation8 + $0x170] sm:$0xff]
    %v132 = vld [vmem:[#allocation8 + $0x178] sm:$0xff]
    %v133 = vld [vmem:[#allocation8 + $0x180] sm:$0xff]
    %v134 = vld [vmem:[#allocation8 + $0x188] sm:$0xff]
    %v135 = vld [vmem:[#allocation8 + $0x190] sm:$0xff]
    %v136 = vld [vmem:[#allocation8 + $0x198] sm:$0xff]
    %v137 = vld [vmem:[#allocation8 + $0x1a0] sm:$0xff]
    %v138 = vld [vmem:[#allocation8 + $0x1a8] sm:$0xff]
    %v139 = vld [vmem:[#allocation8 + $0x1b0] sm:$0xff]
    %v140 = vld [vmem:[#allocation8 + $0x1b8] sm:$0xff]
    %v141 = vld [vmem:[#allocation8 + $0x1c0] sm:$0xff]
    %v142 = vld [vmem:[#allocation8 + $0x1c8] sm:$0xff]
    %v143 = vld [vmem:[#allocation8 + $0x1d0] sm:$0xff]
    %v144 = vld [vmem:[#allocation8 + $0x1d8] sm:$0xff]
    %v145 = vld [vmem:[#allocation8 + $0x1e0] sm:$0xff]
    %v146 = vld [vmem:[#allocation8 + $0x1e8] sm:$0xff]
    %v147 = vld [vmem:[#allocation8 + $0x1f0] sm:$0xff]
    %v148 = vld [vmem:[#allocation8 + $0x1f8] sm:$0xff]
    %149 = vmatprep.subr.mxu0 %v146
    %150 = vmatpush1.msra.mxu0 %v145
    %151 = vmatprep.subr.mxu0 %v142
    %152 = vmatpush1.msra.mxu0 %v141
    %153 = vmatprep.subr.mxu0 %v138
    %154 = vmatpush1.msra.mxu0 %v137
    %155 = vmatprep.subr.mxu0 %v134
    %156 = vmatpush1.msra.mxu0 %v133
    %157 = vmatprep.subr.mxu0 %v130
    %158 = vmatpush1.msra.mxu0 %v129
    %159 = vmatprep.subr.mxu0 %v126
    %160 = vmatpush1.msra.mxu0 %v125
    %161 = vmatprep.subr.mxu0 %v122
    %162 = vmatpush1.msra.mxu0 %v121
    %163 = vmatprep.subr.mxu0 %v118
    %164 = vmatpush1.msra.mxu0 %v117
    %165 = vmatprep.subr.mxu0 %v114
    %166 = vmatpush1.msra.mxu0 %v113
    %167 = vmatprep.subr.mxu0 %v110
    %168 = vmatpush1.msra.mxu0 %v109
    %169 = vmatprep.subr.mxu0 %v106
    %170 = vmatpush1.msra.mxu0 %v105
    %171 = vmatprep.subr.mxu0 %v102
    %172 = vmatpush1.msra.mxu0 %v101
    %173 = vmatprep.subr.mxu0 %v98
    %174 = vmatpush1.msra.mxu0 %v97
    %175 = vmatprep.subr.mxu0 %v94
    %176 = vmatpush1.msra.mxu0 %v93
    %177 = vmatprep.subr.mxu0 %v90
    %178 = vmatpush1.msra.mxu0 %v89
    %179 = vmatprep.subr.mxu0 %v86
    %180 = vmatpush1.msra.mxu0 %v85
    %181 = vmatprep.subr.mxu0 0.0
    %182 = vmatpush2.msra.mxu0 0.0
    %183 = vmatprep.subr.mxu0 0.0
    %184 = vmatpush2.msra.mxu0 0.0
    %185 = vmatprep.subr.mxu0 0.0
    %186 = vmatpush2.msra.mxu0 0.0
    %187 = vmatprep.subr.mxu0 0.0
    %188 = vmatpush2.msra.mxu0 0.0
    %189 = vmatprep.subr.mxu0 0.0
    %190 = vmatpush2.msra.mxu0 0.0
    %191 = vmatprep.subr.mxu0 0.0
    %192 = vmatpush2.msra.mxu0 0.0
    %193 = vmatprep.subr.mxu0 0.0
    %194 = vmatpush2.msra.mxu0 0.0
    %195 = vmatprep.subr.mxu0 0.0
    %196 = vmatpush2.msra.mxu0 0.0
    %197 = vmatprep.subr.mxu0 0.0
    %198 = vmatpush2.msra.mxu0 0.0
    %199 = vmatprep.subr.mxu0 0.0
    %200 = vmatpush2.msra.mxu0 0.0
    %201 = vmatprep.subr.mxu0 0.0
    %202 = vmatpush2.msra.mxu0 0.0
    %203 = vmatprep.subr.mxu0 0.0
    %204 = vmatpush2.msra.mxu0 0.0
    %205 = vmatprep.subr.mxu0 0.0
    %206 = vmatpush2.msra.mxu0 0.0
    %207 = vmatprep.subr.mxu0 0.0
    %208 = vmatpush2.msra.mxu0 0.0
    %209 = vmatprep.subr.mxu0 0.0
    %210 = vmatpush2.msra.mxu0 0.0
    %211 = vmatprep.subr.mxu0 0.0
    %212 = vmatpush2.msra.mxu0 0.0
    %213 = vmatprep.mubr.f32.mxu0 0.0
    %214 = vmatmul.mubr.f32.gmra.mxu0 0.0
    %v215 = vpop.f32.mrf.mxu0
    %v216 = vadd.f32 0.0, %v215
    %v217 = vpop.f32.mrf.mxu0
    %v218 = vadd.f32 0.0, %v217
    %219 = vdwg.mxu0
    %220 = vmatprep.subr.mxu0 %v148
    %221 = vmatpush1.msra.mxu0 %v147
    %222 = vmatprep.subr.mxu0 %v144
    %223 = vmatpush1.msra.mxu0 %v143
    %224 = vmatprep.subr.mxu0 %v140
    %225 = vmatpush1.msra.mxu0 %v139
    %226 = vmatprep.subr.mxu0 %v136
    %227 = vmatpush1.msra.mxu0 %v135
    %228 = vmatprep.subr.mxu0 %v132
    %229 = vmatpush1.msra.mxu0 %v131
    %230 = vmatprep.subr.mxu0 %v128
    %231 = vmatpush1.msra.mxu0 %v127
    %232 = vmatprep.subr.mxu0 %v124
    %233 = vmatpush1.msra.mxu0 %v123
    %234 = vmatprep.subr.mxu0 %v120
    %235 = vmatpush1.msra.mxu0 %v119
    %236 = vmatprep.subr.mxu0 %v116
    %237 = vmatpush1.msra.mxu0 %v115
    %238 = vmatprep.subr.mxu0 %v112
    %239 = vmatpush1.msra.mxu0 %v111
    %240 = vmatprep.subr.mxu0 %v108
    %241 = vmatpush1.msra.mxu0 %v107
    %242 = vmatprep.subr.mxu0 %v104
    %243 = vmatpush1.msra.mxu0 %v103
    %244 = vmatprep.subr.mxu0 %v100
    %245 = vmatpush1.msra.mxu0 %v99
    %246 = vmatprep.subr.mxu0 %v96
    %247 = vmatpush1.msra.mxu0 %v95
    %248 = vmatprep.subr.mxu0 %v92
    %249 = vmatpush1.msra.mxu0 %v91
    %250 = vmatprep.subr.mxu0 %v88
    %251 = vmatpush1.msra.mxu0 %v87
    %252 = vmatprep.subr.mxu0 0.0
    %253 = vmatpush2.msra.mxu0 0.0
    %254 = vmatprep.subr.mxu0 0.0
    %255 = vmatpush2.msra.mxu0 0.0
    %256 = vmatprep.subr.mxu0 0.0
    %257 = vmatpush2.msra.mxu0 0.0
    %258 = vmatprep.subr.mxu0 0.0
    %259 = vmatpush2.msra.mxu0 0.0
    %260 = vmatprep.subr.mxu0 0.0
    %261 = vmatpush2.msra.mxu0 0.0
    %262 = vmatprep.subr.mxu0 0.0
    %263 = vmatpush2.msra.mxu0 0.0
    %264 = vmatprep.subr.mxu0 0.0
    %265 = vmatpush2.msra.mxu0 0.0
    %266 = vmatprep.subr.mxu0 0.0
    %267 = vmatpush2.msra.mxu0 0.0
    %268 = vmatprep.subr.mxu0 0.0
    %269 = vmatpush2.msra.mxu0 0.0
    %270 = vmatprep.subr.mxu0 0.0
    %271 = vmatpush2.msra.mxu0 0.0
    %272 = vmatprep.subr.mxu0 0.0
    %273 = vmatpush2.msra.mxu0 0.0
    %274 = vmatprep.subr.mxu0 0.0
    %275 = vmatpush2.msra.mxu0 0.0
    %276 = vmatprep.subr.mxu0 0.0
    %277 = vmatpush2.msra.mxu0 0.0
    %278 = vmatprep.subr.mxu0 0.0
    %279 = vmatpush2.msra.mxu0 0.0
    %280 = vmatprep.subr.mxu0 0.0
    %281 = vmatpush2.msra.mxu0 0.0
    %282 = vmatprep.subr.mxu0 0.0
    %283 = vmatpush2.msra.mxu0 0.0
    %284 = vmatprep.mubr.f32.mxu0 0.0
    %285 = vmatmul.mubr.f32.gmra.mxu0 0.0
    %v286 = vpop.f32.mrf.mxu0
    %v287 = vadd.f32 0.0, %v286
    %v288 = vpop.f32.mrf.mxu0
    %v289 = vadd.f32 0.0, %v288
    %290 = vdwg.mxu0
    %v295 = vcombine.low %v216, %v218
    %v296 = vcombine.low %v287, %v289
    %v298 = vunpack.c.l.s4 1983009808
    %v299 = vunpack.c.0.s8 %v298
    %v300 = vlaneseq
    %v301 = vshrl.u32 %v300, 7
    %v302 = vsub.s32 %v299, %v301
    %v303 = vrot.slane %v295, %v302
    %v305 = vunpack.c.l.s4 1983009808
    %v306 = vunpack.c.0.s8 %v305
    %v307 = vlaneseq
    %v308 = vshrl.u32 %v307, 7
    %v309 = vsub.s32 %v306, %v308
    %v310 = vrot.slane %v296, %v309
    %v311 = vcombine.low %v303, %v310
    %v313 = vadd.f32 %v84, %v311
    %v314 = vxor.u32 %v313, 2147483648
    %v315 = vmul.f32 %v314, 1.442695
    %v316 = vpow.pop %v315
    %v317 = vadd.f32 %v316, 1.0
    %v318 = vrcp.pop %v317
    %v319 = vmul.f32 1.0, %v318
    %v321 = vrot.slane %v313, 2
    %v323 = vxor.u32 %v321, 2147483648
    %v324 = vmul.f32 %v323, 1.442695
    %v325 = vpow.pop %v324
    %v326 = vadd.f32 %v325, 1.0
    %v327 = vrcp.pop %v326
    %v328 = vmul.f32 1.0, %v327
    %v329 = vrot.slane %v313, 4
    %v331 = vtanh.pop %v329
    %v332 = vrot.slane %v313, 6
    %v334 = vxor.u32 %v332, 2147483648
    %v335 = vmul.f32 %v334, 1.442695
    %v336 = vpow.pop %v335
    %v337 = vadd.f32 %v336, 1.0
    %v338 = vrcp.pop %v337
    %v339 = vmul.f32 1.0, %v338
    %v340 = vmul.f32 %v328, 0.0
    %v341 = vmul.f32 %v319, %v331
    %v342 = vadd.f32 %v340, %v341
    %v343 = vtanh.pop %v342
    %v344 = vmul.f32 %v339, %v343
    %s345 = sadd.s32 %s54, 1
    %s346 = sld [smem:[#allocation4 + %s345]]
    %s347 = sshra.s32 %s346, 3
    %s348 = sand.u32 %s346, 7
    %s349 = sshra.s32 %s346, 3
    %s350 = sand.u32 %s346, 7
    %s351 = smul.u32 %s347, 4
    %s352 = smul.u32 %s351, 8
    %s353 = sadd.s32 %s352, %s350
    %s354 = scalar_lea.vmem [#allocation6], %s353
    %v355 = vld [vmem:[%s354] ss:$8 sm:$0xf]
    %356 = vst.msk [vmem:[#allocation2] ss:$2 sm:$0xf] %vm68, %v355
    %s357 = sadd.s32 %s71, 1
    %s358 = sld [smem:[#allocation4 + %s357]]
    %s359 = sshra.s32 %s358, 3
    %s360 = sand.u32 %s358, 7
    %s361 = sshra.s32 %s358, 3
    %s362 = sand.u32 %s358, 7
    %s363 = smul.u32 %s359, 4
    %s364 = smul.u32 %s363, 8
    %s365 = sadd.s32 %s364, %s362
    %s366 = scalar_lea.vmem [#allocation6], %s365
    %v367 = vld [vmem:[%s366] ss:$8 sm:$0xf]
    %368 = vst.msk [vmem:[%s82] ss:$2 sm:$0xf] %vm68, %v367
    %v369 = vld [vmem:[#allocation2] sm:$0xff]
    %v370 = vld [vmem:[#allocation8] sm:$0xff]
    %v371 = vld [vmem:[#allocation8 + $0x8] sm:$0xff]
    %v372 = vld [vmem:[#allocation8 + $0x10] sm:$0xff]
    %v373 = vld [vmem:[#allocation8 + $0x18] sm:$0xff]
    %v374 = vld [vmem:[#allocation8 + $0x20] sm:$0xff]
    %v375 = vld [vmem:[#allocation8 + $0x28] sm:$0xff]
    %v376 = vld [vmem:[#allocation8 + $0x30] sm:$0xff]
    %v377 = vld [vmem:[#allocation8 + $0x38] sm:$0xff]
    %v378 = vld [vmem:[#allocation8 + $0x40] sm:$0xff]
    %v379 = vld [vmem:[#allocation8 + $0x48] sm:$0xff]
    %v380 = vld [vmem:[#allocation8 + $0x50] sm:$0xff]
    %v381 = vld [vmem:[#allocation8 + $0x58] sm:$0xff]
    %v382 = vld [vmem:[#allocation8 + $0x60] sm:$0xff]
    %v383 = vld [vmem:[#allocation8 + $0x68] sm:$0xff]
    %v384 = vld [vmem:[#allocation8 + $0x70] sm:$0xff]
    %v385 = vld [vmem:[#allocation8 + $0x78] sm:$0xff]
    %v386 = vld [vmem:[#allocation8 + $0x80] sm:$0xff]
    %v387 = vld [vmem:[#allocation8 + $0x88] sm:$0xff]
    %v388 = vld [vmem:[#allocation8 + $0x90] sm:$0xff]
    %v389 = vld [vmem:[#allocation8 + $0x98] sm:$0xff]
    %v390 = vld [vmem:[#allocation8 + $0xa0] sm:$0xff]
    %v391 = vld [vmem:[#allocation8 + $0xa8] sm:$0xff]
    %v392 = vld [vmem:[#allocation8 + $0xb0] sm:$0xff]
    %v393 = vld [vmem:[#allocation8 + $0xb8] sm:$0xff]
    %v394 = vld [vmem:[#allocation8 + $0xc0] sm:$0xff]
    %v395 = vld [vmem:[#allocation8 + $0xc8] sm:$0xff]
    %v396 = vld [vmem:[#allocation8 + $0xd0] sm:$0xff]
    %v397 = vld [vmem:[#allocation8 + $0xd8] sm:$0xff]
    %v398 = vld [vmem:[#allocation8 + $0xe0] sm:$0xff]
    %v399 = vld [vmem:[#allocation8 + $0xe8] sm:$0xff]
    %v400 = vld [vmem:[#allocation8 + $0xf0] sm:$0xff]
    %v401 = vld [vmem:[#allocation8 + $0xf8] sm:$0xff]
    %v402 = vld [vmem:[#allocation8 + $0x100] sm:$0xff]
    %v403 = vld [vmem:[#allocation8 + $0x108] sm:$0xff]
    %v404 = vld [vmem:[#allocation8 + $0x110] sm:$0xff]
    %v405 = vld [vmem:[#allocation8 + $0x118] sm:$0xff]
    %v406 = vld [vmem:[#allocation8 + $0x120] sm:$0xff]
    %v407 = vld [vmem:[#allocation8 + $0x128] sm:$0xff]
    %v408 = vld [vmem:[#allocation8 + $0x130] sm:$0xff]
    %v409 = vld [vmem:[#allocation8 + $0x138] sm:$0xff]
    %v410 = vld [vmem:[#allocation8 + $0x140] sm:$0xff]
    %v411 = vld [vmem:[#allocation8 + $0x148] sm:$0xff]
    %v412 = vld [vmem:[#allocation8 + $0x150] sm:$0xff]
    %v413 = vld [vmem:[#allocation8 + $0x158] sm:$0xff]
    %v414 = vld [vmem:[#allocation8 + $0x160] sm:$0xff]
    %v415 = vld [vmem:[#allocation8 + $0x168] sm:$0xff]
    %v416 = vld [vmem:[#allocation8 + $0x170] sm:$0xff]
    %v417 = vld [vmem:[#allocation8 + $0x178] sm:$0xff]
    %v418 = vld [vmem:[#allocation8 + $0x180] sm:$0xff]
    %v419 = vld [vmem:[#allocation8 + $0x188] sm:$0xff]
    %v420 = vld [vmem:[#allocation8 + $0x190] sm:$0xff]
    %v421 = vld [vmem:[#allocation8 + $0x198] sm:$0xff]
    %v422 = vld [vmem:[#allocation8 + $0x1a0] sm:$0xff]
    %v423 = vld [vmem:[#allocation8 + $0x1a8] sm:$0xff]
    %v424 = vld [vmem:[#allocation8 + $0x1b0] sm:$0xff]
    %v425 = vld [vmem:[#allocation8 + $0x1b8] sm:$0xff]
    %v426 = vld [vmem:[#allocation8 + $0x1c0] sm:$0xff]
    %v427 = vld [vmem:[#allocation8 + $0x1c8] sm:$0xff]
    %v428 = vld [vmem:[#allocation8 + $0x1d0] sm:$0xff]
    %v429 = vld [vmem:[#allocation8 + $0x1d8] sm:$0xff]
    %v430 = vld [vmem:[#allocation8 + $0x1e0] sm:$0xff]
    %v431 = vld [vmem:[#allocation8 + $0x1e8] sm:$0xff]
    %v432 = vld [vmem:[#allocation8 + $0x1f0] sm:$0xff]
    %v433 = vld [vmem:[#allocation8 + $0x1f8] sm:$0xff]
    %434 = vmatprep.subr.mxu0 %v431
    %435 = vmatpush1.msra.mxu0 %v430
    %436 = vmatprep.subr.mxu0 %v427
    %437 = vmatpush1.msra.mxu0 %v426
    %438 = vmatprep.subr.mxu0 %v423
    %439 = vmatpush1.msra.mxu0 %v422
    %440 = vmatprep.subr.mxu0 %v419
    %441 = vmatpush1.msra.mxu0 %v418
    %442 = vmatprep.subr.mxu0 %v415
    %443 = vmatpush1.msra.mxu0 %v414
    %444 = vmatprep.subr.mxu0 %v411
    %445 = vmatpush1.msra.mxu0 %v410
    %446 = vmatprep.subr.mxu0 %v407
    %447 = vmatpush1.msra.mxu0 %v406
    %448 = vmatprep.subr.mxu0 %v403
    %449 = vmatpush1.msra.mxu0 %v402
    %450 = vmatprep.subr.mxu0 %v399
    %451 = vmatpush1.msra.mxu0 %v398
    %452 = vmatprep.subr.mxu0 %v395
    %453 = vmatpush1.msra.mxu0 %v394
    %454 = vmatprep.subr.mxu0 %v391
    %455 = vmatpush1.msra.mxu0 %v390
    %456 = vmatprep.subr.mxu0 %v387
    %457 = vmatpush1.msra.mxu0 %v386
    %458 = vmatprep.subr.mxu0 %v383
    %459 = vmatpush1.msra.mxu0 %v382
    %460 = vmatprep.subr.mxu0 %v379
    %461 = vmatpush1.msra.mxu0 %v378
    %462 = vmatprep.subr.mxu0 %v375
    %463 = vmatpush1.msra.mxu0 %v374
    %464 = vmatprep.subr.mxu0 %v371
    %465 = vmatpush1.msra.mxu0 %v370
    %466 = vmatprep.subr.mxu0 0.0
    %467 = vmatpush2.msra.mxu0 0.0
    %468 = vmatprep.subr.mxu0 0.0
    %469 = vmatpush2.msra.mxu0 0.0
    %470 = vmatprep.subr.mxu0 0.0
    %471 = vmatpush2.msra.mxu0 0.0
    %472 = vmatprep.subr.mxu0 0.0
    %473 = vmatpush2.msra.mxu0 0.0
    %474 = vmatprep.subr.mxu0 0.0
    %475 = vmatpush2.msra.mxu0 0.0
    %476 = vmatprep.subr.mxu0 0.0
    %477 = vmatpush2.msra.mxu0 0.0
    %478 = vmatprep.subr.mxu0 0.0
    %479 = vmatpush2.msra.mxu0 0.0
    %480 = vmatprep.subr.mxu0 0.0
    %481 = vmatpush2.msra.mxu0 0.0
    %482 = vmatprep.subr.mxu0 0.0
    %483 = vmatpush2.msra.mxu0 0.0
    %484 = vmatprep.subr.mxu0 0.0
    %485 = vmatpush2.msra.mxu0 0.0
    %486 = vmatprep.subr.mxu0 0.0
    %487 = vmatpush2.msra.mxu0 0.0
    %488 = vmatprep.subr.mxu0 0.0
    %489 = vmatpush2.msra.mxu0 0.0
    %490 = vmatprep.subr.mxu0 0.0
    %491 = vmatpush2.msra.mxu0 0.0
    %492 = vmatprep.subr.mxu0 0.0
    %493 = vmatpush2.msra.mxu0 0.0
    %494 = vmatprep.subr.mxu0 0.0
    %495 = vmatpush2.msra.mxu0 0.0
    %496 = vmatprep.subr.mxu0 0.0
    %497 = vmatpush2.msra.mxu0 0.0
    %498 = vmatprep.mubr.f32.mxu0 0.0
    %499 = vmatmul.mubr.f32.gmra.mxu0 %v344
    %v500 = vpop.f32.mrf.mxu0
    %v501 = vadd.f32 0.0, %v500
    %v502 = vpop.f32.mrf.mxu0
    %v503 = vadd.f32 0.0, %v502
    %504 = vdwg.mxu0
    %505 = vmatprep.subr.mxu0 %v433
    %506 = vmatpush1.msra.mxu0 %v432
    %507 = vmatprep.subr.mxu0 %v429
    %508 = vmatpush1.msra.mxu0 %v428
    %509 = vmatprep.subr.mxu0 %v425
    %510 = vmatpush1.msra.mxu0 %v424
    %511 = vmatprep.subr.mxu0 %v421
    %512 = vmatpush1.msra.mxu0 %v420
    %513 = vmatprep.subr.mxu0 %v417
    %514 = vmatpush1.msra.mxu0 %v416
    %515 = vmatprep.subr.mxu0 %v413
    %516 = vmatpush1.msra.mxu0 %v412
    %517 = vmatprep.subr.mxu0 %v409
    %518 = vmatpush1.msra.mxu0 %v408
    %519 = vmatprep.subr.mxu0 %v405
    %520 = vmatpush1.msra.mxu0 %v404
    %521 = vmatprep.subr.mxu0 %v401
    %522 = vmatpush1.msra.mxu0 %v400
    %523 = vmatprep.subr.mxu0 %v397
    %524 = vmatpush1.msra.mxu0 %v396
    %525 = vmatprep.subr.mxu0 %v393
    %526 = vmatpush1.msra.mxu0 %v392
    %527 = vmatprep.subr.mxu0 %v389
    %528 = vmatpush1.msra.mxu0 %v388
    %529 = vmatprep.subr.mxu0 %v385
    %530 = vmatpush1.msra.mxu0 %v384
    %531 = vmatprep.subr.mxu0 %v381
    %532 = vmatpush1.msra.mxu0 %v380
    %533 = vmatprep.subr.mxu0 %v377
    %534 = vmatpush1.msra.mxu0 %v376
    %535 = vmatprep.subr.mxu0 %v373
    %536 = vmatpush1.msra.mxu0 %v372
    %537 = vmatprep.subr.mxu0 0.0
    %538 = vmatpush2.msra.mxu0 0.0
    %539 = vmatprep.subr.mxu0 0.0
    %540 = vmatpush2.msra.mxu0 0.0
    %541 = vmatprep.subr.mxu0 0.0
    %542 = vmatpush2.msra.mxu0 0.0
    %543 = vmatprep.subr.mxu0 0.0
    %544 = vmatpush2.msra.mxu0 0.0
    %545 = vmatprep.subr.mxu0 0.0
    %546 = vmatpush2.msra.mxu0 0.0
    %547 = vmatprep.subr.mxu0 0.0
    %548 = vmatpush2.msra.mxu0 0.0
    %549 = vmatprep.subr.mxu0 0.0
    %550 = vmatpush2.msra.mxu0 0.0
    %551 = vmatprep.subr.mxu0 0.0
    %552 = vmatpush2.msra.mxu0 0.0
    %553 = vmatprep.subr.mxu0 0.0
    %554 = vmatpush2.msra.mxu0 0.0
    %555 = vmatprep.subr.mxu0 0.0
    %556 = vmatpush2.msra.mxu0 0.0
    %557 = vmatprep.subr.mxu0 0.0
    %558 = vmatpush2.msra.mxu0 0.0
    %559 = vmatprep.subr.mxu0 0.0
    %560 = vmatpush2.msra.mxu0 0.0
    %561 = vmatprep.subr.mxu0 0.0
    %562 = vmatpush2.msra.mxu0 0.0
    %563 = vmatprep.subr.mxu0 0.0
    %564 = vmatpush2.msra.mxu0 0.0
    %565 = vmatprep.subr.mxu0 0.0
    %566 = vmatpush2.msra.mxu0 0.0
    %567 = vmatprep.subr.mxu0 0.0
    %568 = vmatpush2.msra.mxu0 0.0
    %569 = vmatprep.mubr.f32.mxu0 0.0
    %570 = vmatmul.mubr.f32.gmra.mxu0 %v344
    %v571 = vpop.f32.mrf.mxu0
    %v572 = vadd.f32 0.0, %v571
    %v573 = vpop.f32.mrf.mxu0
    %v574 = vadd.f32 0.0, %v573
    %575 = vdwg.mxu0
    %v580 = vcombine.low %v501, %v503
    %v581 = vcombine.low %v572, %v574
    %v583 = vunpack.c.l.s4 1983009808
    %v584 = vunpack.c.0.s8 %v583
    %v585 = vlaneseq
    %v586 = vshrl.u32 %v585, 7
    %v587 = vsub.s32 %v584, %v586
    %v588 = vrot.slane %v580, %v587
    %v590 = vunpack.c.l.s4 1983009808
    %v591 = vunpack.c.0.s8 %v590
    %v592 = vlaneseq
    %v593 = vshrl.u32 %v592, 7
    %v594 = vsub.s32 %v591, %v593
    %v595 = vrot.slane %v581, %v594
    %v596 = vcombine.low %v588, %v595
    %v598 = vadd.f32 %v369, %v596
    %v599 = vxor.u32 %v598, 2147483648
    %v600 = vmul.f32 %v599, 1.442695
    %v601 = vpow.pop %v600
    %v602 = vadd.f32 %v601, 1.0
    %v603 = vrcp.pop %v602
    %v604 = vmul.f32 1.0, %v603
    %v606 = vrot.slane %v598, 2
    %v608 = vxor.u32 %v606, 2147483648
    %v609 = vmul.f32 %v608, 1.442695
    %v610 = vpow.pop %v609
    %v611 = vadd.f32 %v610, 1.0
    %v612 = vrcp.pop %v611
    %v613 = vmul.f32 1.0, %v612
    %v614 = vrot.slane %v598, 4
    %v616 = vtanh.pop %v614
    %v617 = vrot.slane %v598, 6
    %v619 = vxor.u32 %v617, 2147483648
    %v620 = vmul.f32 %v619, 1.442695
    %v621 = vpow.pop %v620
    %v622 = vadd.f32 %v621, 1.0
    %v623 = vrcp.pop %v622
    %v624 = vmul.f32 1.0, %v623
    %v625 = vmul.f32 %v613, %v342
    %v626 = vmul.f32 %v604, %v616
    %v627 = vadd.f32 %v625, %v626
    %v628 = vtanh.pop %v627
    %v629 = vmul.f32 %v624, %v628
    %s630 = sadd.s32 %s54, 2
    %s631 = sld [smem:[#allocation4 + %s630]]
    %s632 = sshra.s32 %s631, 3
    %s633 = sand.u32 %s631, 7
    %s634 = sshra.s32 %s631, 3
    %s635 = sand.u32 %s631, 7
    %s636 = smul.u32 %s632, 4
    %s637 = smul.u32 %s636, 8
    %s638 = sadd.s32 %s637, %s635
    %s639 = scalar_lea.vmem [#allocation6], %s638
    %v640 = vld [vmem:[%s639] ss:$8 sm:$0xf]
    %641 = vst.msk [vmem:[#allocation2] ss:$2 sm:$0xf] %vm68, %v640
    %s642 = sadd.s32 %s71, 2
    %s643 = sld [smem:[#allocation4 + %s642]]
    %s644 = sshra.s32 %s643, 3
    %s645 = sand.u32 %s643, 7
    %s646 = sshra.s32 %s643, 3
    %s647 = sand.u32 %s643, 7
    %s648 = smul.u32 %s644, 4
    %s649 = smul.u32 %s648, 8
    %s650 = sadd.s32 %s649, %s647
    %s651 = scalar_lea.vmem [#allocation6], %s650
    %v652 = vld [vmem:[%s651] ss:$8 sm:$0xf]
    %653 = vst.msk [vmem:[%s82] ss:$2 sm:$0xf] %vm68, %v652
    %v654 = vld [vmem:[#allocation2] sm:$0xff]
    %v655 = vld [vmem:[#allocation8] sm:$0xff]
    %v656 = vld [vmem:[#allocation8 + $0x8] sm:$0xff]
    %v657 = vld [vmem:[#allocation8 + $0x10] sm:$0xff]
    %v658 = vld [vmem:[#allocation8 + $0x18] sm:$0xff]
    %v659 = vld [vmem:[#allocation8 + $0x20] sm:$0xff]
    %v660 = vld [vmem:[#allocation8 + $0x28] sm:$0xff]
    %v661 = vld [vmem:[#allocation8 + $0x30] sm:$0xff]
    %v662 = vld [vmem:[#allocation8 + $0x38] sm:$0xff]
    %v663 = vld [vmem:[#allocation8 + $0x40] sm:$0xff]
    %v664 = vld [vmem:[#allocation8 + $0x48] sm:$0xff]
    %v665 = vld [vmem:[#allocation8 + $0x50] sm:$0xff]
    %v666 = vld [vmem:[#allocation8 + $0x58] sm:$0xff]
    %v667 = vld [vmem:[#allocation8 + $0x60] sm:$0xff]
    %v668 = vld [vmem:[#allocation8 + $0x68] sm:$0xff]
    %v669 = vld [vmem:[#allocation8 + $0x70] sm:$0xff]
    %v670 = vld [vmem:[#allocation8 + $0x78] sm:$0xff]
    %v671 = vld [vmem:[#allocation8 + $0x80] sm:$0xff]
    %v672 = vld [vmem:[#allocation8 + $0x88] sm:$0xff]
    %v673 = vld [vmem:[#allocation8 + $0x90] sm:$0xff]
    %v674 = vld [vmem:[#allocation8 + $0x98] sm:$0xff]
    %v675 = vld [vmem:[#allocation8 + $0xa0] sm:$0xff]
    %v676 = vld [vmem:[#allocation8 + $0xa8] sm:$0xff]
    %v677 = vld [vmem:[#allocation8 + $0xb0] sm:$0xff]
    %v678 = vld [vmem:[#allocation8 + $0xb8] sm:$0xff]
    %v679 = vld [vmem:[#allocation8 + $0xc0] sm:$0xff]
    %v680 = vld [vmem:[#allocation8 + $0xc8] sm:$0xff]
    %v681 = vld [vmem:[#allocation8 + $0xd0] sm:$0xff]
    %v682 = vld [vmem:[#allocation8 + $0xd8] sm:$0xff]
    %v683 = vld [vmem:[#allocation8 + $0xe0] sm:$0xff]
    %v684 = vld [vmem:[#allocation8 + $0xe8] sm:$0xff]
    %v685 = vld [vmem:[#allocation8 + $0xf0] sm:$0xff]
    %v686 = vld [vmem:[#allocation8 + $0xf8] sm:$0xff]
    %v687 = vld [vmem:[#allocation8 + $0x100] sm:$0xff]
    %v688 = vld [vmem:[#allocation8 + $0x108] sm:$0xff]
    %v689 = vld [vmem:[#allocation8 + $0x110] sm:$0xff]
    %v690 = vld [vmem:[#allocation8 + $0x118] sm:$0xff]
    %v691 = vld [vmem:[#allocation8 + $0x120] sm:$0xff]
    %v692 = vld [vmem:[#allocation8 + $0x128] sm:$0xff]
    %v693 = vld [vmem:[#allocation8 + $0x130] sm:$0xff]
    %v694 = vld [vmem:[#allocation8 + $0x138] sm:$0xff]
    %v695 = vld [vmem:[#allocation8 + $0x140] sm:$0xff]
    %v696 = vld [vmem:[#allocation8 + $0x148] sm:$0xff]
    %v697 = vld [vmem:[#allocation8 + $0x150] sm:$0xff]
    %v698 = vld [vmem:[#allocation8 + $0x158] sm:$0xff]
    %v699 = vld [vmem:[#allocation8 + $0x160] sm:$0xff]
    %v700 = vld [vmem:[#allocation8 + $0x168] sm:$0xff]
    %v701 = vld [vmem:[#allocation8 + $0x170] sm:$0xff]
    %v702 = vld [vmem:[#allocation8 + $0x178] sm:$0xff]
    %v703 = vld [vmem:[#allocation8 + $0x180] sm:$0xff]
    %v704 = vld [vmem:[#allocation8 + $0x188] sm:$0xff]
    %v705 = vld [vmem:[#allocation8 + $0x190] sm:$0xff]
    %v706 = vld [vmem:[#allocation8 + $0x198] sm:$0xff]
    %v707 = vld [vmem:[#allocation8 + $0x1a0] sm:$0xff]
    %v708 = vld [vmem:[#allocation8 + $0x1a8] sm:$0xff]
    %v709 = vld [vmem:[#allocation8 + $0x1b0] sm:$0xff]
    %v710 = vld [vmem:[#allocation8 + $0x1b8] sm:$0xff]
    %v711 = vld [vmem:[#allocation8 + $0x1c0] sm:$0xff]
    %v712 = vld [vmem:[#allocation8 + $0x1c8] sm:$0xff]
    %v713 = vld [vmem:[#allocation8 + $0x1d0] sm:$0xff]
    %v714 = vld [vmem:[#allocation8 + $0x1d8] sm:$0xff]
    %v715 = vld [vmem:[#allocation8 + $0x1e0] sm:$0xff]
    %v716 = vld [vmem:[#allocation8 + $0x1e8] sm:$0xff]
    %v717 = vld [vmem:[#allocation8 + $0x1f0] sm:$0xff]
    %v718 = vld [vmem:[#allocation8 + $0x1f8] sm:$0xff]
    %719 = vmatprep.subr.mxu0 %v716
    %720 = vmatpush1.msra.mxu0 %v715
    %721 = vmatprep.subr.mxu0 %v712
    %722 = vmatpush1.msra.mxu0 %v711
    %723 = vmatprep.subr.mxu0 %v708
    %724 = vmatpush1.msra.mxu0 %v707
    %725 = vmatprep.subr.mxu0 %v704
    %726 = vmatpush1.msra.mxu0 %v703
    %727 = vmatprep.subr.mxu0 %v700
    %728 = vmatpush1.msra.mxu0 %v699
    %729 = vmatprep.subr.mxu0 %v696
    %730 = vmatpush1.msra.mxu0 %v695
    %731 = vmatprep.subr.mxu0 %v692
    %732 = vmatpush1.msra.mxu0 %v691
    %733 = vmatprep.subr.mxu0 %v688
    %734 = vmatpush1.msra.mxu0 %v687
    %735 = vmatprep.subr.mxu0 %v684
    %736 = vmatpush1.msra.mxu0 %v683
    %737 = vmatprep.subr.mxu0 %v680
    %738 = vmatpush1.msra.mxu0 %v679
    %739 = vmatprep.subr.mxu0 %v676
    %740 = vmatpush1.msra.mxu0 %v675
    %741 = vmatprep.subr.mxu0 %v672
    %742 = vmatpush1.msra.mxu0 %v671
    %743 = vmatprep.subr.mxu0 %v668
    %744 = vmatpush1.msra.mxu0 %v667
    %745 = vmatprep.subr.mxu0 %v664
    %746 = vmatpush1.msra.mxu0 %v663
    %747 = vmatprep.subr.mxu0 %v660
    %748 = vmatpush1.msra.mxu0 %v659
    %749 = vmatprep.subr.mxu0 %v656
    %750 = vmatpush1.msra.mxu0 %v655
    %751 = vmatprep.subr.mxu0 0.0
    %752 = vmatpush2.msra.mxu0 0.0
    %753 = vmatprep.subr.mxu0 0.0
    %754 = vmatpush2.msra.mxu0 0.0
    %755 = vmatprep.subr.mxu0 0.0
    %756 = vmatpush2.msra.mxu0 0.0
    %757 = vmatprep.subr.mxu0 0.0
    %758 = vmatpush2.msra.mxu0 0.0
    %759 = vmatprep.subr.mxu0 0.0
    %760 = vmatpush2.msra.mxu0 0.0
    %761 = vmatprep.subr.mxu0 0.0
    %762 = vmatpush2.msra.mxu0 0.0
    %763 = vmatprep.subr.mxu0 0.0
    %764 = vmatpush2.msra.mxu0 0.0
    %765 = vmatprep.subr.mxu0 0.0
    %766 = vmatpush2.msra.mxu0 0.0
    %767 = vmatprep.subr.mxu0 0.0
    %768 = vmatpush2.msra.mxu0 0.0
    %769 = vmatprep.subr.mxu0 0.0
    %770 = vmatpush2.msra.mxu0 0.0
    %771 = vmatprep.subr.mxu0 0.0
    %772 = vmatpush2.msra.mxu0 0.0
    %773 = vmatprep.subr.mxu0 0.0
    %774 = vmatpush2.msra.mxu0 0.0
    %775 = vmatprep.subr.mxu0 0.0
    %776 = vmatpush2.msra.mxu0 0.0
    %777 = vmatprep.subr.mxu0 0.0
    %778 = vmatpush2.msra.mxu0 0.0
    %779 = vmatprep.subr.mxu0 0.0
    %780 = vmatpush2.msra.mxu0 0.0
    %781 = vmatprep.subr.mxu0 0.0
    %782 = vmatpush2.msra.mxu0 0.0
    %783 = vmatprep.mubr.f32.mxu0 0.0
    %784 = vmatmul.mubr.f32.gmra.mxu0 %v629
    %v785 = vpop.f32.mrf.mxu0
    %v786 = vadd.f32 0.0, %v785
    %v787 = vpop.f32.mrf.mxu0
    %v788 = vadd.f32 0.0, %v787
    %789 = vdwg.mxu0
    %790 = vmatprep.subr.mxu0 %v718
    %791 = vmatpush1.msra.mxu0 %v717
    %792 = vmatprep.subr.mxu0 %v714
    %793 = vmatpush1.msra.mxu0 %v713
    %794 = vmatprep.subr.mxu0 %v710
    %795 = vmatpush1.msra.mxu0 %v709
    %796 = vmatprep.subr.mxu0 %v706
    %797 = vmatpush1.msra.mxu0 %v705
    %798 = vmatprep.subr.mxu0 %v702
    %799 = vmatpush1.msra.mxu0 %v701
    %800 = vmatprep.subr.mxu0 %v698
    %801 = vmatpush1.msra.mxu0 %v697
    %802 = vmatprep.subr.mxu0 %v694
    %803 = vmatpush1.msra.mxu0 %v693
    %804 = vmatprep.subr.mxu0 %v690
    %805 = vmatpush1.msra.mxu0 %v689
    %806 = vmatprep.subr.mxu0 %v686
    %807 = vmatpush1.msra.mxu0 %v685
    %808 = vmatprep.subr.mxu0 %v682
    %809 = vmatpush1.msra.mxu0 %v681
    %810 = vmatprep.subr.mxu0 %v678
    %811 = vmatpush1.msra.mxu0 %v677
    %812 = vmatprep.subr.mxu0 %v674
    %813 = vmatpush1.msra.mxu0 %v673
    %814 = vmatprep.subr.mxu0 %v670
    %815 = vmatpush1.msra.mxu0 %v669
    %816 = vmatprep.subr.mxu0 %v666
    %817 = vmatpush1.msra.mxu0 %v665
    %818 = vmatprep.subr.mxu0 %v662
    %819 = vmatpush1.msra.mxu0 %v661
    %820 = vmatprep.subr.mxu0 %v658
    %821 = vmatpush1.msra.mxu0 %v657
    %822 = vmatprep.subr.mxu0 0.0
    %823 = vmatpush2.msra.mxu0 0.0
    %824 = vmatprep.subr.mxu0 0.0
    %825 = vmatpush2.msra.mxu0 0.0
    %826 = vmatprep.subr.mxu0 0.0
    %827 = vmatpush2.msra.mxu0 0.0
    %828 = vmatprep.subr.mxu0 0.0
    %829 = vmatpush2.msra.mxu0 0.0
    %830 = vmatprep.subr.mxu0 0.0
    %831 = vmatpush2.msra.mxu0 0.0
    %832 = vmatprep.subr.mxu0 0.0
    %833 = vmatpush2.msra.mxu0 0.0
    %834 = vmatprep.subr.mxu0 0.0
    %835 = vmatpush2.msra.mxu0 0.0
    %836 = vmatprep.subr.mxu0 0.0
    %837 = vmatpush2.msra.mxu0 0.0
    %838 = vmatprep.subr.mxu0 0.0
    %839 = vmatpush2.msra.mxu0 0.0
    %840 = vmatprep.subr.mxu0 0.0
    %841 = vmatpush2.msra.mxu0 0.0
    %842 = vmatprep.subr.mxu0 0.0
    %843 = vmatpush2.msra.mxu0 0.0
    %844 = vmatprep.subr.mxu0 0.0
    %845 = vmatpush2.msra.mxu0 0.0
    %846 = vmatprep.subr.mxu0 0.0
    %847 = vmatpush2.msra.mxu0 0.0
    %848 = vmatprep.subr.mxu0 0.0
    %849 = vmatpush2.msra.mxu0 0.0
    %850 = vmatprep.subr.mxu0 0.0
    %851 = vmatpush2.msra.mxu0 0.0
    %852 = vmatprep.subr.mxu0 0.0
    %853 = vmatpush2.msra.mxu0 0.0
    %854 = vmatprep.mubr.f32.mxu0 0.0
    %855 = vmatmul.mubr.f32.gmra.mxu0 %v629
    %v856 = vpop.f32.mrf.mxu0
    %v857 = vadd.f32 0.0, %v856
    %v858 = vpop.f32.mrf.mxu0
    %v859 = vadd.f32 0.0, %v858
    %860 = vdwg.mxu0
    %v865 = vcombine.low %v786, %v788
    %v866 = vcombine.low %v857, %v859
    %v868 = vunpack.c.l.s4 1983009808
    %v869 = vunpack.c.0.s8 %v868
    %v870 = vlaneseq
    %v871 = vshrl.u32 %v870, 7
    %v872 = vsub.s32 %v869, %v871
    %v873 = vrot.slane %v865, %v872
    %v875 = vunpack.c.l.s4 1983009808
    %v876 = vunpack.c.0.s8 %v875
    %v877 = vlaneseq
    %v878 = vshrl.u32 %v877, 7
    %v879 = vsub.s32 %v876, %v878
    %v880 = vrot.slane %v866, %v879
    %v881 = vcombine.low %v873, %v880
    %v883 = vadd.f32 %v654, %v881
    %v884 = vxor.u32 %v883, 2147483648
    %v885 = vmul.f32 %v884, 1.442695
    %v886 = vpow.pop %v885
    %v887 = vadd.f32 %v886, 1.0
    %v888 = vrcp.pop %v887
    %v889 = vmul.f32 1.0, %v888
    %v891 = vrot.slane %v883, 2
    %v893 = vxor.u32 %v891, 2147483648
    %v894 = vmul.f32 %v893, 1.442695
    %v895 = vpow.pop %v894
    %v896 = vadd.f32 %v895, 1.0
    %v897 = vrcp.pop %v896
    %v898 = vmul.f32 1.0, %v897
    %v899 = vrot.slane %v883, 4
    %v901 = vtanh.pop %v899
    %v902 = vrot.slane %v883, 6
    %v904 = vxor.u32 %v902, 2147483648
    %v905 = vmul.f32 %v904, 1.442695
    %v906 = vpow.pop %v905
    %v907 = vadd.f32 %v906, 1.0
    %v908 = vrcp.pop %v907
    %v909 = vmul.f32 1.0, %v908
    %v910 = vmul.f32 %v898, %v627
    %v911 = vmul.f32 %v889, %v901
    %v912 = vadd.f32 %v910, %v911
    %v913 = vtanh.pop %v912
    %v914 = vmul.f32 %v909, %v913
    %s915 = sadd.s32 %s54, 3
    %s916 = sld [smem:[#allocation4 + %s915]]
    %s917 = sshra.s32 %s916, 3
    %s918 = sand.u32 %s916, 7
    %s919 = sshra.s32 %s916, 3
    %s920 = sand.u32 %s916, 7
    %s921 = smul.u32 %s917, 4
    %s922 = smul.u32 %s921, 8
    %s923 = sadd.s32 %s922, %s920
    %s924 = scalar_lea.vmem [#allocation6], %s923
    %v925 = vld [vmem:[%s924] ss:$8 sm:$0xf]
    %926 = vst.msk [vmem:[#allocation2] ss:$2 sm:$0xf] %vm68, %v925
    %s927 = sadd.s32 %s71, 3
    %s928 = sld [smem:[#allocation4 + %s927]]
    %s929 = sshra.s32 %s928, 3
    %s930 = sand.u32 %s928, 7
    %s931 = sshra.s32 %s928, 3
    %s932 = sand.u32 %s928, 7
    %s933 = smul.u32 %s929, 4
    %s934 = smul.u32 %s933, 8
    %s935 = sadd.s32 %s934, %s932
    %s936 = scalar_lea.vmem [#allocation6], %s935
    %v937 = vld [vmem:[%s936] ss:$8 sm:$0xf]
    %938 = vst.msk [vmem:[%s82] ss:$2 sm:$0xf] %vm68, %v937
    %v939 = vld [vmem:[#allocation2] sm:$0xff]
    %v940 = vld [vmem:[#allocation8] sm:$0xff]
    %v941 = vld [vmem:[#allocation8 + $0x8] sm:$0xff]
    %v942 = vld [vmem:[#allocation8 + $0x10] sm:$0xff]
    %v943 = vld [vmem:[#allocation8 + $0x18] sm:$0xff]
    %v944 = vld [vmem:[#allocation8 + $0x20] sm:$0xff]
    %v945 = vld [vmem:[#allocation8 + $0x28] sm:$0xff]
    %v946 = vld [vmem:[#allocation8 + $0x30] sm:$0xff]
    %v947 = vld [vmem:[#allocation8 + $0x38] sm:$0xff]
    %v948 = vld [vmem:[#allocation8 + $0x40] sm:$0xff]
    %v949 = vld [vmem:[#allocation8 + $0x48] sm:$0xff]
    %v950 = vld [vmem:[#allocation8 + $0x50] sm:$0xff]
    %v951 = vld [vmem:[#allocation8 + $0x58] sm:$0xff]
    %v952 = vld [vmem:[#allocation8 + $0x60] sm:$0xff]
    %v953 = vld [vmem:[#allocation8 + $0x68] sm:$0xff]
    %v954 = vld [vmem:[#allocation8 + $0x70] sm:$0xff]
    %v955 = vld [vmem:[#allocation8 + $0x78] sm:$0xff]
    %v956 = vld [vmem:[#allocation8 + $0x80] sm:$0xff]
    %v957 = vld [vmem:[#allocation8 + $0x88] sm:$0xff]
    %v958 = vld [vmem:[#allocation8 + $0x90] sm:$0xff]
    %v959 = vld [vmem:[#allocation8 + $0x98] sm:$0xff]
    %v960 = vld [vmem:[#allocation8 + $0xa0] sm:$0xff]
    %v961 = vld [vmem:[#allocation8 + $0xa8] sm:$0xff]
    %v962 = vld [vmem:[#allocation8 + $0xb0] sm:$0xff]
    %v963 = vld [vmem:[#allocation8 + $0xb8] sm:$0xff]
    %v964 = vld [vmem:[#allocation8 + $0xc0] sm:$0xff]
    %v965 = vld [vmem:[#allocation8 + $0xc8] sm:$0xff]
    %v966 = vld [vmem:[#allocation8 + $0xd0] sm:$0xff]
    %v967 = vld [vmem:[#allocation8 + $0xd8] sm:$0xff]
    %v968 = vld [vmem:[#allocation8 + $0xe0] sm:$0xff]
    %v969 = vld [vmem:[#allocation8 + $0xe8] sm:$0xff]
    %v970 = vld [vmem:[#allocation8 + $0xf0] sm:$0xff]
    %v971 = vld [vmem:[#allocation8 + $0xf8] sm:$0xff]
    %v972 = vld [vmem:[#allocation8 + $0x100] sm:$0xff]
    %v973 = vld [vmem:[#allocation8 + $0x108] sm:$0xff]
    %v974 = vld [vmem:[#allocation8 + $0x110] sm:$0xff]
    %v975 = vld [vmem:[#allocation8 + $0x118] sm:$0xff]
    %v976 = vld [vmem:[#allocation8 + $0x120] sm:$0xff]
    %v977 = vld [vmem:[#allocation8 + $0x128] sm:$0xff]
    %v978 = vld [vmem:[#allocation8 + $0x130] sm:$0xff]
    %v979 = vld [vmem:[#allocation8 + $0x138] sm:$0xff]
    %v980 = vld [vmem:[#allocation8 + $0x140] sm:$0xff]
    %v981 = vld [vmem:[#allocation8 + $0x148] sm:$0xff]
    %v982 = vld [vmem:[#allocation8 + $0x150] sm:$0xff]
    %v983 = vld [vmem:[#allocation8 + $0x158] sm:$0xff]
    %v984 = vld [vmem:[#allocation8 + $0x160] sm:$0xff]
    %v985 = vld [vmem:[#allocation8 + $0x168] sm:$0xff]
    %v986 = vld [vmem:[#allocation8 + $0x170] sm:$0xff]
    %v987 = vld [vmem:[#allocation8 + $0x178] sm:$0xff]
    %v988 = vld [vmem:[#allocation8 + $0x180] sm:$0xff]
    %v989 = vld [vmem:[#allocation8 + $0x188] sm:$0xff]
    %v990 = vld [vmem:[#allocation8 + $0x190] sm:$0xff]
    %v991 = vld [vmem:[#allocation8 + $0x198] sm:$0xff]
    %v992 = vld [vmem:[#allocation8 + $0x1a0] sm:$0xff]
    %v993 = vld [vmem:[#allocation8 + $0x1a8] sm:$0xff]
    %v994 = vld [vmem:[#allocation8 + $0x1b0] sm:$0xff]
    %v995 = vld [vmem:[#allocation8 + $0x1b8] sm:$0xff]
    %v996 = vld [vmem:[#allocation8 + $0x1c0] sm:$0xff]
    %v997 = vld [vmem:[#allocation8 + $0x1c8] sm:$0xff]
    %v998 = vld [vmem:[#allocation8 + $0x1d0] sm:$0xff]
    %v999 = vld [vmem:[#allocation8 + $0x1d8] sm:$0xff]
    %v1000 = vld [vmem:[#allocation8 + $0x1e0] sm:$0xff]
    %v1001 = vld [vmem:[#allocation8 + $0x1e8] sm:$0xff]
    %v1002 = vld [vmem:[#allocation8 + $0x1f0] sm:$0xff]
    %v1003 = vld [vmem:[#allocation8 + $0x1f8] sm:$0xff]
    %1004 = vmatprep.subr.mxu0 %v1001
    %1005 = vmatpush1.msra.mxu0 %v1000
    %1006 = vmatprep.subr.mxu0 %v997
    %1007 = vmatpush1.msra.mxu0 %v996
    %1008 = vmatprep.subr.mxu0 %v993
    %1009 = vmatpush1.msra.mxu0 %v992
    %1010 = vmatprep.subr.mxu0 %v989
    %1011 = vmatpush1.msra.mxu0 %v988
    %1012 = vmatprep.subr.mxu0 %v985
    %1013 = vmatpush1.msra.mxu0 %v984
    %1014 = vmatprep.subr.mxu0 %v981
    %1015 = vmatpush1.msra.mxu0 %v980
    %1016 = vmatprep.subr.mxu0 %v977
    %1017 = vmatpush1.msra.mxu0 %v976
    %1018 = vmatprep.subr.mxu0 %v973
    %1019 = vmatpush1.msra.mxu0 %v972
    %1020 = vmatprep.subr.mxu0 %v969
    %1021 = vmatpush1.msra.mxu0 %v968
    %1022 = vmatprep.subr.mxu0 %v965
    %1023 = vmatpush1.msra.mxu0 %v964
    %1024 = vmatprep.subr.mxu0 %v961
    %1025 = vmatpush1.msra.mxu0 %v960
    %1026 = vmatprep.subr.mxu0 %v957
    %1027 = vmatpush1.msra.mxu0 %v956
    %1028 = vmatprep.subr.mxu0 %v953
    %1029 = vmatpush1.msra.mxu0 %v952
    %1030 = vmatprep.subr.mxu0 %v949
    %1031 = vmatpush1.msra.mxu0 %v948
    %1032 = vmatprep.subr.mxu0 %v945
    %1033 = vmatpush1.msra.mxu0 %v944
    %1034 = vmatprep.subr.mxu0 %v941
    %1035 = vmatpush1.msra.mxu0 %v940
    %1036 = vmatprep.subr.mxu0 0.0
    %1037 = vmatpush2.msra.mxu0 0.0
    %1038 = vmatprep.subr.mxu0 0.0
    %1039 = vmatpush2.msra.mxu0 0.0
    %1040 = vmatprep.subr.mxu0 0.0
    %1041 = vmatpush2.msra.mxu0 0.0
    %1042 = vmatprep.subr.mxu0 0.0
    %1043 = vmatpush2.msra.mxu0 0.0
    %1044 = vmatprep.subr.mxu0 0.0
    %1045 = vmatpush2.msra.mxu0 0.0
    %1046 = vmatprep.subr.mxu0 0.0
    %1047 = vmatpush2.msra.mxu0 0.0
    %1048 = vmatprep.subr.mxu0 0.0
    %1049 = vmatpush2.msra.mxu0 0.0
    %1050 = vmatprep.subr.mxu0 0.0
    %1051 = vmatpush2.msra.mxu0 0.0
    %1052 = vmatprep.subr.mxu0 0.0
    %1053 = vmatpush2.msra.mxu0 0.0
    %1054 = vmatprep.subr.mxu0 0.0
    %1055 = vmatpush2.msra.mxu0 0.0
    %1056 = vmatprep.subr.mxu0 0.0
    %1057 = vmatpush2.msra.mxu0 0.0
    %1058 = vmatprep.subr.mxu0 0.0
    %1059 = vmatpush2.msra.mxu0 0.0
    %1060 = vmatprep.subr.mxu0 0.0
    %1061 = vmatpush2.msra.mxu0 0.0
    %1062 = vmatprep.subr.mxu0 0.0
    %1063 = vmatpush2.msra.mxu0 0.0
    %1064 = vmatprep.subr.mxu0 0.0
    %1065 = vmatpush2.msra.mxu0 0.0
    %1066 = vmatprep.subr.mxu0 0.0
    %1067 = vmatpush2.msra.mxu0 0.0
    %1068 = vmatprep.mubr.f32.mxu0 0.0
    %1069 = vmatmul.mubr.f32.gmra.mxu0 %v914
    %v1070 = vpop.f32.mrf.mxu0
    %v1071 = vadd.f32 0.0, %v1070
    %v1072 = vpop.f32.mrf.mxu0
    %v1073 = vadd.f32 0.0, %v1072
    %1074 = vdwg.mxu0
    %1075 = vmatprep.subr.mxu0 %v1003
    %1076 = vmatpush1.msra.mxu0 %v1002
    %1077 = vmatprep.subr.mxu0 %v999
    %1078 = vmatpush1.msra.mxu0 %v998
    %1079 = vmatprep.subr.mxu0 %v995
    %1080 = vmatpush1.msra.mxu0 %v994
    %1081 = vmatprep.subr.mxu0 %v991
    %1082 = vmatpush1.msra.mxu0 %v990
    %1083 = vmatprep.subr.mxu0 %v987
    %1084 = vmatpush1.msra.mxu0 %v986
    %1085 = vmatprep.subr.mxu0 %v983
    %1086 = vmatpush1.msra.mxu0 %v982
    %1087 = vmatprep.subr.mxu0 %v979
    %1088 = vmatpush1.msra.mxu0 %v978
    %1089 = vmatprep.subr.mxu0 %v975
    %1090 = vmatpush1.msra.mxu0 %v974
    %1091 = vmatprep.subr.mxu0 %v971
    %1092 = vmatpush1.msra.mxu0 %v970
    %1093 = vmatprep.subr.mxu0 %v967
    %1094 = vmatpush1.msra.mxu0 %v966
    %1095 = vmatprep.subr.mxu0 %v963
    %1096 = vmatpush1.msra.mxu0 %v962
    %1097 = vmatprep.subr.mxu0 %v959
    %1098 = vmatpush1.msra.mxu0 %v958
    %1099 = vmatprep.subr.mxu0 %v955
    %1100 = vmatpush1.msra.mxu0 %v954
    %1101 = vmatprep.subr.mxu0 %v951
    %1102 = vmatpush1.msra.mxu0 %v950
    %1103 = vmatprep.subr.mxu0 %v947
    %1104 = vmatpush1.msra.mxu0 %v946
    %1105 = vmatprep.subr.mxu0 %v943
    %1106 = vmatpush1.msra.mxu0 %v942
    %1107 = vmatprep.subr.mxu0 0.0
    %1108 = vmatpush2.msra.mxu0 0.0
    %1109 = vmatprep.subr.mxu0 0.0
    %1110 = vmatpush2.msra.mxu0 0.0
    %1111 = vmatprep.subr.mxu0 0.0
    %1112 = vmatpush2.msra.mxu0 0.0
    %1113 = vmatprep.subr.mxu0 0.0
    %1114 = vmatpush2.msra.mxu0 0.0
    %1115 = vmatprep.subr.mxu0 0.0
    %1116 = vmatpush2.msra.mxu0 0.0
    %1117 = vmatprep.subr.mxu0 0.0
    %1118 = vmatpush2.msra.mxu0 0.0
    %1119 = vmatprep.subr.mxu0 0.0
    %1120 = vmatpush2.msra.mxu0 0.0
    %1121 = vmatprep.subr.mxu0 0.0
    %1122 = vmatpush2.msra.mxu0 0.0
    %1123 = vmatprep.subr.mxu0 0.0
    %1124 = vmatpush2.msra.mxu0 0.0
    %1125 = vmatprep.subr.mxu0 0.0
    %1126 = vmatpush2.msra.mxu0 0.0
    %1127 = vmatprep.subr.mxu0 0.0
    %1128 = vmatpush2.msra.mxu0 0.0
    %1129 = vmatprep.subr.mxu0 0.0
    %1130 = vmatpush2.msra.mxu0 0.0
    %1131 = vmatprep.subr.mxu0 0.0
    %1132 = vmatpush2.msra.mxu0 0.0
    %1133 = vmatprep.subr.mxu0 0.0
    %1134 = vmatpush2.msra.mxu0 0.0
    %1135 = vmatprep.subr.mxu0 0.0
    %1136 = vmatpush2.msra.mxu0 0.0
    %1137 = vmatprep.subr.mxu0 0.0
    %1138 = vmatpush2.msra.mxu0 0.0
    %1139 = vmatprep.mubr.f32.mxu0 0.0
    %1140 = vmatmul.mubr.f32.gmra.mxu0 %v914
    %v1141 = vpop.f32.mrf.mxu0
    %v1142 = vadd.f32 0.0, %v1141
    %v1143 = vpop.f32.mrf.mxu0
    %v1144 = vadd.f32 0.0, %v1143
    %1145 = vdwg.mxu0
    %v1150 = vcombine.low %v1071, %v1073
    %v1151 = vcombine.low %v1142, %v1144
    %v1153 = vunpack.c.l.s4 1983009808
    %v1154 = vunpack.c.0.s8 %v1153
    %v1155 = vlaneseq
    %v1156 = vshrl.u32 %v1155, 7
    %v1157 = vsub.s32 %v1154, %v1156
    %v1158 = vrot.slane %v1150, %v1157
    %v1160 = vunpack.c.l.s4 1983009808
    %v1161 = vunpack.c.0.s8 %v1160
    %v1162 = vlaneseq
    %v1163 = vshrl.u32 %v1162, 7
    %v1164 = vsub.s32 %v1161, %v1163
    %v1165 = vrot.slane %v1151, %v1164
    %v1166 = vcombine.low %v1158, %v1165
    %v1168 = vadd.f32 %v939, %v1166
    %v1169 = vxor.u32 %v1168, 2147483648
    %v1170 = vmul.f32 %v1169, 1.442695
    %v1171 = vpow.pop %v1170
    %v1172 = vadd.f32 %v1171, 1.0
    %v1173 = vrcp.pop %v1172
    %v1174 = vmul.f32 1.0, %v1173
    %v1176 = vrot.slane %v1168, 2
    %v1178 = vxor.u32 %v1176, 2147483648
    %v1179 = vmul.f32 %v1178, 1.442695
    %v1180 = vpow.pop %v1179
    %v1181 = vadd.f32 %v1180, 1.0
    %v1182 = vrcp.pop %v1181
    %v1183 = vmul.f32 1.0, %v1182
    %v1184 = vrot.slane %v1168, 4
    %v1186 = vtanh.pop %v1184
    %v1187 = vrot.slane %v1168, 6
    %v1189 = vxor.u32 %v1187, 2147483648
    %v1190 = vmul.f32 %v1189, 1.442695
    %v1191 = vpow.pop %v1190
    %v1192 = vadd.f32 %v1191, 1.0
    %v1193 = vrcp.pop %v1192
    %v1194 = vmul.f32 1.0, %v1193
    %v1195 = vmul.f32 %v1183, %v912
    %v1196 = vmul.f32 %v1174, %v1186
    %v1197 = vadd.f32 %v1195, %v1196
    %v1198 = vtanh.pop %v1197
    %v1199 = vmul.f32 %v1194, %v1198
    %s1200 = sadd.s32 %s54, 4
    %s1201 = sld [smem:[#allocation4 + %s1200]]
    %s1202 = sshra.s32 %s1201, 3
    %s1203 = sand.u32 %s1201, 7
    %s1204 = sshra.s32 %s1201, 3
    %s1205 = sand.u32 %s1201, 7
    %s1206 = smul.u32 %s1202, 4
    %s1207 = smul.u32 %s1206, 8
    %s1208 = sadd.s32 %s1207, %s1205
    %s1209 = scalar_lea.vmem [#allocation6], %s1208
    %v1210 = vld [vmem:[%s1209] ss:$8 sm:$0xf]
    %1211 = vst.msk [vmem:[#allocation2] ss:$2 sm:$0xf] %vm68, %v1210
    %s1212 = sadd.s32 %s71, 4
    %s1213 = sld [smem:[#allocation4 + %s1212]]
    %s1214 = sshra.s32 %s1213, 3
    %s1215 = sand.u32 %s1213, 7
    %s1216 = sshra.s32 %s1213, 3
    %s1217 = sand.u32 %s1213, 7
    %s1218 = smul.u32 %s1214, 4
    %s1219 = smul.u32 %s1218, 8
    %s1220 = sadd.s32 %s1219, %s1217
    %s1221 = scalar_lea.vmem [#allocation6], %s1220
    %v1222 = vld [vmem:[%s1221] ss:$8 sm:$0xf]
    %1223 = vst.msk [vmem:[%s82] ss:$2 sm:$0xf] %vm68, %v1222
    %v1224 = vld [vmem:[#allocation2] sm:$0xff]
    %v1225 = vld [vmem:[#allocation8] sm:$0xff]
    %v1226 = vld [vmem:[#allocation8 + $0x8] sm:$0xff]
    %v1227 = vld [vmem:[#allocation8 + $0x10] sm:$0xff]
    %v1228 = vld [vmem:[#allocation8 + $0x18] sm:$0xff]
    %v1229 = vld [vmem:[#allocation8 + $0x20] sm:$0xff]
    %v1230 = vld [vmem:[#allocation8 + $0x28] sm:$0xff]
    %v1231 = vld [vmem:[#allocation8 + $0x30] sm:$0xff]
    %v1232 = vld [vmem:[#allocation8 + $0x38] sm:$0xff]
    %v1233 = vld [vmem:[#allocation8 + $0x40] sm:$0xff]
    %v1234 = vld [vmem:[#allocation8 + $0x48] sm:$0xff]
    %v1235 = vld [vmem:[#allocation8 + $0x50] sm:$0xff]
    %v1236 = vld [vmem:[#allocation8 + $0x58] sm:$0xff]
    %v1237 = vld [vmem:[#allocation8 + $0x60] sm:$0xff]
    %v1238 = vld [vmem:[#allocation8 + $0x68] sm:$0xff]
    %v1239 = vld [vmem:[#allocation8 + $0x70] sm:$0xff]
    %v1240 = vld [vmem:[#allocation8 + $0x78] sm:$0xff]
    %v1241 = vld [vmem:[#allocation8 + $0x80] sm:$0xff]
    %v1242 = vld [vmem:[#allocation8 + $0x88] sm:$0xff]
    %v1243 = vld [vmem:[#allocation8 + $0x90] sm:$0xff]
    %v1244 = vld [vmem:[#allocation8 + $0x98] sm:$0xff]
    %v1245 = vld [vmem:[#allocation8 + $0xa0] sm:$0xff]
    %v1246 = vld [vmem:[#allocation8 + $0xa8] sm:$0xff]
    %v1247 = vld [vmem:[#allocation8 + $0xb0] sm:$0xff]
    %v1248 = vld [vmem:[#allocation8 + $0xb8] sm:$0xff]
    %v1249 = vld [vmem:[#allocation8 + $0xc0] sm:$0xff]
    %v1250 = vld [vmem:[#allocation8 + $0xc8] sm:$0xff]
    %v1251 = vld [vmem:[#allocation8 + $0xd0] sm:$0xff]
    %v1252 = vld [vmem:[#allocation8 + $0xd8] sm:$0xff]
    %v1253 = vld [vmem:[#allocation8 + $0xe0] sm:$0xff]
    %v1254 = vld [vmem:[#allocation8 + $0xe8] sm:$0xff]
    %v1255 = vld [vmem:[#allocation8 + $0xf0] sm:$0xff]
    %v1256 = vld [vmem:[#allocation8 + $0xf8] sm:$0xff]
    %v1257 = vld [vmem:[#allocation8 + $0x100] sm:$0xff]
    %v1258 = vld [vmem:[#allocation8 + $0x108] sm:$0xff]
    %v1259 = vld [vmem:[#allocation8 + $0x110] sm:$0xff]
    %v1260 = vld [vmem:[#allocation8 + $0x118] sm:$0xff]
    %v1261 = vld [vmem:[#allocation8 + $0x120] sm:$0xff]
    %v1262 = vld [vmem:[#allocation8 + $0x128] sm:$0xff]
    %v1263 = vld [vmem:[#allocation8 + $0x130] sm:$0xff]
    %v1264 = vld [vmem:[#allocation8 + $0x138] sm:$0xff]
    %v1265 = vld [vmem:[#allocation8 + $0x140] sm:$0xff]
    %v1266 = vld [vmem:[#allocation8 + $0x148] sm:$0xff]
    %v1267 = vld [vmem:[#allocation8 + $0x150] sm:$0xff]
    %v1268 = vld [vmem:[#allocation8 + $0x158] sm:$0xff]
    %v1269 = vld [vmem:[#allocation8 + $0x160] sm:$0xff]
    %v1270 = vld [vmem:[#allocation8 + $0x168] sm:$0xff]
    %v1271 = vld [vmem:[#allocation8 + $0x170] sm:$0xff]
    %v1272 = vld [vmem:[#allocation8 + $0x178] sm:$0xff]
    %v1273 = vld [vmem:[#allocation8 + $0x180] sm:$0xff]
    %v1274 = vld [vmem:[#allocation8 + $0x188] sm:$0xff]
    %v1275 = vld [vmem:[#allocation8 + $0x190] sm:$0xff]
    %v1276 = vld [vmem:[#allocation8 + $0x198] sm:$0xff]
    %v1277 = vld [vmem:[#allocation8 + $0x1a0] sm:$0xff]
    %v1278 = vld [vmem:[#allocation8 + $0x1a8] sm:$0xff]
    %v1279 = vld [vmem:[#allocation8 + $0x1b0] sm:$0xff]
    %v1280 = vld [vmem:[#allocation8 + $0x1b8] sm:$0xff]
    %v1281 = vld [vmem:[#allocation8 + $0x1c0] sm:$0xff]
    %v1282 = vld [vmem:[#allocation8 + $0x1c8] sm:$0xff]
    %v1283 = vld [vmem:[#allocation8 + $0x1d0] sm:$0xff]
    %v1284 = vld [vmem:[#allocation8 + $0x1d8] sm:$0xff]
    %v1285 = vld [vmem:[#allocation8 + $0x1e0] sm:$0xff]
    %v1286 = vld [vmem:[#allocation8 + $0x1e8] sm:$0xff]
    %v1287 = vld [vmem:[#allocation8 + $0x1f0] sm:$0xff]
    %v1288 = vld [vmem:[#allocation8 + $0x1f8] sm:$0xff]
    %1289 = vmatprep.subr.mxu0 %v1286
    %1290 = vmatpush1.msra.mxu0 %v1285
    %1291 = vmatprep.subr.mxu0 %v1282
    %1292 = vmatpush1.msra.mxu0 %v1281
    %1293 = vmatprep.subr.mxu0 %v1278
    %1294 = vmatpush1.msra.mxu0 %v1277
    %1295 = vmatprep.subr.mxu0 %v1274
    %1296 = vmatpush1.msra.mxu0 %v1273
    %1297 = vmatprep.subr.mxu0 %v1270
    %1298 = vmatpush1.msra.mxu0 %v1269
    %1299 = vmatprep.subr.mxu0 %v1266
    %1300 = vmatpush1.msra.mxu0 %v1265
    %1301 = vmatprep.subr.mxu0 %v1262
    %1302 = vmatpush1.msra.mxu0 %v1261
    %1303 = vmatprep.subr.mxu0 %v1258
    %1304 = vmatpush1.msra.mxu0 %v1257
    %1305 = vmatprep.subr.mxu0 %v1254
    %1306 = vmatpush1.msra.mxu0 %v1253
    %1307 = vmatprep.subr.mxu0 %v1250
    %1308 = vmatpush1.msra.mxu0 %v1249
    %1309 = vmatprep.subr.mxu0 %v1246
    %1310 = vmatpush1.msra.mxu0 %v1245
    %1311 = vmatprep.subr.mxu0 %v1242
    %1312 = vmatpush1.msra.mxu0 %v1241
    %1313 = vmatprep.subr.mxu0 %v1238
    %1314 = vmatpush1.msra.mxu0 %v1237
    %1315 = vmatprep.subr.mxu0 %v1234
    %1316 = vmatpush1.msra.mxu0 %v1233
    %1317 = vmatprep.subr.mxu0 %v1230
    %1318 = vmatpush1.msra.mxu0 %v1229
    %1319 = vmatprep.subr.mxu0 %v1226
    %1320 = vmatpush1.msra.mxu0 %v1225
    %1321 = vmatprep.subr.mxu0 0.0
    %1322 = vmatpush2.msra.mxu0 0.0
    %1323 = vmatprep.subr.mxu0 0.0
    %1324 = vmatpush2.msra.mxu0 0.0
    %1325 = vmatprep.subr.mxu0 0.0
    %1326 = vmatpush2.msra.mxu0 0.0
    %1327 = vmatprep.subr.mxu0 0.0
    %1328 = vmatpush2.msra.mxu0 0.0
    %1329 = vmatprep.subr.mxu0 0.0
    %1330 = vmatpush2.msra.mxu0 0.0
    %1331 = vmatprep.subr.mxu0 0.0
    %1332 = vmatpush2.msra.mxu0 0.0
    %1333 = vmatprep.subr.mxu0 0.0
    %1334 = vmatpush2.msra.mxu0 0.0
    %1335 = vmatprep.subr.mxu0 0.0
    %1336 = vmatpush2.msra.mxu0 0.0
    %1337 = vmatprep.subr.mxu0 0.0
    %1338 = vmatpush2.msra.mxu0 0.0
    %1339 = vmatprep.subr.mxu0 0.0
    %1340 = vmatpush2.msra.mxu0 0.0
    %1341 = vmatprep.subr.mxu0 0.0
    %1342 = vmatpush2.msra.mxu0 0.0
    %1343 = vmatprep.subr.mxu0 0.0
    %1344 = vmatpush2.msra.mxu0 0.0
    %1345 = vmatprep.subr.mxu0 0.0
    %1346 = vmatpush2.msra.mxu0 0.0
    %1347 = vmatprep.subr.mxu0 0.0
    %1348 = vmatpush2.msra.mxu0 0.0
    %1349 = vmatprep.subr.mxu0 0.0
    %1350 = vmatpush2.msra.mxu0 0.0
    %1351 = vmatprep.subr.mxu0 0.0
    %1352 = vmatpush2.msra.mxu0 0.0
    %1353 = vmatprep.mubr.f32.mxu0 0.0
    %1354 = vmatmul.mubr.f32.gmra.mxu0 %v1199
    %v1355 = vpop.f32.mrf.mxu0
    %v1356 = vadd.f32 0.0, %v1355
    %v1357 = vpop.f32.mrf.mxu0
    %v1358 = vadd.f32 0.0, %v1357
    %1359 = vdwg.mxu0
    %1360 = vmatprep.subr.mxu0 %v1288
    %1361 = vmatpush1.msra.mxu0 %v1287
    %1362 = vmatprep.subr.mxu0 %v1284
    %1363 = vmatpush1.msra.mxu0 %v1283
    %1364 = vmatprep.subr.mxu0 %v1280
    %1365 = vmatpush1.msra.mxu0 %v1279
    %1366 = vmatprep.subr.mxu0 %v1276
    %1367 = vmatpush1.msra.mxu0 %v1275
    %1368 = vmatprep.subr.mxu0 %v1272
    %1369 = vmatpush1.msra.mxu0 %v1271
    %1370 = vmatprep.subr.mxu0 %v1268
    %1371 = vmatpush1.msra.mxu0 %v1267
    %1372 = vmatprep.subr.mxu0 %v1264
    %1373 = vmatpush1.msra.mxu0 %v1263
    %1374 = vmatprep.subr.mxu0 %v1260
    %1375 = vmatpush1.msra.mxu0 %v1259
    %1376 = vmatprep.subr.mxu0 %v1256
    %1377 = vmatpush1.msra.mxu0 %v1255
    %1378 = vmatprep.subr.mxu0 %v1252
    %1379 = vmatpush1.msra.mxu0 %v1251
    %1380 = vmatprep.subr.mxu0 %v1248
    %1381 = vmatpush1.msra.mxu0 %v1247
    %1382 = vmatprep.subr.mxu0 %v1244
    %1383 = vmatpush1.msra.mxu0 %v1243
    %1384 = vmatprep.subr.mxu0 %v1240
    %1385 = vmatpush1.msra.mxu0 %v1239
    %1386 = vmatprep.subr.mxu0 %v1236
    %1387 = vmatpush1.msra.mxu0 %v1235
    %1388 = vmatprep.subr.mxu0 %v1232
    %1389 = vmatpush1.msra.mxu0 %v1231
    %1390 = vmatprep.subr.mxu0 %v1228
    %1391 = vmatpush1.msra.mxu0 %v1227
    %1392 = vmatprep.subr.mxu0 0.0
    %1393 = vmatpush2.msra.mxu0 0.0
    %1394 = vmatprep.subr.mxu0 0.0
    %1395 = vmatpush2.msra.mxu0 0.0
    %1396 = vmatprep.subr.mxu0 0.0
    %1397 = vmatpush2.msra.mxu0 0.0
    %1398 = vmatprep.subr.mxu0 0.0
    %1399 = vmatpush2.msra.mxu0 0.0
    %1400 = vmatprep.subr.mxu0 0.0
    %1401 = vmatpush2.msra.mxu0 0.0
    %1402 = vmatprep.subr.mxu0 0.0
    %1403 = vmatpush2.msra.mxu0 0.0
    %1404 = vmatprep.subr.mxu0 0.0
    %1405 = vmatpush2.msra.mxu0 0.0
    %1406 = vmatprep.subr.mxu0 0.0
    %1407 = vmatpush2.msra.mxu0 0.0
    %1408 = vmatprep.subr.mxu0 0.0
    %1409 = vmatpush2.msra.mxu0 0.0
    %1410 = vmatprep.subr.mxu0 0.0
    %1411 = vmatpush2.msra.mxu0 0.0
    %1412 = vmatprep.subr.mxu0 0.0
    %1413 = vmatpush2.msra.mxu0 0.0
    %1414 = vmatprep.subr.mxu0 0.0
    %1415 = vmatpush2.msra.mxu0 0.0
    %1416 = vmatprep.subr.mxu0 0.0
    %1417 = vmatpush2.msra.mxu0 0.0
    %1418 = vmatprep.subr.mxu0 0.0
    %1419 = vmatpush2.msra.mxu0 0.0
    %1420 = vmatprep.subr.mxu0 0.0
    %1421 = vmatpush2.msra.mxu0 0.0
    %1422 = vmatprep.subr.mxu0 0.0
    %1423 = vmatpush2.msra.mxu0 0.0
    %1424 = vmatprep.mubr.f32.mxu0 0.0
    %1425 = vmatmul.mubr.f32.gmra.mxu0 %v1199
    %v1426 = vpop.f32.mrf.mxu0
    %v1427 = vadd.f32 0.0, %v1426
    %v1428 = vpop.f32.mrf.mxu0
    %v1429 = vadd.f32 0.0, %v1428
    %1430 = vdwg.mxu0
    %v1435 = vcombine.low %v1356, %v1358
    %v1436 = vcombine.low %v1427, %v1429
    %v1438 = vunpack.c.l.s4 1983009808
    %v1439 = vunpack.c.0.s8 %v1438
    %v1440 = vlaneseq
    %v1441 = vshrl.u32 %v1440, 7
    %v1442 = vsub.s32 %v1439, %v1441
    %v1443 = vrot.slane %v1435, %v1442
    %v1445 = vunpack.c.l.s4 1983009808
    %v1446 = vunpack.c.0.s8 %v1445
    %v1447 = vlaneseq
    %v1448 = vshrl.u32 %v1447, 7
    %v1449 = vsub.s32 %v1446, %v1448
    %v1450 = vrot.slane %v1436, %v1449
    %v1451 = vcombine.low %v1443, %v1450
    %v1453 = vadd.f32 %v1224, %v1451
    %v1454 = vxor.u32 %v1453, 2147483648
    %v1455 = vmul.f32 %v1454, 1.442695
    %v1456 = vpow.pop %v1455
    %v1457 = vadd.f32 %v1456, 1.0
    %v1458 = vrcp.pop %v1457
    %v1459 = vmul.f32 1.0, %v1458
    %v1461 = vrot.slane %v1453, 2
    %v1463 = vxor.u32 %v1461, 2147483648
    %v1464 = vmul.f32 %v1463, 1.442695
    %v1465 = vpow.pop %v1464
    %v1466 = vadd.f32 %v1465, 1.0
    %v1467 = vrcp.pop %v1466
    %v1468 = vmul.f32 1.0, %v1467
    %v1469 = vrot.slane %v1453, 4
    %v1471 = vtanh.pop %v1469
    %v1472 = vrot.slane %v1453, 6
    %v1474 = vxor.u32 %v1472, 2147483648
    %v1475 = vmul.f32 %v1474, 1.442695
    %v1476 = vpow.pop %v1475
    %v1477 = vadd.f32 %v1476, 1.0
    %v1478 = vrcp.pop %v1477
    %v1479 = vmul.f32 1.0, %v1478
    %v1480 = vmul.f32 %v1468, %v1197
    %v1481 = vmul.f32 %v1459, %v1471
    %v1482 = vadd.f32 %v1480, %v1481
    %v1483 = vtanh.pop %v1482
    %v1484 = vmul.f32 %v1479, %v1483
    %s1485 = sadd.s32 %s54, 5
    %s1486 = sld [smem:[#allocation4 + %s1485]]
    %s1487 = sshra.s32 %s1486, 3
    %s1488 = sand.u32 %s1486, 7
    %s1489 = sshra.s32 %s1486, 3
    %s1490 = sand.u32 %s1486, 7
    %s1491 = smul.u32 %s1487, 4
    %s1492 = smul.u32 %s1491, 8
    %s1493 = sadd.s32 %s1492, %s1490
    %s1494 = scalar_lea.vmem [#allocation6], %s1493
    %v1495 = vld [vmem:[%s1494] ss:$8 sm:$0xf]
    %1496 = vst.msk [vmem:[#allocation2] ss:$2 sm:$0xf] %vm68, %v1495
    %s1497 = sadd.s32 %s71, 5
    %s1498 = sld [smem:[#allocation4 + %s1497]]
    %s1499 = sshra.s32 %s1498, 3
    %s1500 = sand.u32 %s1498, 7
    %s1501 = sshra.s32 %s1498, 3
    %s1502 = sand.u32 %s1498, 7
    %s1503 = smul.u32 %s1499, 4
    %s1504 = smul.u32 %s1503, 8
    %s1505 = sadd.s32 %s1504, %s1502
    %s1506 = scalar_lea.vmem [#allocation6], %s1505
    %v1507 = vld [vmem:[%s1506] ss:$8 sm:$0xf]
    %1508 = vst.msk [vmem:[%s82] ss:$2 sm:$0xf] %vm68, %v1507
    %v1509 = vld [vmem:[#allocation2] sm:$0xff]
    %v1510 = vld [vmem:[#allocation8] sm:$0xff]
    %v1511 = vld [vmem:[#allocation8 + $0x8] sm:$0xff]
    %v1512 = vld [vmem:[#allocation8 + $0x10] sm:$0xff]
    %v1513 = vld [vmem:[#allocation8 + $0x18] sm:$0xff]
    %v1514 = vld [vmem:[#allocation8 + $0x20] sm:$0xff]
    %v1515 = vld [vmem:[#allocation8 + $0x28] sm:$0xff]
    %v1516 = vld [vmem:[#allocation8 + $0x30] sm:$0xff]
    %v1517 = vld [vmem:[#allocation8 + $0x38] sm:$0xff]
    %v1518 = vld [vmem:[#allocation8 + $0x40] sm:$0xff]
    %v1519 = vld [vmem:[#allocation8 + $0x48] sm:$0xff]
    %v1520 = vld [vmem:[#allocation8 + $0x50] sm:$0xff]
    %v1521 = vld [vmem:[#allocation8 + $0x58] sm:$0xff]
    %v1522 = vld [vmem:[#allocation8 + $0x60] sm:$0xff]
    %v1523 = vld [vmem:[#allocation8 + $0x68] sm:$0xff]
    %v1524 = vld [vmem:[#allocation8 + $0x70] sm:$0xff]
    %v1525 = vld [vmem:[#allocation8 + $0x78] sm:$0xff]
    %v1526 = vld [vmem:[#allocation8 + $0x80] sm:$0xff]
    %v1527 = vld [vmem:[#allocation8 + $0x88] sm:$0xff]
    %v1528 = vld [vmem:[#allocation8 + $0x90] sm:$0xff]
    %v1529 = vld [vmem:[#allocation8 + $0x98] sm:$0xff]
    %v1530 = vld [vmem:[#allocation8 + $0xa0] sm:$0xff]
    %v1531 = vld [vmem:[#allocation8 + $0xa8] sm:$0xff]
    %v1532 = vld [vmem:[#allocation8 + $0xb0] sm:$0xff]
    %v1533 = vld [vmem:[#allocation8 + $0xb8] sm:$0xff]
    %v1534 = vld [vmem:[#allocation8 + $0xc0] sm:$0xff]
    %v1535 = vld [vmem:[#allocation8 + $0xc8] sm:$0xff]
    %v1536 = vld [vmem:[#allocation8 + $0xd0] sm:$0xff]
    %v1537 = vld [vmem:[#allocation8 + $0xd8] sm:$0xff]
    %v1538 = vld [vmem:[#allocation8 + $0xe0] sm:$0xff]
    %v1539 = vld [vmem:[#allocation8 + $0xe8] sm:$0xff]
    %v1540 = vld [vmem:[#allocation8 + $0xf0] sm:$0xff]
    %v1541 = vld [vmem:[#allocation8 + $0xf8] sm:$0xff]
    %v1542 = vld [vmem:[#allocation8 + $0x100] sm:$0xff]
    %v1543 = vld [vmem:[#allocation8 + $0x108] sm:$0xff]
    %v1544 = vld [vmem:[#allocation8 + $0x110] sm:$0xff]
    %v1545 = vld [vmem:[#allocation8 + $0x118] sm:$0xff]
    %v1546 = vld [vmem:[#allocation8 + $0x120] sm:$0xff]
    %v1547 = vld [vmem:[#allocation8 + $0x128] sm:$0xff]
    %v1548 = vld [vmem:[#allocation8 + $0x130] sm:$0xff]
    %v1549 = vld [vmem:[#allocation8 + $0x138] sm:$0xff]
    %v1550 = vld [vmem:[#allocation8 + $0x140] sm:$0xff]
    %v1551 = vld [vmem:[#allocation8 + $0x148] sm:$0xff]
    %v1552 = vld [vmem:[#allocation8 + $0x150] sm:$0xff]
    %v1553 = vld [vmem:[#allocation8 + $0x158] sm:$0xff]
    %v1554 = vld [vmem:[#allocation8 + $0x160] sm:$0xff]
    %v1555 = vld [vmem:[#allocation8 + $0x168] sm:$0xff]
    %v1556 = vld [vmem:[#allocation8 + $0x170] sm:$0xff]
    %v1557 = vld [vmem:[#allocation8 + $0x178] sm:$0xff]
    %v1558 = vld [vmem:[#allocation8 + $0x180] sm:$0xff]
    %v1559 = vld [vmem:[#allocation8 + $0x188] sm:$0xff]
    %v1560 = vld [vmem:[#allocation8 + $0x190] sm:$0xff]
    %v1561 = vld [vmem:[#allocation8 + $0x198] sm:$0xff]
    %v1562 = vld [vmem:[#allocation8 + $0x1a0] sm:$0xff]
    %v1563 = vld [vmem:[#allocation8 + $0x1a8] sm:$0xff]
    %v1564 = vld [vmem:[#allocation8 + $0x1b0] sm:$0xff]
    %v1565 = vld [vmem:[#allocation8 + $0x1b8] sm:$0xff]
    %v1566 = vld [vmem:[#allocation8 + $0x1c0] sm:$0xff]
    %v1567 = vld [vmem:[#allocation8 + $0x1c8] sm:$0xff]
    %v1568 = vld [vmem:[#allocation8 + $0x1d0] sm:$0xff]
    %v1569 = vld [vmem:[#allocation8 + $0x1d8] sm:$0xff]
    %v1570 = vld [vmem:[#allocation8 + $0x1e0] sm:$0xff]
    %v1571 = vld [vmem:[#allocation8 + $0x1e8] sm:$0xff]
    %v1572 = vld [vmem:[#allocation8 + $0x1f0] sm:$0xff]
    %v1573 = vld [vmem:[#allocation8 + $0x1f8] sm:$0xff]
    %1574 = vmatprep.subr.mxu0 %v1571
    %1575 = vmatpush1.msra.mxu0 %v1570
    %1576 = vmatprep.subr.mxu0 %v1567
    %1577 = vmatpush1.msra.mxu0 %v1566
    %1578 = vmatprep.subr.mxu0 %v1563
    %1579 = vmatpush1.msra.mxu0 %v1562
    %1580 = vmatprep.subr.mxu0 %v1559
    %1581 = vmatpush1.msra.mxu0 %v1558
    %1582 = vmatprep.subr.mxu0 %v1555
    %1583 = vmatpush1.msra.mxu0 %v1554
    %1584 = vmatprep.subr.mxu0 %v1551
    %1585 = vmatpush1.msra.mxu0 %v1550
    %1586 = vmatprep.subr.mxu0 %v1547
    %1587 = vmatpush1.msra.mxu0 %v1546
    %1588 = vmatprep.subr.mxu0 %v1543
    %1589 = vmatpush1.msra.mxu0 %v1542
    %1590 = vmatprep.subr.mxu0 %v1539
    %1591 = vmatpush1.msra.mxu0 %v1538
    %1592 = vmatprep.subr.mxu0 %v1535
    %1593 = vmatpush1.msra.mxu0 %v1534
    %1594 = vmatprep.subr.mxu0 %v1531
    %1595 = vmatpush1.msra.mxu0 %v1530
    %1596 = vmatprep.subr.mxu0 %v1527
    %1597 = vmatpush1.msra.mxu0 %v1526
    %1598 = vmatprep.subr.mxu0 %v1523
    %1599 = vmatpush1.msra.mxu0 %v1522
    %1600 = vmatprep.subr.mxu0 %v1519
    %1601 = vmatpush1.msra.mxu0 %v1518
    %1602 = vmatprep.subr.mxu0 %v1515
    %1603 = vmatpush1.msra.mxu0 %v1514
    %1604 = vmatprep.subr.mxu0 %v1511
    %1605 = vmatpush1.msra.mxu0 %v1510
    %1606 = vmatprep.subr.mxu0 0.0
    %1607 = vmatpush2.msra.mxu0 0.0
    %1608 = vmatprep.subr.mxu0 0.0
    %1609 = vmatpush2.msra.mxu0 0.0
    %1610 = vmatprep.subr.mxu0 0.0
    %1611 = vmatpush2.msra.mxu0 0.0
    %1612 = vmatprep.subr.mxu0 0.0
    %1613 = vmatpush2.msra.mxu0 0.0
    %1614 = vmatprep.subr.mxu0 0.0
    %1615 = vmatpush2.msra.mxu0 0.0
    %1616 = vmatprep.subr.mxu0 0.0
    %1617 = vmatpush2.msra.mxu0 0.0
    %1618 = vmatprep.subr.mxu0 0.0
    %1619 = vmatpush2.msra.mxu0 0.0
    %1620 = vmatprep.subr.mxu0 0.0
    %1621 = vmatpush2.msra.mxu0 0.0
    %1622 = vmatprep.subr.mxu0 0.0
    %1623 = vmatpush2.msra.mxu0 0.0
    %1624 = vmatprep.subr.mxu0 0.0
    %1625 = vmatpush2.msra.mxu0 0.0
    %1626 = vmatprep.subr.mxu0 0.0
    %1627 = vmatpush2.msra.mxu0 0.0
    %1628 = vmatprep.subr.mxu0 0.0
    %1629 = vmatpush2.msra.mxu0 0.0
    %1630 = vmatprep.subr.mxu0 0.0
    %1631 = vmatpush2.msra.mxu0 0.0
    %1632 = vmatprep.subr.mxu0 0.0
    %1633 = vmatpush2.msra.mxu0 0.0
    %1634 = vmatprep.subr.mxu0 0.0
    %1635 = vmatpush2.msra.mxu0 0.0
    %1636 = vmatprep.subr.mxu0 0.0
    %1637 = vmatpush2.msra.mxu0 0.0
    %1638 = vmatprep.mubr.f32.mxu0 0.0
    %1639 = vmatmul.mubr.f32.gmra.mxu0 %v1484
    %v1640 = vpop.f32.mrf.mxu0
    %v1641 = vadd.f32 0.0, %v1640
    %v1642 = vpop.f32.mrf.mxu0
    %v1643 = vadd.f32 0.0, %v1642
    %1644 = vdwg.mxu0
    %1645 = vmatprep.subr.mxu0 %v1573
    %1646 = vmatpush1.msra.mxu0 %v1572
    %1647 = vmatprep.subr.mxu0 %v1569
    %1648 = vmatpush1.msra.mxu0 %v1568
    %1649 = vmatprep.subr.mxu0 %v1565
    %1650 = vmatpush1.msra.mxu0 %v1564
    %1651 = vmatprep.subr.mxu0 %v1561
    %1652 = vmatpush1.msra.mxu0 %v1560
    %1653 = vmatprep.subr.mxu0 %v1557
    %1654 = vmatpush1.msra.mxu0 %v1556
    %1655 = vmatprep.subr.mxu0 %v1553
    %1656 = vmatpush1.msra.mxu0 %v1552
    %1657 = vmatprep.subr.mxu0 %v1549
    %1658 = vmatpush1.msra.mxu0 %v1548
    %1659 = vmatprep.subr.mxu0 %v1545
    %1660 = vmatpush1.msra.mxu0 %v1544
    %1661 = vmatprep.subr.mxu0 %v1541
    %1662 = vmatpush1.msra.mxu0 %v1540
    %1663 = vmatprep.subr.mxu0 %v1537
    %1664 = vmatpush1.msra.mxu0 %v1536
    %1665 = vmatprep.subr.mxu0 %v1533
    %1666 = vmatpush1.msra.mxu0 %v1532
    %1667 = vmatprep.subr.mxu0 %v1529
    %1668 = vmatpush1.msra.mxu0 %v1528
    %1669 = vmatprep.subr.mxu0 %v1525
    %1670 = vmatpush1.msra.mxu0 %v1524
    %1671 = vmatprep.subr.mxu0 %v1521
    %1672 = vmatpush1.msra.mxu0 %v1520
    %1673 = vmatprep.subr.mxu0 %v1517
    %1674 = vmatpush1.msra.mxu0 %v1516
    %1675 = vmatprep.subr.mxu0 %v1513
    %1676 = vmatpush1.msra.mxu0 %v1512
    %1677 = vmatprep.subr.mxu0 0.0
    %1678 = vmatpush2.msra.mxu0 0.0
    %1679 = vmatprep.subr.mxu0 0.0
    %1680 = vmatpush2.msra.mxu0 0.0
    %1681 = vmatprep.subr.mxu0 0.0
    %1682 = vmatpush2.msra.mxu0 0.0
    %1683 = vmatprep.subr.mxu0 0.0
    %1684 = vmatpush2.msra.mxu0 0.0
    %1685 = vmatprep.subr.mxu0 0.0
    %1686 = vmatpush2.msra.mxu0 0.0
    %1687 = vmatprep.subr.mxu0 0.0
    %1688 = vmatpush2.msra.mxu0 0.0
    %1689 = vmatprep.subr.mxu0 0.0
    %1690 = vmatpush2.msra.mxu0 0.0
    %1691 = vmatprep.subr.mxu0 0.0
    %1692 = vmatpush2.msra.mxu0 0.0
    %1693 = vmatprep.subr.mxu0 0.0
    %1694 = vmatpush2.msra.mxu0 0.0
    %1695 = vmatprep.subr.mxu0 0.0
    %1696 = vmatpush2.msra.mxu0 0.0
    %1697 = vmatprep.subr.mxu0 0.0
    %1698 = vmatpush2.msra.mxu0 0.0
    %1699 = vmatprep.subr.mxu0 0.0
    %1700 = vmatpush2.msra.mxu0 0.0
    %1701 = vmatprep.subr.mxu0 0.0
    %1702 = vmatpush2.msra.mxu0 0.0
    %1703 = vmatprep.subr.mxu0 0.0
    %1704 = vmatpush2.msra.mxu0 0.0
    %1705 = vmatprep.subr.mxu0 0.0
    %1706 = vmatpush2.msra.mxu0 0.0
    %1707 = vmatprep.subr.mxu0 0.0
    %1708 = vmatpush2.msra.mxu0 0.0
    %1709 = vmatprep.mubr.f32.mxu0 0.0
    %1710 = vmatmul.mubr.f32.gmra.mxu0 %v1484
    %v1711 = vpop.f32.mrf.mxu0
    %v1712 = vadd.f32 0.0, %v1711
    %v1713 = vpop.f32.mrf.mxu0
    %v1714 = vadd.f32 0.0, %v1713
    %1715 = vdwg.mxu0
    %v1720 = vcombine.low %v1641, %v1643
    %v1721 = vcombine.low %v1712, %v1714
    %v1723 = vunpack.c.l.s4 1983009808
    %v1724 = vunpack.c.0.s8 %v1723
    %v1725 = vlaneseq
    %v1726 = vshrl.u32 %v1725, 7
    %v1727 = vsub.s32 %v1724, %v1726
    %v1728 = vrot.slane %v1720, %v1727
    %v1730 = vunpack.c.l.s4 1983009808
    %v1731 = vunpack.c.0.s8 %v1730
    %v1732 = vlaneseq
    %v1733 = vshrl.u32 %v1732, 7
    %v1734 = vsub.s32 %v1731, %v1733
    %v1735 = vrot.slane %v1721, %v1734
    %v1736 = vcombine.low %v1728, %v1735
    %v1738 = vadd.f32 %v1509, %v1736
    %v1739 = vxor.u32 %v1738, 2147483648
    %v1740 = vmul.f32 %v1739, 1.442695
    %v1741 = vpow.pop %v1740
    %v1742 = vadd.f32 %v1741, 1.0
    %v1743 = vrcp.pop %v1742
    %v1744 = vmul.f32 1.0, %v1743
    %v1746 = vrot.slane %v1738, 2
    %v1748 = vxor.u32 %v1746, 2147483648
    %v1749 = vmul.f32 %v1748, 1.442695
    %v1750 = vpow.pop %v1749
    %v1751 = vadd.f32 %v1750, 1.0
    %v1752 = vrcp.pop %v1751
    %v1753 = vmul.f32 1.0, %v1752
    %v1754 = vrot.slane %v1738, 4
    %v1756 = vtanh.pop %v1754
    %v1757 = vrot.slane %v1738, 6
    %v1759 = vxor.u32 %v1757, 2147483648
    %v1760 = vmul.f32 %v1759, 1.442695
    %v1761 = vpow.pop %v1760
    %v1762 = vadd.f32 %v1761, 1.0
    %v1763 = vrcp.pop %v1762
    %v1764 = vmul.f32 1.0, %v1763
    %v1765 = vmul.f32 %v1753, %v1482
    %v1766 = vmul.f32 %v1744, %v1756
    %v1767 = vadd.f32 %v1765, %v1766
    %v1768 = vtanh.pop %v1767
    %v1769 = vmul.f32 %v1764, %v1768
    %s1770 = sadd.s32 %s54, 6
    %s1771 = sld [smem:[#allocation4 + %s1770]]
    %s1772 = sshra.s32 %s1771, 3
    %s1773 = sand.u32 %s1771, 7
    %s1774 = sshra.s32 %s1771, 3
    %s1775 = sand.u32 %s1771, 7
    %s1776 = smul.u32 %s1772, 4
    %s1777 = smul.u32 %s1776, 8
    %s1778 = sadd.s32 %s1777, %s1775
    %s1779 = scalar_lea.vmem [#allocation6], %s1778
    %v1780 = vld [vmem:[%s1779] ss:$8 sm:$0xf]
    %1781 = vst.msk [vmem:[#allocation2] ss:$2 sm:$0xf] %vm68, %v1780
    %s1782 = sadd.s32 %s71, 6
    %s1783 = sld [smem:[#allocation4 + %s1782]]
    %s1784 = sshra.s32 %s1783, 3
    %s1785 = sand.u32 %s1783, 7
    %s1786 = sshra.s32 %s1783, 3
    %s1787 = sand.u32 %s1783, 7
    %s1788 = smul.u32 %s1784, 4
    %s1789 = smul.u32 %s1788, 8
    %s1790 = sadd.s32 %s1789, %s1787
    %s1791 = scalar_lea.vmem [#allocation6], %s1790
    %v1792 = vld [vmem:[%s1791] ss:$8 sm:$0xf]
    %1793 = vst.msk [vmem:[%s82] ss:$2 sm:$0xf] %vm68, %v1792
    %v1794 = vld [vmem:[#allocation2] sm:$0xff]
    %v1795 = vld [vmem:[#allocation8] sm:$0xff]
    %v1796 = vld [vmem:[#allocation8 + $0x8] sm:$0xff]
    %v1797 = vld [vmem:[#allocation8 + $0x10] sm:$0xff]
    %v1798 = vld [vmem:[#allocation8 + $0x18] sm:$0xff]
    %v1799 = vld [vmem:[#allocation8 + $0x20] sm:$0xff]
    %v1800 = vld [vmem:[#allocation8 + $0x28] sm:$0xff]
    %v1801 = vld [vmem:[#allocation8 + $0x30] sm:$0xff]
    %v1802 = vld [vmem:[#allocation8 + $0x38] sm:$0xff]
    %v1803 = vld [vmem:[#allocation8 + $0x40] sm:$0xff]
    %v1804 = vld [vmem:[#allocation8 + $0x48] sm:$0xff]
    %v1805 = vld [vmem:[#allocation8 + $0x50] sm:$0xff]
    %v1806 = vld [vmem:[#allocation8 + $0x58] sm:$0xff]
    %v1807 = vld [vmem:[#allocation8 + $0x60] sm:$0xff]
    %v1808 = vld [vmem:[#allocation8 + $0x68] sm:$0xff]
    %v1809 = vld [vmem:[#allocation8 + $0x70] sm:$0xff]
    %v1810 = vld [vmem:[#allocation8 + $0x78] sm:$0xff]
    %v1811 = vld [vmem:[#allocation8 + $0x80] sm:$0xff]
    %v1812 = vld [vmem:[#allocation8 + $0x88] sm:$0xff]
    %v1813 = vld [vmem:[#allocation8 + $0x90] sm:$0xff]
    %v1814 = vld [vmem:[#allocation8 + $0x98] sm:$0xff]
    %v1815 = vld [vmem:[#allocation8 + $0xa0] sm:$0xff]
    %v1816 = vld [vmem:[#allocation8 + $0xa8] sm:$0xff]
    %v1817 = vld [vmem:[#allocation8 + $0xb0] sm:$0xff]
    %v1818 = vld [vmem:[#allocation8 + $0xb8] sm:$0xff]
    %v1819 = vld [vmem:[#allocation8 + $0xc0] sm:$0xff]
    %v1820 = vld [vmem:[#allocation8 + $0xc8] sm:$0xff]
    %v1821 = vld [vmem:[#allocation8 + $0xd0] sm:$0xff]
    %v1822 = vld [vmem:[#allocation8 + $0xd8] sm:$0xff]
    %v1823 = vld [vmem:[#allocation8 + $0xe0] sm:$0xff]
    %v1824 = vld [vmem:[#allocation8 + $0xe8] sm:$0xff]
    %v1825 = vld [vmem:[#allocation8 + $0xf0] sm:$0xff]
    %v1826 = vld [vmem:[#allocation8 + $0xf8] sm:$0xff]
    %v1827 = vld [vmem:[#allocation8 + $0x100] sm:$0xff]
    %v1828 = vld [vmem:[#allocation8 + $0x108] sm:$0xff]
    %v1829 = vld [vmem:[#allocation8 + $0x110] sm:$0xff]
    %v1830 = vld [vmem:[#allocation8 + $0x118] sm:$0xff]
    %v1831 = vld [vmem:[#allocation8 + $0x120] sm:$0xff]
    %v1832 = vld [vmem:[#allocation8 + $0x128] sm:$0xff]
    %v1833 = vld [vmem:[#allocation8 + $0x130] sm:$0xff]
    %v1834 = vld [vmem:[#allocation8 + $0x138] sm:$0xff]
    %v1835 = vld [vmem:[#allocation8 + $0x140] sm:$0xff]
    %v1836 = vld [vmem:[#allocation8 + $0x148] sm:$0xff]
    %v1837 = vld [vmem:[#allocation8 + $0x150] sm:$0xff]
    %v1838 = vld [vmem:[#allocation8 + $0x158] sm:$0xff]
    %v1839 = vld [vmem:[#allocation8 + $0x160] sm:$0xff]
    %v1840 = vld [vmem:[#allocation8 + $0x168] sm:$0xff]
    %v1841 = vld [vmem:[#allocation8 + $0x170] sm:$0xff]
    %v1842 = vld [vmem:[#allocation8 + $0x178] sm:$0xff]
    %v1843 = vld [vmem:[#allocation8 + $0x180] sm:$0xff]
    %v1844 = vld [vmem:[#allocation8 + $0x188] sm:$0xff]
    %v1845 = vld [vmem:[#allocation8 + $0x190] sm:$0xff]
    %v1846 = vld [vmem:[#allocation8 + $0x198] sm:$0xff]
    %v1847 = vld [vmem:[#allocation8 + $0x1a0] sm:$0xff]
    %v1848 = vld [vmem:[#allocation8 + $0x1a8] sm:$0xff]
    %v1849 = vld [vmem:[#allocation8 + $0x1b0] sm:$0xff]
    %v1850 = vld [vmem:[#allocation8 + $0x1b8] sm:$0xff]
    %v1851 = vld [vmem:[#allocation8 + $0x1c0] sm:$0xff]
    %v1852 = vld [vmem:[#allocation8 + $0x1c8] sm:$0xff]
    %v1853 = vld [vmem:[#allocation8 + $0x1d0] sm:$0xff]
    %v1854 = vld [vmem:[#allocation8 + $0x1d8] sm:$0xff]
    %v1855 = vld [vmem:[#allocation8 + $0x1e0] sm:$0xff]
    %v1856 = vld [vmem:[#allocation8 + $0x1e8] sm:$0xff]
    %v1857 = vld [vmem:[#allocation8 + $0x1f0] sm:$0xff]
    %v1858 = vld [vmem:[#allocation8 + $0x1f8] sm:$0xff]
    %1859 = vmatprep.subr.mxu0 %v1856
    %1860 = vmatpush1.msra.mxu0 %v1855
    %1861 = vmatprep.subr.mxu0 %v1852
    %1862 = vmatpush1.msra.mxu0 %v1851
    %1863 = vmatprep.subr.mxu0 %v1848
    %1864 = vmatpush1.msra.mxu0 %v1847
    %1865 = vmatprep.subr.mxu0 %v1844
    %1866 = vmatpush1.msra.mxu0 %v1843
    %1867 = vmatprep.subr.mxu0 %v1840
    %1868 = vmatpush1.msra.mxu0 %v1839
    %1869 = vmatprep.subr.mxu0 %v1836
    %1870 = vmatpush1.msra.mxu0 %v1835
    %1871 = vmatprep.subr.mxu0 %v1832
    %1872 = vmatpush1.msra.mxu0 %v1831
    %1873 = vmatprep.subr.mxu0 %v1828
    %1874 = vmatpush1.msra.mxu0 %v1827
    %1875 = vmatprep.subr.mxu0 %v1824
    %1876 = vmatpush1.msra.mxu0 %v1823
    %1877 = vmatprep.subr.mxu0 %v1820
    %1878 = vmatpush1.msra.mxu0 %v1819
    %1879 = vmatprep.subr.mxu0 %v1816
    %1880 = vmatpush1.msra.mxu0 %v1815
    %1881 = vmatprep.subr.mxu0 %v1812
    %1882 = vmatpush1.msra.mxu0 %v1811
    %1883 = vmatprep.subr.mxu0 %v1808
    %1884 = vmatpush1.msra.mxu0 %v1807
    %1885 = vmatprep.subr.mxu0 %v1804
    %1886 = vmatpush1.msra.mxu0 %v1803
    %1887 = vmatprep.subr.mxu0 %v1800
    %1888 = vmatpush1.msra.mxu0 %v1799
    %1889 = vmatprep.subr.mxu0 %v1796
    %1890 = vmatpush1.msra.mxu0 %v1795
    %1891 = vmatprep.subr.mxu0 0.0
    %1892 = vmatpush2.msra.mxu0 0.0
    %1893 = vmatprep.subr.mxu0 0.0
    %1894 = vmatpush2.msra.mxu0 0.0
    %1895 = vmatprep.subr.mxu0 0.0
    %1896 = vmatpush2.msra.mxu0 0.0
    %1897 = vmatprep.subr.mxu0 0.0
    %1898 = vmatpush2.msra.mxu0 0.0
    %1899 = vmatprep.subr.mxu0 0.0
    %1900 = vmatpush2.msra.mxu0 0.0
    %1901 = vmatprep.subr.mxu0 0.0
    %1902 = vmatpush2.msra.mxu0 0.0
    %1903 = vmatprep.subr.mxu0 0.0
    %1904 = vmatpush2.msra.mxu0 0.0
    %1905 = vmatprep.subr.mxu0 0.0
    %1906 = vmatpush2.msra.mxu0 0.0
    %1907 = vmatprep.subr.mxu0 0.0
    %1908 = vmatpush2.msra.mxu0 0.0
    %1909 = vmatprep.subr.mxu0 0.0
    %1910 = vmatpush2.msra.mxu0 0.0
    %1911 = vmatprep.subr.mxu0 0.0
    %1912 = vmatpush2.msra.mxu0 0.0
    %1913 = vmatprep.subr.mxu0 0.0
    %1914 = vmatpush2.msra.mxu0 0.0
    %1915 = vmatprep.subr.mxu0 0.0
    %1916 = vmatpush2.msra.mxu0 0.0
    %1917 = vmatprep.subr.mxu0 0.0
    %1918 = vmatpush2.msra.mxu0 0.0
    %1919 = vmatprep.subr.mxu0 0.0
    %1920 = vmatpush2.msra.mxu0 0.0
    %1921 = vmatprep.subr.mxu0 0.0
    %1922 = vmatpush2.msra.mxu0 0.0
    %1923 = vmatprep.mubr.f32.mxu0 0.0
    %1924 = vmatmul.mubr.f32.gmra.mxu0 %v1769
    %v1925 = vpop.f32.mrf.mxu0
    %v1926 = vadd.f32 0.0, %v1925
    %v1927 = vpop.f32.mrf.mxu0
    %v1928 = vadd.f32 0.0, %v1927
    %1929 = vdwg.mxu0
    %1930 = vmatprep.subr.mxu0 %v1858
    %1931 = vmatpush1.msra.mxu0 %v1857
    %1932 = vmatprep.subr.mxu0 %v1854
    %1933 = vmatpush1.msra.mxu0 %v1853
    %1934 = vmatprep.subr.mxu0 %v1850
    %1935 = vmatpush1.msra.mxu0 %v1849
    %1936 = vmatprep.subr.mxu0 %v1846
    %1937 = vmatpush1.msra.mxu0 %v1845
    %1938 = vmatprep.subr.mxu0 %v1842
    %1939 = vmatpush1.msra.mxu0 %v1841
    %1940 = vmatprep.subr.mxu0 %v1838
    %1941 = vmatpush1.msra.mxu0 %v1837
    %1942 = vmatprep.subr.mxu0 %v1834
    %1943 = vmatpush1.msra.mxu0 %v1833
    %1944 = vmatprep.subr.mxu0 %v1830
    %1945 = vmatpush1.msra.mxu0 %v1829
    %1946 = vmatprep.subr.mxu0 %v1826
    %1947 = vmatpush1.msra.mxu0 %v1825
    %1948 = vmatprep.subr.mxu0 %v1822
    %1949 = vmatpush1.msra.mxu0 %v1821
    %1950 = vmatprep.subr.mxu0 %v1818
    %1951 = vmatpush1.msra.mxu0 %v1817
    %1952 = vmatprep.subr.mxu0 %v1814
    %1953 = vmatpush1.msra.mxu0 %v1813
    %1954 = vmatprep.subr.mxu0 %v1810
    %1955 = vmatpush1.msra.mxu0 %v1809
    %1956 = vmatprep.subr.mxu0 %v1806
    %1957 = vmatpush1.msra.mxu0 %v1805
    %1958 = vmatprep.subr.mxu0 %v1802
    %1959 = vmatpush1.msra.mxu0 %v1801
    %1960 = vmatprep.subr.mxu0 %v1798
    %1961 = vmatpush1.msra.mxu0 %v1797
    %1962 = vmatprep.subr.mxu0 0.0
    %1963 = vmatpush2.msra.mxu0 0.0
    %1964 = vmatprep.subr.mxu0 0.0
    %1965 = vmatpush2.msra.mxu0 0.0
    %1966 = vmatprep.subr.mxu0 0.0
    %1967 = vmatpush2.msra.mxu0 0.0
    %1968 = vmatprep.subr.mxu0 0.0
    %1969 = vmatpush2.msra.mxu0 0.0
    %1970 = vmatprep.subr.mxu0 0.0
    %1971 = vmatpush2.msra.mxu0 0.0
    %1972 = vmatprep.subr.mxu0 0.0
    %1973 = vmatpush2.msra.mxu0 0.0
    %1974 = vmatprep.subr.mxu0 0.0
    %1975 = vmatpush2.msra.mxu0 0.0
    %1976 = vmatprep.subr.mxu0 0.0
    %1977 = vmatpush2.msra.mxu0 0.0
    %1978 = vmatprep.subr.mxu0 0.0
    %1979 = vmatpush2.msra.mxu0 0.0
    %1980 = vmatprep.subr.mxu0 0.0
    %1981 = vmatpush2.msra.mxu0 0.0
    %1982 = vmatprep.subr.mxu0 0.0
    %1983 = vmatpush2.msra.mxu0 0.0
    %1984 = vmatprep.subr.mxu0 0.0
    %1985 = vmatpush2.msra.mxu0 0.0
    %1986 = vmatprep.subr.mxu0 0.0
    %1987 = vmatpush2.msra.mxu0 0.0
    %1988 = vmatprep.subr.mxu0 0.0
    %1989 = vmatpush2.msra.mxu0 0.0
    %1990 = vmatprep.subr.mxu0 0.0
    %1991 = vmatpush2.msra.mxu0 0.0
    %1992 = vmatprep.subr.mxu0 0.0
    %1993 = vmatpush2.msra.mxu0 0.0
    %1994 = vmatprep.mubr.f32.mxu0 0.0
    %1995 = vmatmul.mubr.f32.gmra.mxu0 %v1769
    %v1996 = vpop.f32.mrf.mxu0
    %v1997 = vadd.f32 0.0, %v1996
    %v1998 = vpop.f32.mrf.mxu0
    %v1999 = vadd.f32 0.0, %v1998
    %2000 = vdwg.mxu0
    %v2005 = vcombine.low %v1926, %v1928
    %v2006 = vcombine.low %v1997, %v1999
    %v2008 = vunpack.c.l.s4 1983009808
    %v2009 = vunpack.c.0.s8 %v2008
    %v2010 = vlaneseq
    %v2011 = vshrl.u32 %v2010, 7
    %v2012 = vsub.s32 %v2009, %v2011
    %v2013 = vrot.slane %v2005, %v2012
    %v2015 = vunpack.c.l.s4 1983009808
    %v2016 = vunpack.c.0.s8 %v2015
    %v2017 = vlaneseq
    %v2018 = vshrl.u32 %v2017, 7
    %v2019 = vsub.s32 %v2016, %v2018
    %v2020 = vrot.slane %v2006, %v2019
    %v2021 = vcombine.low %v2013, %v2020
    %v2023 = vadd.f32 %v1794, %v2021
    %v2024 = vxor.u32 %v2023, 2147483648
    %v2025 = vmul.f32 %v2024, 1.442695
    %v2026 = vpow.pop %v2025
    %v2027 = vadd.f32 %v2026, 1.0
    %v2028 = vrcp.pop %v2027
    %v2029 = vmul.f32 1.0, %v2028
    %v2031 = vrot.slane %v2023, 2
    %v2033 = vxor.u32 %v2031, 2147483648
    %v2034 = vmul.f32 %v2033, 1.442695
    %v2035 = vpow.pop %v2034
    %v2036 = vadd.f32 %v2035, 1.0
    %v2037 = vrcp.pop %v2036
    %v2038 = vmul.f32 1.0, %v2037
    %v2039 = vrot.slane %v2023, 4
    %v2041 = vtanh.pop %v2039
    %v2042 = vrot.slane %v2023, 6
    %v2044 = vxor.u32 %v2042, 2147483648
    %v2045 = vmul.f32 %v2044, 1.442695
    %v2046 = vpow.pop %v2045
    %v2047 = vadd.f32 %v2046, 1.0
    %v2048 = vrcp.pop %v2047
    %v2049 = vmul.f32 1.0, %v2048
    %v2050 = vmul.f32 %v2038, %v1767
    %v2051 = vmul.f32 %v2029, %v2041
    %v2052 = vadd.f32 %v2050, %v2051
    %v2053 = vtanh.pop %v2052
    %v2054 = vmul.f32 %v2049, %v2053
    %s2055 = sadd.s32 %s54, 7
    %s2056 = sld [smem:[#allocation4 + %s2055]]
    %s2057 = sshra.s32 %s2056, 3
    %s2058 = sand.u32 %s2056, 7
    %s2059 = sshra.s32 %s2056, 3
    %s2060 = sand.u32 %s2056, 7
    %s2061 = smul.u32 %s2057, 4
    %s2062 = smul.u32 %s2061, 8
    %s2063 = sadd.s32 %s2062, %s2060
    %s2064 = scalar_lea.vmem [#allocation6], %s2063
    %v2065 = vld [vmem:[%s2064] ss:$8 sm:$0xf]
    %2066 = vst.msk [vmem:[#allocation2] ss:$2 sm:$0xf] %vm68, %v2065
    %s2067 = sadd.s32 %s71, 7
    %s2068 = sld [smem:[#allocation4 + %s2067]]
    %s2069 = sshra.s32 %s2068, 3
    %s2070 = sand.u32 %s2068, 7
    %s2071 = sshra.s32 %s2068, 3
    %s2072 = sand.u32 %s2068, 7
    %s2073 = smul.u32 %s2069, 4
    %s2074 = smul.u32 %s2073, 8
    %s2075 = sadd.s32 %s2074, %s2072
    %s2076 = scalar_lea.vmem [#allocation6], %s2075
    %v2077 = vld [vmem:[%s2076] ss:$8 sm:$0xf]
    %2078 = vst.msk [vmem:[%s82] ss:$2 sm:$0xf] %vm68, %v2077
    %v2079 = vld [vmem:[#allocation2] sm:$0xff]
    %v2080 = vld [vmem:[#allocation8] sm:$0xff]
    %v2081 = vld [vmem:[#allocation8 + $0x8] sm:$0xff]
    %v2082 = vld [vmem:[#allocation8 + $0x10] sm:$0xff]
    %v2083 = vld [vmem:[#allocation8 + $0x18] sm:$0xff]
    %v2084 = vld [vmem:[#allocation8 + $0x20] sm:$0xff]
    %v2085 = vld [vmem:[#allocation8 + $0x28] sm:$0xff]
    %v2086 = vld [vmem:[#allocation8 + $0x30] sm:$0xff]
    %v2087 = vld [vmem:[#allocation8 + $0x38] sm:$0xff]
    %v2088 = vld [vmem:[#allocation8 + $0x40] sm:$0xff]
    %v2089 = vld [vmem:[#allocation8 + $0x48] sm:$0xff]
    %v2090 = vld [vmem:[#allocation8 + $0x50] sm:$0xff]
    %v2091 = vld [vmem:[#allocation8 + $0x58] sm:$0xff]
    %v2092 = vld [vmem:[#allocation8 + $0x60] sm:$0xff]
    %v2093 = vld [vmem:[#allocation8 + $0x68] sm:$0xff]
    %v2094 = vld [vmem:[#allocation8 + $0x70] sm:$0xff]
    %v2095 = vld [vmem:[#allocation8 + $0x78] sm:$0xff]
    %v2096 = vld [vmem:[#allocation8 + $0x80] sm:$0xff]
    %v2097 = vld [vmem:[#allocation8 + $0x88] sm:$0xff]
    %v2098 = vld [vmem:[#allocation8 + $0x90] sm:$0xff]
    %v2099 = vld [vmem:[#allocation8 + $0x98] sm:$0xff]
    %v2100 = vld [vmem:[#allocation8 + $0xa0] sm:$0xff]
    %v2101 = vld [vmem:[#allocation8 + $0xa8] sm:$0xff]
    %v2102 = vld [vmem:[#allocation8 + $0xb0] sm:$0xff]
    %v2103 = vld [vmem:[#allocation8 + $0xb8] sm:$0xff]
    %v2104 = vld [vmem:[#allocation8 + $0xc0] sm:$0xff]
    %v2105 = vld [vmem:[#allocation8 + $0xc8] sm:$0xff]
    %v2106 = vld [vmem:[#allocation8 + $0xd0] sm:$0xff]
    %v2107 = vld [vmem:[#allocation8 + $0xd8] sm:$0xff]
    %v2108 = vld [vmem:[#allocation8 + $0xe0] sm:$0xff]
    %v2109 = vld [vmem:[#allocation8 + $0xe8] sm:$0xff]
    %v2110 = vld [vmem:[#allocation8 + $0xf0] sm:$0xff]
    %v2111 = vld [vmem:[#allocation8 + $0xf8] sm:$0xff]
    %v2112 = vld [vmem:[#allocation8 + $0x100] sm:$0xff]
    %v2113 = vld [vmem:[#allocation8 + $0x108] sm:$0xff]
    %v2114 = vld [vmem:[#allocation8 + $0x110] sm:$0xff]
    %v2115 = vld [vmem:[#allocation8 + $0x118] sm:$0xff]
    %v2116 = vld [vmem:[#allocation8 + $0x120] sm:$0xff]
    %v2117 = vld [vmem:[#allocation8 + $0x128] sm:$0xff]
    %v2118 = vld [vmem:[#allocation8 + $0x130] sm:$0xff]
    %v2119 = vld [vmem:[#allocation8 + $0x138] sm:$0xff]
    %v2120 = vld [vmem:[#allocation8 + $0x140] sm:$0xff]
    %v2121 = vld [vmem:[#allocation8 + $0x148] sm:$0xff]
    %v2122 = vld [vmem:[#allocation8 + $0x150] sm:$0xff]
    %v2123 = vld [vmem:[#allocation8 + $0x158] sm:$0xff]
    %v2124 = vld [vmem:[#allocation8 + $0x160] sm:$0xff]
    %v2125 = vld [vmem:[#allocation8 + $0x168] sm:$0xff]
    %v2126 = vld [vmem:[#allocation8 + $0x170] sm:$0xff]
    %v2127 = vld [vmem:[#allocation8 + $0x178] sm:$0xff]
    %v2128 = vld [vmem:[#allocation8 + $0x180] sm:$0xff]
    %v2129 = vld [vmem:[#allocation8 + $0x188] sm:$0xff]
    %v2130 = vld [vmem:[#allocation8 + $0x190] sm:$0xff]
    %v2131 = vld [vmem:[#allocation8 + $0x198] sm:$0xff]
    %v2132 = vld [vmem:[#allocation8 + $0x1a0] sm:$0xff]
    %v2133 = vld [vmem:[#allocation8 + $0x1a8] sm:$0xff]
    %v2134 = vld [vmem:[#allocation8 + $0x1b0] sm:$0xff]
    %v2135 = vld [vmem:[#allocation8 + $0x1b8] sm:$0xff]
    %v2136 = vld [vmem:[#allocation8 + $0x1c0] sm:$0xff]
    %v2137 = vld [vmem:[#allocation8 + $0x1c8] sm:$0xff]
    %v2138 = vld [vmem:[#allocation8 + $0x1d0] sm:$0xff]
    %v2139 = vld [vmem:[#allocation8 + $0x1d8] sm:$0xff]
    %v2140 = vld [vmem:[#allocation8 + $0x1e0] sm:$0xff]
    %v2141 = vld [vmem:[#allocation8 + $0x1e8] sm:$0xff]
    %v2142 = vld [vmem:[#allocation8 + $0x1f0] sm:$0xff]
    %v2143 = vld [vmem:[#allocation8 + $0x1f8] sm:$0xff]
    %2144 = vmatprep.subr.mxu0 %v2141
    %2145 = vmatpush1.msra.mxu0 %v2140
    %2146 = vmatprep.subr.mxu0 %v2137
    %2147 = vmatpush1.msra.mxu0 %v2136
    %2148 = vmatprep.subr.mxu0 %v2133
    %2149 = vmatpush1.msra.mxu0 %v2132
    %2150 = vmatprep.subr.mxu0 %v2129
    %2151 = vmatpush1.msra.mxu0 %v2128
    %2152 = vmatprep.subr.mxu0 %v2125
    %2153 = vmatpush1.msra.mxu0 %v2124
    %2154 = vmatprep.subr.mxu0 %v2121
    %2155 = vmatpush1.msra.mxu0 %v2120
    %2156 = vmatprep.subr.mxu0 %v2117
    %2157 = vmatpush1.msra.mxu0 %v2116
    %2158 = vmatprep.subr.mxu0 %v2113
    %2159 = vmatpush1.msra.mxu0 %v2112
    %2160 = vmatprep.subr.mxu0 %v2109
    %2161 = vmatpush1.msra.mxu0 %v2108
    %2162 = vmatprep.subr.mxu0 %v2105
    %2163 = vmatpush1.msra.mxu0 %v2104
    %2164 = vmatprep.subr.mxu0 %v2101
    %2165 = vmatpush1.msra.mxu0 %v2100
    %2166 = vmatprep.subr.mxu0 %v2097
    %2167 = vmatpush1.msra.mxu0 %v2096
    %2168 = vmatprep.subr.mxu0 %v2093
    %2169 = vmatpush1.msra.mxu0 %v2092
    %2170 = vmatprep.subr.mxu0 %v2089
    %2171 = vmatpush1.msra.mxu0 %v2088
    %2172 = vmatprep.subr.mxu0 %v2085
    %2173 = vmatpush1.msra.mxu0 %v2084
    %2174 = vmatprep.subr.mxu0 %v2081
    %2175 = vmatpush1.msra.mxu0 %v2080
    %2176 = vmatprep.subr.mxu0 0.0
    %2177 = vmatpush2.msra.mxu0 0.0
    %2178 = vmatprep.subr.mxu0 0.0
    %2179 = vmatpush2.msra.mxu0 0.0
    %2180 = vmatprep.subr.mxu0 0.0
    %2181 = vmatpush2.msra.mxu0 0.0
    %2182 = vmatprep.subr.mxu0 0.0
    %2183 = vmatpush2.msra.mxu0 0.0
    %2184 = vmatprep.subr.mxu0 0.0
    %2185 = vmatpush2.msra.mxu0 0.0
    %2186 = vmatprep.subr.mxu0 0.0
    %2187 = vmatpush2.msra.mxu0 0.0
    %2188 = vmatprep.subr.mxu0 0.0
    %2189 = vmatpush2.msra.mxu0 0.0
    %2190 = vmatprep.subr.mxu0 0.0
    %2191 = vmatpush2.msra.mxu0 0.0
    %2192 = vmatprep.subr.mxu0 0.0
    %2193 = vmatpush2.msra.mxu0 0.0
    %2194 = vmatprep.subr.mxu0 0.0
    %2195 = vmatpush2.msra.mxu0 0.0
    %2196 = vmatprep.subr.mxu0 0.0
    %2197 = vmatpush2.msra.mxu0 0.0
    %2198 = vmatprep.subr.mxu0 0.0
    %2199 = vmatpush2.msra.mxu0 0.0
    %2200 = vmatprep.subr.mxu0 0.0
    %2201 = vmatpush2.msra.mxu0 0.0
    %2202 = vmatprep.subr.mxu0 0.0
    %2203 = vmatpush2.msra.mxu0 0.0
    %2204 = vmatprep.subr.mxu0 0.0
    %2205 = vmatpush2.msra.mxu0 0.0
    %2206 = vmatprep.subr.mxu0 0.0
    %2207 = vmatpush2.msra.mxu0 0.0
    %2208 = vmatprep.mubr.f32.mxu0 0.0
    %2209 = vmatmul.mubr.f32.gmra.mxu0 %v2054
    %v2210 = vpop.f32.mrf.mxu0
    %v2211 = vadd.f32 0.0, %v2210
    %v2212 = vpop.f32.mrf.mxu0
    %v2213 = vadd.f32 0.0, %v2212
    %2214 = vdwg.mxu0
    %2215 = vmatprep.subr.mxu0 %v2143
    %2216 = vmatpush1.msra.mxu0 %v2142
    %2217 = vmatprep.subr.mxu0 %v2139
    %2218 = vmatpush1.msra.mxu0 %v2138
    %2219 = vmatprep.subr.mxu0 %v2135
    %2220 = vmatpush1.msra.mxu0 %v2134
    %2221 = vmatprep.subr.mxu0 %v2131
    %2222 = vmatpush1.msra.mxu0 %v2130
    %2223 = vmatprep.subr.mxu0 %v2127
    %2224 = vmatpush1.msra.mxu0 %v2126
    %2225 = vmatprep.subr.mxu0 %v2123
    %2226 = vmatpush1.msra.mxu0 %v2122
    %2227 = vmatprep.subr.mxu0 %v2119
    %2228 = vmatpush1.msra.mxu0 %v2118
    %2229 = vmatprep.subr.mxu0 %v2115
    %2230 = vmatpush1.msra.mxu0 %v2114
    %2231 = vmatprep.subr.mxu0 %v2111
    %2232 = vmatpush1.msra.mxu0 %v2110
    %2233 = vmatprep.subr.mxu0 %v2107
    %2234 = vmatpush1.msra.mxu0 %v2106
    %2235 = vmatprep.subr.mxu0 %v2103
    %2236 = vmatpush1.msra.mxu0 %v2102
    %2237 = vmatprep.subr.mxu0 %v2099
    %2238 = vmatpush1.msra.mxu0 %v2098
    %2239 = vmatprep.subr.mxu0 %v2095
    %2240 = vmatpush1.msra.mxu0 %v2094
    %2241 = vmatprep.subr.mxu0 %v2091
    %2242 = vmatpush1.msra.mxu0 %v2090
    %2243 = vmatprep.subr.mxu0 %v2087
    %2244 = vmatpush1.msra.mxu0 %v2086
    %2245 = vmatprep.subr.mxu0 %v2083
    %2246 = vmatpush1.msra.mxu0 %v2082
    %2247 = vmatprep.subr.mxu0 0.0
    %2248 = vmatpush2.msra.mxu0 0.0
    %2249 = vmatprep.subr.mxu0 0.0
    %2250 = vmatpush2.msra.mxu0 0.0
    %2251 = vmatprep.subr.mxu0 0.0
    %2252 = vmatpush2.msra.mxu0 0.0
    %2253 = vmatprep.subr.mxu0 0.0
    %2254 = vmatpush2.msra.mxu0 0.0
    %2255 = vmatprep.subr.mxu0 0.0
    %2256 = vmatpush2.msra.mxu0 0.0
    %2257 = vmatprep.subr.mxu0 0.0
    %2258 = vmatpush2.msra.mxu0 0.0
    %2259 = vmatprep.subr.mxu0 0.0
    %2260 = vmatpush2.msra.mxu0 0.0
    %2261 = vmatprep.subr.mxu0 0.0
    %2262 = vmatpush2.msra.mxu0 0.0
    %2263 = vmatprep.subr.mxu0 0.0
    %2264 = vmatpush2.msra.mxu0 0.0
    %2265 = vmatprep.subr.mxu0 0.0
    %2266 = vmatpush2.msra.mxu0 0.0
    %2267 = vmatprep.subr.mxu0 0.0
    %2268 = vmatpush2.msra.mxu0 0.0
    %2269 = vmatprep.subr.mxu0 0.0
    %2270 = vmatpush2.msra.mxu0 0.0
    %2271 = vmatprep.subr.mxu0 0.0
    %2272 = vmatpush2.msra.mxu0 0.0
    %2273 = vmatprep.subr.mxu0 0.0
    %2274 = vmatpush2.msra.mxu0 0.0
    %2275 = vmatprep.subr.mxu0 0.0
    %2276 = vmatpush2.msra.mxu0 0.0
    %2277 = vmatprep.subr.mxu0 0.0
    %2278 = vmatpush2.msra.mxu0 0.0
    %2279 = vmatprep.mubr.f32.mxu0 0.0
    %2280 = vmatmul.mubr.f32.gmra.mxu0 %v2054
    %v2281 = vpop.f32.mrf.mxu0
    %v2282 = vadd.f32 0.0, %v2281
    %v2283 = vpop.f32.mrf.mxu0
    %v2284 = vadd.f32 0.0, %v2283
    %2285 = vdwg.mxu0
    %v2290 = vcombine.low %v2211, %v2213
    %v2291 = vcombine.low %v2282, %v2284
    %v2293 = vunpack.c.l.s4 1983009808
    %v2294 = vunpack.c.0.s8 %v2293
    %v2295 = vlaneseq
    %v2296 = vshrl.u32 %v2295, 7
    %v2297 = vsub.s32 %v2294, %v2296
    %v2298 = vrot.slane %v2290, %v2297
    %v2300 = vunpack.c.l.s4 1983009808
    %v2301 = vunpack.c.0.s8 %v2300
    %v2302 = vlaneseq
    %v2303 = vshrl.u32 %v2302, 7
    %v2304 = vsub.s32 %v2301, %v2303
    %v2305 = vrot.slane %v2291, %v2304
    %v2306 = vcombine.low %v2298, %v2305
    %v2308 = vadd.f32 %v2079, %v2306
    %v2309 = vxor.u32 %v2308, 2147483648
    %v2310 = vmul.f32 %v2309, 1.442695
    %v2311 = vpow.pop %v2310
    %v2312 = vadd.f32 %v2311, 1.0
    %v2313 = vrcp.pop %v2312
    %v2314 = vmul.f32 1.0, %v2313
    %v2316 = vrot.slane %v2308, 2
    %v2318 = vxor.u32 %v2316, 2147483648
    %v2319 = vmul.f32 %v2318, 1.442695
    %v2320 = vpow.pop %v2319
    %v2321 = vadd.f32 %v2320, 1.0
    %v2322 = vrcp.pop %v2321
    %v2323 = vmul.f32 1.0, %v2322
    %v2324 = vrot.slane %v2308, 4
    %v2326 = vtanh.pop %v2324
    %v2327 = vrot.slane %v2308, 6
    %v2329 = vxor.u32 %v2327, 2147483648
    %v2330 = vmul.f32 %v2329, 1.442695
    %v2331 = vpow.pop %v2330
    %v2332 = vadd.f32 %v2331, 1.0
    %v2333 = vrcp.pop %v2332
    %v2334 = vmul.f32 1.0, %v2333
    %v2335 = vmul.f32 %v2323, %v2052
    %v2336 = vmul.f32 %v2314, %v2326
    %v2337 = vadd.f32 %v2335, %v2336
    %v2338 = vtanh.pop %v2337
    %v2339 = vmul.f32 %v2334, %v2338
    %v2340 = vld [vmem:[%s3] sm:$0x1]
    %v2342 = vlaneseq
    %v2343 = vshrl.u32 %v2342, 7
    %v2344 = vsub.s32 0, %v2343
    %v2345 = vrot.slane %v2340, %v2344
    %v2347 = vmul.f32 %v2339, %v2345
    %vm2348 = vcmask 1041408
    %v2349 = vsel %vm2348, %v2347, 0.0
    %2350 = vadd.xlane.f32.xlu0 %v2349
    %v2351 = vpop.xlane.xlu0 %2350
    %s2352 = sld [smem:[#allocation5]]
    %v2353 = vstv %s2352
    %v2354 = vadd.f32 %v2351, %v2353
    %v2355 = vxor.u32 %v2354, 2147483648
    %v2356 = vmul.f32 %v2355, 1.442695
    %v2357 = vpow.pop %v2356
    %v2358 = vadd.f32 %v2357, 1.0
    %v2359 = vrcp.pop %v2358
    %v2360 = vmul.f32 1.0, %v2359
    %vm2361 = vcmask 1024
    %2362 = vst.msk [vmem:[%s5] sm:$0x3] %vm2361, %v2360
    // Predicated region
    $region26: #{improved_text_classifier.1} parent=1 // pred_check
      _
    $region27: #{improved_text_classifier.1} parent=1 // pred_check_branch
      %2364 = sbr.rel (0) target = $region29
    $region28: #{improved_text_classifier.1} parent=1 // pred_region
      _
    $region29: #{improved_text_classifier.1} parent=1 // pred_fallthru
      _
    // Predicated region
    $region30: #{improved_text_classifier.1} parent=1 // pred_check
      _
    $region31: #{improved_text_classifier.1} parent=1 // pred_check_branch
      %2366 = sbr.rel (0) target = $region33
    $region32: #{improved_text_classifier.1} parent=1 // pred_region
      _
    $region33: #{improved_text_classifier.1} parent=1 // pred_fallthru
      _
    %2367 = vsyncpa [#allocation7], 1
    %2368 = vsyncpa [#allocation9], 1

</llo_original>
